<compile_context>
chip_gen: v5e
topology: v5e:2x2
jax: 0.10.0
libtpu: 0.0.40
codegen_flags: <defaults>
</compile_context>

<pallas_src>
import functools

import jax
import jax.numpy as jnp
from jax import lax
from jax.experimental import pallas as pl
from jax.experimental.pallas import tpu as pltpu

# ------------------------- hyper-parameters -------------------------
T = 8             # encoder sequence length
H = 32            # hidden / embedding size
V = 64            # vocab size
VPAD = 128        # vocab padded to a full 128-lane vreg
SOS_IDX = 1       # vocab[hp.SOS]
DECODER_LAYERS = 1
MAX_LENGTH = 10   # greedy decode steps

_VMEM = pl.BlockSpec(memory_space=pltpu.MemorySpace.VMEM)
_SMEM = pl.BlockSpec(memory_space=pltpu.MemorySpace.SMEM)


# ------------------------- in-kernel helpers -------------------------
def _gru_cell(x, h, wi_ref, wh_ref, bi_ref, bhn_ref, hidden):
    """Fused-gate GRU cell: one matmul for the input path, one for the hidden path.

    wi/wh are (H, 3H) = [W_r | W_z | W_n]; bi is (1, 3H) with the r/z hidden
    biases pre-summed in; bhn is the hidden-side n-gate bias (must stay inside
    the r * (...) term).
    """
    gi = jnp.dot(x, wi_ref[...], preferred_element_type=jnp.float32) + bi_ref[...]
    gh = jnp.dot(h, wh_ref[...], preferred_element_type=jnp.float32)
    r = jax.nn.sigmoid(gi[:, 0:hidden] + gh[:, 0:hidden])
    z = jax.nn.sigmoid(gi[:, hidden:2 * hidden] + gh[:, hidden:2 * hidden])
    n = jnp.tanh(gi[:, 2 * hidden:3 * hidden]
                 + r * (gh[:, 2 * hidden:3 * hidden] + bhn_ref[...]))
    return (1.0 - z) * n + z * h


# ------------------------- the fused kernel --------------------------
def greedy_kernel(ids_ref, len_ref,                      # SMEM scalars
                  emb_ref,                               # (V, H) embedding
                  ewi_ref, ewh_ref, ebi_ref, ebhn_ref,   # encoder GRU (packed)
                  dwi_ref, dwh_ref, dbi_ref, dbhn_ref,   # decoder GRU (packed)
                  wc_ref, bc_ref, wo_ref, bo_ref,        # concat layer + vocab proj
                  tok_ref, score_ref,                    # outputs (1, max_length)
                  enc_scratch,                           # VMEM scratch (T, H)
                  *, seq_len, hidden, vocab, vocab_pad, max_length):
    length = len_ref[0]

    # ----------------- encoder GRU (statically unrolled, length-masked) -----
    h = jnp.zeros((1, hidden), jnp.float32)
    for t in range(seq_len):
        x = emb_ref[pl.ds(ids_ref[t], 1), :]                       # (1, H) gather
        h_new = _gru_cell(x, h, ewi_ref, ewh_ref, ebi_ref, ebhn_ref, hidden)
        mask = jnp.full((1, hidden), t, jnp.int32) < length        # (1, H) bool
        h = jnp.where(mask, h_new, h)                              # freeze past length
        enc_scratch[pl.ds(t, 1), :] = jnp.where(mask, h_new, jnp.zeros_like(h_new))

    enc = enc_scratch[...]                                         # (T, H) zero-padded
    # decoder_hidden = encoder_hidden[:DECODER_LAYERS] == h  (1 layer)

    # ----------------- greedy decode loop (statically unrolled) -------------
    vocab_iota = lax.broadcasted_iota(jnp.int32, (1, vocab), 1)
    logit_iota = lax.broadcasted_iota(jnp.int32, (1, vocab_pad), 1)
    out_iota = lax.broadcasted_iota(jnp.int32, (1, max_length), 1)

    tok = jnp.full((1, 1), SOS_IDX, jnp.int32)
    toks = jnp.zeros((1, max_length), jnp.int32)
    scs = jnp.zeros((1, max_length), jnp.float32)

    for step in range(max_length):
        # embedding lookup via one-hot matmul (token stays in vregs, no scalar extract)
        onehot = (vocab_iota == tok).astype(jnp.float32)           # (1, V)
        x = jnp.dot(onehot, emb_ref[...], preferred_element_type=jnp.float32)

        # GRU cell
        h = _gru_cell(x, h, dwi_ref, dwh_ref, dbi_ref, dbhn_ref, hidden)

        # Luong "dot" attention over (zero-padded) encoder outputs
        att = lax.dot_general(h, enc, (((1,), (1,)), ((), ())),
                              preferred_element_type=jnp.float32)  # (1, T)
        e = jnp.exp(att - jnp.max(att, axis=1, keepdims=True))
        attn = e / jnp.sum(e, axis=1, keepdims=True)
        context = jnp.dot(attn, enc, preferred_element_type=jnp.float32)  # (1, H)

        # fused concat layer + vocab projection (lane-padded to 128)
        concat_out = jnp.tanh(
            jnp.dot(jnp.concatenate([h, context], axis=1), wc_ref[...],
                    preferred_element_type=jnp.float32) + bc_ref[...])    # (1, H)
        logits = jnp.dot(concat_out, wo_ref[...],
                         preferred_element_type=jnp.float32) + bo_ref[...]  # (1, VPAD)

        # greedy pick on raw logits; score = max softmax prob = 1/sum(exp(l - lmax))
        l_max = jnp.max(logits, axis=1, keepdims=True)
        denom = jnp.sum(jnp.exp(logits - l_max), axis=1, keepdims=True)
        best_prob = pl.reciprocal(denom, approx=True)              # (1, 1)
        idx = jnp.min(jnp.where(logits >= l_max, logit_iota, vocab_pad),
                      axis=1, keepdims=True)                       # first argmax, int32

        hit = out_iota == step
        toks = jnp.where(hit, idx, toks)
        scs = jnp.where(hit, best_prob, scs)
        tok = idx

    # single lane-dense writeback at the end
    tok_ref[...] = toks
    score_ref[...] = scs


# ------------------------- GreedySearchDecoder.forward ---------------
@functools.partial(jax.jit, static_argnums=(2,))
def greedy_search_decode(input_seq, input_length, max_length, packed):
    """input_seq: [T, 1] int32 (seq-first, batch=1). Returns (tokens, scores)."""
    (emb, ewi, ewh, ebi, ebhn, dwi, dwh, dbi, dbhn, wc, bc, wo, bo) = packed
    seq_len = input_seq.shape[0]
    hidden = emb.shape[1]
    vocab = emb.shape[0]
    vocab_pad = wo.shape[1]

    ids = input_seq.reshape(seq_len).astype(jnp.int32)
    length = jnp.asarray(input_length, jnp.int32).reshape((1,))

    kern = functools.partial(greedy_kernel, seq_len=seq_len, hidden=hidden,
                             vocab=vocab, vocab_pad=vocab_pad,
                             max_length=max_length)
    toks, scores = pl.pallas_call(
        kern,
        out_shape=(jax.ShapeDtypeStruct((1, max_length), jnp.int32),
                   jax.ShapeDtypeStruct((1, max_length), jnp.float32)),
        in_specs=[_SMEM, _SMEM] + [_VMEM] * 13,
        out_specs=(_VMEM, _VMEM),
        scratch_shapes=[pltpu.VMEM((seq_len, hidden), jnp.float32)],
    )(ids, length, emb, ewi, ewh, ebi, ebhn, dwi, dwh, dbi, dbhn, wc, bc, wo, bo)
    return toks[0], scores[0]                   # (max_length,), (max_length,)


# ------------------------- deterministic parameters -------------------
def init_params(key):
    ks = jax.random.split(key, 12)
    emb = 0.2 * jax.random.normal(ks[0], (V, H), jnp.float32)

    def gru(k):
        k1, k2, k3, k4 = jax.random.split(k, 4)
        return (0.2 * jax.random.normal(k1, (3, H, H), jnp.float32),   # Wi[r,z,n]
                0.2 * jax.random.normal(k2, (3, H, H), jnp.float32),   # Wh[r,z,n]
                0.1 * jax.random.normal(k3, (3, 1, H), jnp.float32),   # bi[r,z,n]
                0.1 * jax.random.normal(k4, (3, 1, H), jnp.float32))   # bh[r,z,n]

    enc_params = gru(ks[1])
    dwi, dwh, dbi, dbh = gru(ks[2])
    wc_rnn = 0.2 * jax.random.normal(ks[3], (H, H), jnp.float32)
    wc_ctx = 0.2 * jax.random.normal(ks[4], (H, H), jnp.float32)
    bc = 0.1 * jax.random.normal(ks[5], (1, H), jnp.float32)
    wo = 0.2 * jax.random.normal(ks[6], (H, V), jnp.float32)
    bo = 0.1 * jax.random.normal(ks[7], (1, V), jnp.float32)
    dec_params = (dwi, dwh, dbi, dbh, wc_rnn, wc_ctx, bc, wo, bo)
    return emb, enc_params, dec_params


def pack_params(params):
    """Host-side one-time repacking: fused GRU gates, pre-summed r/z biases,
    stacked concat matrix, lane-padded vocab projection."""
    emb, enc_params, dec_params = params
    ewi, ewh, ebi, ebh = enc_params
    dwi, dwh, dbi, dbh, wc_rnn, wc_ctx, bc, wo, bo = dec_params

    def pack_gru(wi, wh, bi, bh):
        wi_p = jnp.concatenate([wi[0], wi[1], wi[2]], axis=1)                    # (H, 3H)
        wh_p = jnp.concatenate([wh[0], wh[1], wh[2]], axis=1)                    # (H, 3H)
        bi_p = jnp.concatenate([bi[0] + bh[0], bi[1] + bh[1], bi[2]], axis=1)    # (1, 3H)
        return wi_p, wh_p, bi_p, bh[2]                                           # bhn (1, H)

    ewi_p, ewh_p, ebi_p, ebhn = pack_gru(ewi, ewh, ebi, ebh)
    dwi_p, dwh_p, dbi_p, dbhn = pack_gru(dwi, dwh, dbi, dbh)
    wc = jnp.concatenate([wc_rnn, wc_ctx], axis=0)                               # (2H, H)
    wo_p = jnp.zeros((H, VPAD), jnp.float32).at[:, :V].set(wo)                   # (H, 128)
    bo_p = jnp.full((1, VPAD), -1e30, jnp.float32).at[:, :V].set(bo)             # (1, 128)
    return (emb, ewi_p, ewh_p, ebi_p, ebhn, dwi_p, dwh_p, dbi_p, dbhn,
            wc, bc, wo_p, bo_p)


# ------------------------- main ---------------------------------------
if __name__ == "__main__":
    key = jax.random.PRNGKey(0)
    params = init_params(key)
    packed = pack_params(params)

    input_seq = jax.random.randint(jax.random.PRNGKey(1), (T, 1), 0, V, dtype=jnp.int32)
    input_length = jnp.array([T], dtype=jnp.int32)      # full length (no padding)

    tokens, scores = greedy_search_decode(input_seq, input_length, MAX_LENGTH, packed)
    tokens = jax.block_until_ready(tokens)
    scores = jax.block_until_ready(scores)

    assert tokens.shape == (MAX_LENGTH,) and tokens.dtype == jnp.int32
    assert scores.shape == (MAX_LENGTH,) and scores.dtype == jnp.float32
    assert bool(jnp.all((tokens >= 0) & (tokens < V)))
    assert bool(jnp.all(jnp.isfinite(scores))) and bool(jnp.all(scores > 0.0))
    print("KERNEL_OK")
</pallas_src>

<mosaic_0001>
module attributes {stable_mosaic.version = 11 : i64} {
  func.func @greedy_kernel(%arg0: memref<8xi32, #tpu.memory_space<smem>>, %arg1: memref<1xi32, #tpu.memory_space<smem>>, %arg2: memref<64x32xf32, #tpu.memory_space<vmem>>, %arg3: memref<32x96xf32, #tpu.memory_space<vmem>>, %arg4: memref<32x96xf32, #tpu.memory_space<vmem>>, %arg5: memref<1x96xf32, #tpu.memory_space<vmem>>, %arg6: memref<1x32xf32, #tpu.memory_space<vmem>>, %arg7: memref<32x96xf32, #tpu.memory_space<vmem>>, %arg8: memref<32x96xf32, #tpu.memory_space<vmem>>, %arg9: memref<1x96xf32, #tpu.memory_space<vmem>>, %arg10: memref<1x32xf32, #tpu.memory_space<vmem>>, %arg11: memref<64x32xf32, #tpu.memory_space<vmem>>, %arg12: memref<1x32xf32, #tpu.memory_space<vmem>>, %arg13: memref<32x128xf32, #tpu.memory_space<vmem>>, %arg14: memref<1x128xf32, #tpu.memory_space<vmem>>, %arg15: memref<1x10xi32, #tpu.memory_space<vmem>>, %arg16: memref<1x10xf32, #tpu.memory_space<vmem>>, %arg17: memref<8x32xf32, #tpu.memory_space<vmem>>) attributes {dimension_semantics = [], scalar_prefetch = 0 : i64, scratch_operands = 1 : i64, tpu.core_type = #tpu.core_type<tc>} {
    %c0 = arith.constant 0 : index
    %0 = memref.load %arg1[%c0] : memref<1xi32, #tpu.memory_space<smem>>
    %cst = arith.constant 0.000000e+00 : f32
    %1 = vector.broadcast %cst : f32 to vector<1x32xf32>
    %c0_0 = arith.constant 0 : index
    %2 = memref.load %arg0[%c0_0] : memref<8xi32, #tpu.memory_space<smem>>
    %3 = arith.index_cast %2 : i32 to index
    %c0_1 = arith.constant 0 : index
    %4 = vector.load %arg2[%3, %c0_1] : memref<64x32xf32, #tpu.memory_space<vmem>>, vector<1x32xf32>
    %c0_2 = arith.constant 0 : index
    %c0_3 = arith.constant 0 : index
    %5 = vector.load %arg3[%c0_2, %c0_3] : memref<32x96xf32, #tpu.memory_space<vmem>>, vector<32x96xf32>
    %cst_4 = arith.constant dense<0.000000e+00> : vector<1x96xf32>
    %6 = tpu.matmul %4, %5, %cst_4 {dimension_numbers = #tpu.dot_dimension_numbers<[1], [0], [0], [1], [0, 0, 1, 1], [], []>} : vector<1x32xf32>, vector<32x96xf32>, vector<1x96xf32> -> vector<1x96xf32>
    %c0_5 = arith.constant 0 : index
    %c0_6 = arith.constant 0 : index
    %7 = vector.load %arg5[%c0_5, %c0_6] : memref<1x96xf32, #tpu.memory_space<vmem>>, vector<1x96xf32>
    %8 = arith.addf %6, %7 : vector<1x96xf32>
    %c0_7 = arith.constant 0 : index
    %c0_8 = arith.constant 0 : index
    %9 = vector.load %arg4[%c0_7, %c0_8] : memref<32x96xf32, #tpu.memory_space<vmem>>, vector<32x96xf32>
    %cst_9 = arith.constant dense<0.000000e+00> : vector<1x96xf32>
    %10 = tpu.matmul %1, %9, %cst_9 {dimension_numbers = #tpu.dot_dimension_numbers<[1], [0], [0], [1], [0, 0, 1, 1], [], []>} : vector<1x32xf32>, vector<32x96xf32>, vector<1x96xf32> -> vector<1x96xf32>
    %11 = vector.extract_strided_slice %8 {offsets = [0, 0], sizes = [1, 32], strides = [1, 1]} : vector<1x96xf32> to vector<1x32xf32>
    %12 = vector.extract_strided_slice %10 {offsets = [0, 0], sizes = [1, 32], strides = [1, 1]} : vector<1x96xf32> to vector<1x32xf32>
    %13 = arith.addf %11, %12 : vector<1x32xf32>
    %14 = arith.negf %13 : vector<1x32xf32>
    %15 = math.exp %14 : vector<1x32xf32>
    %cst_10 = arith.constant 1.000000e+00 : f32
    %16 = vector.broadcast %cst_10 : f32 to vector<1x32xf32>
    %17 = arith.addf %16, %15 : vector<1x32xf32>
    %18 = arith.divf %16, %17 : vector<1x32xf32>
    %19 = vector.extract_strided_slice %8 {offsets = [0, 32], sizes = [1, 32], strides = [1, 1]} : vector<1x96xf32> to vector<1x32xf32>
    %20 = vector.extract_strided_slice %10 {offsets = [0, 32], sizes = [1, 32], strides = [1, 1]} : vector<1x96xf32> to vector<1x32xf32>
    %21 = arith.addf %19, %20 : vector<1x32xf32>
    %22 = arith.negf %21 : vector<1x32xf32>
    %23 = math.exp %22 : vector<1x32xf32>
    %cst_11 = arith.constant 1.000000e+00 : f32
    %24 = vector.broadcast %cst_11 : f32 to vector<1x32xf32>
    %25 = arith.addf %24, %23 : vector<1x32xf32>
    %26 = arith.divf %24, %25 : vector<1x32xf32>
    %27 = vector.extract_strided_slice %8 {offsets = [0, 64], sizes = [1, 32], strides = [1, 1]} : vector<1x96xf32> to vector<1x32xf32>
    %28 = vector.extract_strided_slice %10 {offsets = [0, 64], sizes = [1, 32], strides = [1, 1]} : vector<1x96xf32> to vector<1x32xf32>
    %c0_12 = arith.constant 0 : index
    %c0_13 = arith.constant 0 : index
    %29 = vector.load %arg6[%c0_12, %c0_13] : memref<1x32xf32, #tpu.memory_space<vmem>>, vector<1x32xf32>
    %30 = arith.addf %28, %29 : vector<1x32xf32>
    %31 = arith.mulf %18, %30 : vector<1x32xf32>
    %32 = arith.addf %27, %31 : vector<1x32xf32>
    %33 = math.tanh %32 : vector<1x32xf32>
    %cst_14 = arith.constant 1.000000e+00 : f32
    %34 = vector.broadcast %cst_14 : f32 to vector<1x32xf32>
    %35 = arith.subf %34, %26 : vector<1x32xf32>
    %36 = arith.mulf %35, %33 : vector<1x32xf32>
    %37 = arith.mulf %26, %1 : vector<1x32xf32>
    %38 = arith.addf %36, %37 : vector<1x32xf32>
    %c0_i32 = arith.constant 0 : i32
    %39 = vector.broadcast %c0_i32 : i32 to vector<1x32xi32>
    %40 = vector.broadcast %0 : i32 to vector<1x32xi32>
    %41 = arith.cmpi slt, %39, %40 : vector<1x32xi32>
    %42 = arith.select %41, %38, %1 : vector<1x32xi1>, vector<1x32xf32>
    %cst_15 = arith.constant 0.000000e+00 : f32
    %43 = vector.broadcast %cst_15 : f32 to vector<1x32xf32>
    %44 = arith.select %41, %38, %43 : vector<1x32xi1>, vector<1x32xf32>
    %c0_16 = arith.constant 0 : index
    %c0_17 = arith.constant 0 : index
    %45 = vector.load %arg17[%c0_16, %c0_17] : memref<8x32xf32, #tpu.memory_space<vmem>>, vector<1x32xf32>
    tpu.vector_store %arg17[%c0_16, %c0_17], %44 {strides = array<i32>} : memref<8x32xf32, #tpu.memory_space<vmem>>, vector<1x32xf32>,
    %c1 = arith.constant 1 : index
    %46 = memref.load %arg0[%c1] : memref<8xi32, #tpu.memory_space<smem>>
    %47 = arith.index_cast %46 : i32 to index
    %c0_18 = arith.constant 0 : index
    %48 = vector.load %arg2[%47, %c0_18] : memref<64x32xf32, #tpu.memory_space<vmem>>, vector<1x32xf32>
    %c0_19 = arith.constant 0 : index
    %c0_20 = arith.constant 0 : index
    %49 = vector.load %arg3[%c0_19, %c0_20] : memref<32x96xf32, #tpu.memory_space<vmem>>, vector<32x96xf32>
    %cst_21 = arith.constant dense<0.000000e+00> : vector<1x96xf32>
    %50 = tpu.matmul %48, %49, %cst_21 {dimension_numbers = #tpu.dot_dimension_numbers<[1], [0], [0], [1], [0, 0, 1, 1], [], []>} : vector<1x32xf32>, vector<32x96xf32>, vector<1x96xf32> -> vector<1x96xf32>
    %c0_22 = arith.constant 0 : index
    %c0_23 = arith.constant 0 : index
    %51 = vector.load %arg5[%c0_22, %c0_23] : memref<1x96xf32, #tpu.memory_space<vmem>>, vector<1x96xf32>
    %52 = arith.addf %50, %51 : vector<1x96xf32>
    %c0_24 = arith.constant 0 : index
    %c0_25 = arith.constant 0 : index
    %53 = vector.load %arg4[%c0_24, %c0_25] : memref<32x96xf32, #tpu.memory_space<vmem>>, vector<32x96xf32>
    %cst_26 = arith.constant dense<0.000000e+00> : vector<1x96xf32>
    %54 = tpu.matmul %42, %53, %cst_26 {dimension_numbers = #tpu.dot_dimension_numbers<[1], [0], [0], [1], [0, 0, 1, 1], [], []>} : vector<1x32xf32>, vector<32x96xf32>, vector<1x96xf32> -> vector<1x96xf32>
    %55 = vector.extract_strided_slice %52 {offsets = [0, 0], sizes = [1, 32], strides = [1, 1]} : vector<1x96xf32> to vector<1x32xf32>
    %56 = vector.extract_strided_slice %54 {offsets = [0, 0], sizes = [1, 32], strides = [1, 1]} : vector<1x96xf32> to vector<1x32xf32>
    %57 = arith.addf %55, %56 : vector<1x32xf32>
    %58 = arith.negf %57 : vector<1x32xf32>
    %59 = math.exp %58 : vector<1x32xf32>
    %cst_27 = arith.constant 1.000000e+00 : f32
    %60 = vector.broadcast %cst_27 : f32 to vector<1x32xf32>
    %61 = arith.addf %60, %59 : vector<1x32xf32>
    %62 = arith.divf %60, %61 : vector<1x32xf32>
    %63 = vector.extract_strided_slice %52 {offsets = [0, 32], sizes = [1, 32], strides = [1, 1]} : vector<1x96xf32> to vector<1x32xf32>
    %64 = vector.extract_strided_slice %54 {offsets = [0, 32], sizes = [1, 32], strides = [1, 1]} : vector<1x96xf32> to vector<1x32xf32>
    %65 = arith.addf %63, %64 : vector<1x32xf32>
    %66 = arith.negf %65 : vector<1x32xf32>
    %67 = math.exp %66 : vector<1x32xf32>
    %cst_28 = arith.constant 1.000000e+00 : f32
    %68 = vector.broadcast %cst_28 : f32 to vector<1x32xf32>
    %69 = arith.addf %68, %67 : vector<1x32xf32>
    %70 = arith.divf %68, %69 : vector<1x32xf32>
    %71 = vector.extract_strided_slice %52 {offsets = [0, 64], sizes = [1, 32], strides = [1, 1]} : vector<1x96xf32> to vector<1x32xf32>
    %72 = vector.extract_strided_slice %54 {offsets = [0, 64], sizes = [1, 32], strides = [1, 1]} : vector<1x96xf32> to vector<1x32xf32>
    %c0_29 = arith.constant 0 : index
    %c0_30 = arith.constant 0 : index
    %73 = vector.load %arg6[%c0_29, %c0_30] : memref<1x32xf32, #tpu.memory_space<vmem>>, vector<1x32xf32>
    %74 = arith.addf %72, %73 : vector<1x32xf32>
    %75 = arith.mulf %62, %74 : vector<1x32xf32>
    %76 = arith.addf %71, %75 : vector<1x32xf32>
    %77 = math.tanh %76 : vector<1x32xf32>
    %cst_31 = arith.constant 1.000000e+00 : f32
    %78 = vector.broadcast %cst_31 : f32 to vector<1x32xf32>
    %79 = arith.subf %78, %70 : vector<1x32xf32>
    %80 = arith.mulf %79, %77 : vector<1x32xf32>
    %81 = arith.mulf %70, %42 : vector<1x32xf32>
    %82 = arith.addf %80, %81 : vector<1x32xf32>
    %c1_i32 = arith.constant 1 : i32
    %83 = vector.broadcast %c1_i32 : i32 to vector<1x32xi32>
    %84 = vector.broadcast %0 : i32 to vector<1x32xi32>
    %85 = arith.cmpi slt, %83, %84 : vector<1x32xi32>
    %86 = arith.select %85, %82, %42 : vector<1x32xi1>, vector<1x32xf32>
    %cst_32 = arith.constant 0.000000e+00 : f32
    %87 = vector.broadcast %cst_32 : f32 to vector<1x32xf32>
    %88 = arith.select %85, %82, %87 : vector<1x32xi1>, vector<1x32xf32>
    %c1_33 = arith.constant 1 : index
    %c0_34 = arith.constant 0 : index
    %89 = vector.load %arg17[%c1_33, %c0_34] : memref<8x32xf32, #tpu.memory_space<vmem>>, vector<1x32xf32>
    tpu.vector_store %arg17[%c1_33, %c0_34], %88 {strides = array<i32>} : memref<8x32xf32, #tpu.memory_space<vmem>>, vector<1x32xf32>,
    %c2 = arith.constant 2 : index
    %90 = memref.load %arg0[%c2] : memref<8xi32, #tpu.memory_space<smem>>
    %91 = arith.index_cast %90 : i32 to index
    %c0_35 = arith.constant 0 : index
    %92 = vector.load %arg2[%91, %c0_35] : memref<64x32xf32, #tpu.memory_space<vmem>>, vector<1x32xf32>
    %c0_36 = arith.constant 0 : index
    %c0_37 = arith.constant 0 : index
    %93 = vector.load %arg3[%c0_36, %c0_37] : memref<32x96xf32, #tpu.memory_space<vmem>>, vector<32x96xf32>
    %cst_38 = arith.constant dense<0.000000e+00> : vector<1x96xf32>
    %94 = tpu.matmul %92, %93, %cst_38 {dimension_numbers = #tpu.dot_dimension_numbers<[1], [0], [0], [1], [0, 0, 1, 1], [], []>} : vector<1x32xf32>, vector<32x96xf32>, vector<1x96xf32> -> vector<1x96xf32>
    %c0_39 = arith.constant 0 : index
    %c0_40 = arith.constant 0 : index
    %95 = vector.load %arg5[%c0_39, %c0_40] : memref<1x96xf32, #tpu.memory_space<vmem>>, vector<1x96xf32>
    %96 = arith.addf %94, %95 : vector<1x96xf32>
    %c0_41 = arith.constant 0 : index
    %c0_42 = arith.constant 0 : index
    %97 = vector.load %arg4[%c0_41, %c0_42] : memref<32x96xf32, #tpu.memory_space<vmem>>, vector<32x96xf32>
    %cst_43 = arith.constant dense<0.000000e+00> : vector<1x96xf32>
    %98 = tpu.matmul %86, %97, %cst_43 {dimension_numbers = #tpu.dot_dimension_numbers<[1], [0], [0], [1], [0, 0, 1, 1], [], []>} : vector<1x32xf32>, vector<32x96xf32>, vector<1x96xf32> -> vector<1x96xf32>
    %99 = vector.extract_strided_slice %96 {offsets = [0, 0], sizes = [1, 32], strides = [1, 1]} : vector<1x96xf32> to vector<1x32xf32>
    %100 = vector.extract_strided_slice %98 {offsets = [0, 0], sizes = [1, 32], strides = [1, 1]} : vector<1x96xf32> to vector<1x32xf32>
    %101 = arith.addf %99, %100 : vector<1x32xf32>
    %102 = arith.negf %101 : vector<1x32xf32>
    %103 = math.exp %102 : vector<1x32xf32>
    %cst_44 = arith.constant 1.000000e+00 : f32
    %104 = vector.broadcast %cst_44 : f32 to vector<1x32xf32>
    %105 = arith.addf %104, %103 : vector<1x32xf32>
    %106 = arith.divf %104, %105 : vector<1x32xf32>
    %107 = vector.extract_strided_slice %96 {offsets = [0, 32], sizes = [1, 32], strides = [1, 1]} : vector<1x96xf32> to vector<1x32xf32>
    %108 = vector.extract_strided_slice %98 {offsets = [0, 32], sizes = [1, 32], strides = [1, 1]} : vector<1x96xf32> to vector<1x32xf32>
    %109 = arith.addf %107, %108 : vector<1x32xf32>
    %110 = arith.negf %109 : vector<1x32xf32>
    %111 = math.exp %110 : vector<1x32xf32>
    %cst_45 = arith.constant 1.000000e+00 : f32
    %112 = vector.broadcast %cst_45 : f32 to vector<1x32xf32>
    %113 = arith.addf %112, %111 : vector<1x32xf32>
    %114 = arith.divf %112, %113 : vector<1x32xf32>
    %115 = vector.extract_strided_slice %96 {offsets = [0, 64], sizes = [1, 32], strides = [1, 1]} : vector<1x96xf32> to vector<1x32xf32>
    %116 = vector.extract_strided_slice %98 {offsets = [0, 64], sizes = [1, 32], strides = [1, 1]} : vector<1x96xf32> to vector<1x32xf32>
    %c0_46 = arith.constant 0 : index
    %c0_47 = arith.constant 0 : index
    %117 = vector.load %arg6[%c0_46, %c0_47] : memref<1x32xf32, #tpu.memory_space<vmem>>, vector<1x32xf32>
    %118 = arith.addf %116, %117 : vector<1x32xf32>
    %119 = arith.mulf %106, %118 : vector<1x32xf32>
    %120 = arith.addf %115, %119 : vector<1x32xf32>
    %121 = math.tanh %120 : vector<1x32xf32>
    %cst_48 = arith.constant 1.000000e+00 : f32
    %122 = vector.broadcast %cst_48 : f32 to vector<1x32xf32>
    %123 = arith.subf %122, %114 : vector<1x32xf32>
    %124 = arith.mulf %123, %121 : vector<1x32xf32>
    %125 = arith.mulf %114, %86 : vector<1x32xf32>
    %126 = arith.addf %124, %125 : vector<1x32xf32>
    %c2_i32 = arith.constant 2 : i32
    %127 = vector.broadcast %c2_i32 : i32 to vector<1x32xi32>
    %128 = vector.broadcast %0 : i32 to vector<1x32xi32>
    %129 = arith.cmpi slt, %127, %128 : vector<1x32xi32>
    %130 = arith.select %129, %126, %86 : vector<1x32xi1>, vector<1x32xf32>
    %cst_49 = arith.constant 0.000000e+00 : f32
    %131 = vector.broadcast %cst_49 : f32 to vector<1x32xf32>
    %132 = arith.select %129, %126, %131 : vector<1x32xi1>, vector<1x32xf32>
    %c2_50 = arith.constant 2 : index
    %c0_51 = arith.constant 0 : index
    %133 = vector.load %arg17[%c2_50, %c0_51] : memref<8x32xf32, #tpu.memory_space<vmem>>, vector<1x32xf32>
    tpu.vector_store %arg17[%c2_50, %c0_51], %132 {strides = array<i32>} : memref<8x32xf32, #tpu.memory_space<vmem>>, vector<1x32xf32>,
    %c3 = arith.constant 3 : index
    %134 = memref.load %arg0[%c3] : memref<8xi32, #tpu.memory_space<smem>>
    %135 = arith.index_cast %134 : i32 to index
    %c0_52 = arith.constant 0 : index
    %136 = vector.load %arg2[%135, %c0_52] : memref<64x32xf32, #tpu.memory_space<vmem>>, vector<1x32xf32>
    %c0_53 = arith.constant 0 : index
    %c0_54 = arith.constant 0 : index
    %137 = vector.load %arg3[%c0_53, %c0_54] : memref<32x96xf32, #tpu.memory_space<vmem>>, vector<32x96xf32>
    %cst_55 = arith.constant dense<0.000000e+00> : vector<1x96xf32>
    %138 = tpu.matmul %136, %137, %cst_55 {dimension_numbers = #tpu.dot_dimension_numbers<[1], [0], [0], [1], [0, 0, 1, 1], [], []>} : vector<1x32xf32>, vector<32x96xf32>, vector<1x96xf32> -> vector<1x96xf32>
    %c0_56 = arith.constant 0 : index
    %c0_57 = arith.constant 0 : index
    %139 = vector.load %arg5[%c0_56, %c0_57] : memref<1x96xf32, #tpu.memory_space<vmem>>, vector<1x96xf32>
    %140 = arith.addf %138, %139 : vector<1x96xf32>
    %c0_58 = arith.constant 0 : index
    %c0_59 = arith.constant 0 : index
    %141 = vector.load %arg4[%c0_58, %c0_59] : memref<32x96xf32, #tpu.memory_space<vmem>>, vector<32x96xf32>
    %cst_60 = arith.constant dense<0.000000e+00> : vector<1x96xf32>
    %142 = tpu.matmul %130, %141, %cst_60 {dimension_numbers = #tpu.dot_dimension_numbers<[1], [0], [0], [1], [0, 0, 1, 1], [], []>} : vector<1x32xf32>, vector<32x96xf32>, vector<1x96xf32> -> vector<1x96xf32>
    %143 = vector.extract_strided_slice %140 {offsets = [0, 0], sizes = [1, 32], strides = [1, 1]} : vector<1x96xf32> to vector<1x32xf32>
    %144 = vector.extract_strided_slice %142 {offsets = [0, 0], sizes = [1, 32], strides = [1, 1]} : vector<1x96xf32> to vector<1x32xf32>
    %145 = arith.addf %143, %144 : vector<1x32xf32>
    %146 = arith.negf %145 : vector<1x32xf32>
    %147 = math.exp %146 : vector<1x32xf32>
    %cst_61 = arith.constant 1.000000e+00 : f32
    %148 = vector.broadcast %cst_61 : f32 to vector<1x32xf32>
    %149 = arith.addf %148, %147 : vector<1x32xf32>
    %150 = arith.divf %148, %149 : vector<1x32xf32>
    %151 = vector.extract_strided_slice %140 {offsets = [0, 32], sizes = [1, 32], strides = [1, 1]} : vector<1x96xf32> to vector<1x32xf32>
    %152 = vector.extract_strided_slice %142 {offsets = [0, 32], sizes = [1, 32], strides = [1, 1]} : vector<1x96xf32> to vector<1x32xf32>
    %153 = arith.addf %151, %152 : vector<1x32xf32>
    %154 = arith.negf %153 : vector<1x32xf32>
    %155 = math.exp %154 : vector<1x32xf32>
    %cst_62 = arith.constant 1.000000e+00 : f32
    %156 = vector.broadcast %cst_62 : f32 to vector<1x32xf32>
    %157 = arith.addf %156, %155 : vector<1x32xf32>
    %158 = arith.divf %156, %157 : vector<1x32xf32>
    %159 = vector.extract_strided_slice %140 {offsets = [0, 64], sizes = [1, 32], strides = [1, 1]} : vector<1x96xf32> to vector<1x32xf32>
    %160 = vector.extract_strided_slice %142 {offsets = [0, 64], sizes = [1, 32], strides = [1, 1]} : vector<1x96xf32> to vector<1x32xf32>
    %c0_63 = arith.constant 0 : index
    %c0_64 = arith.constant 0 : index
    %161 = vector.load %arg6[%c0_63, %c0_64] : memref<1x32xf32, #tpu.memory_space<vmem>>, vector<1x32xf32>
    %162 = arith.addf %160, %161 : vector<1x32xf32>
    %163 = arith.mulf %150, %162 : vector<1x32xf32>
    %164 = arith.addf %159, %163 : vector<1x32xf32>
    %165 = math.tanh %164 : vector<1x32xf32>
    %cst_65 = arith.constant 1.000000e+00 : f32
    %166 = vector.broadcast %cst_65 : f32 to vector<1x32xf32>
    %167 = arith.subf %166, %158 : vector<1x32xf32>
    %168 = arith.mulf %167, %165 : vector<1x32xf32>
    %169 = arith.mulf %158, %130 : vector<1x32xf32>
    %170 = arith.addf %168, %169 : vector<1x32xf32>
    %c3_i32 = arith.constant 3 : i32
    %171 = vector.broadcast %c3_i32 : i32 to vector<1x32xi32>
    %172 = vector.broadcast %0 : i32 to vector<1x32xi32>
    %173 = arith.cmpi slt, %171, %172 : vector<1x32xi32>
    %174 = arith.select %173, %170, %130 : vector<1x32xi1>, vector<1x32xf32>
    %cst_66 = arith.constant 0.000000e+00 : f32
    %175 = vector.broadcast %cst_66 : f32 to vector<1x32xf32>
    %176 = arith.select %173, %170, %175 : vector<1x32xi1>, vector<1x32xf32>
    %c3_67 = arith.constant 3 : index
    %c0_68 = arith.constant 0 : index
    %177 = vector.load %arg17[%c3_67, %c0_68] : memref<8x32xf32, #tpu.memory_space<vmem>>, vector<1x32xf32>
    tpu.vector_store %arg17[%c3_67, %c0_68], %176 {strides = array<i32>} : memref<8x32xf32, #tpu.memory_space<vmem>>, vector<1x32xf32>,
    %c4 = arith.constant 4 : index
    %178 = memref.load %arg0[%c4] : memref<8xi32, #tpu.memory_space<smem>>
    %179 = arith.index_cast %178 : i32 to index
    %c0_69 = arith.constant 0 : index
    %180 = vector.load %arg2[%179, %c0_69] : memref<64x32xf32, #tpu.memory_space<vmem>>, vector<1x32xf32>
    %c0_70 = arith.constant 0 : index
    %c0_71 = arith.constant 0 : index
    %181 = vector.load %arg3[%c0_70, %c0_71] : memref<32x96xf32, #tpu.memory_space<vmem>>, vector<32x96xf32>
    %cst_72 = arith.constant dense<0.000000e+00> : vector<1x96xf32>
    %182 = tpu.matmul %180, %181, %cst_72 {dimension_numbers = #tpu.dot_dimension_numbers<[1], [0], [0], [1], [0, 0, 1, 1], [], []>} : vector<1x32xf32>, vector<32x96xf32>, vector<1x96xf32> -> vector<1x96xf32>
    %c0_73 = arith.constant 0 : index
    %c0_74 = arith.constant 0 : index
    %183 = vector.load %arg5[%c0_73, %c0_74] : memref<1x96xf32, #tpu.memory_space<vmem>>, vector<1x96xf32>
    %184 = arith.addf %182, %183 : vector<1x96xf32>
    %c0_75 = arith.constant 0 : index
    %c0_76 = arith.constant 0 : index
    %185 = vector.load %arg4[%c0_75, %c0_76] : memref<32x96xf32, #tpu.memory_space<vmem>>, vector<32x96xf32>
    %cst_77 = arith.constant dense<0.000000e+00> : vector<1x96xf32>
    %186 = tpu.matmul %174, %185, %cst_77 {dimension_numbers = #tpu.dot_dimension_numbers<[1], [0], [0], [1], [0, 0, 1, 1], [], []>} : vector<1x32xf32>, vector<32x96xf32>, vector<1x96xf32> -> vector<1x96xf32>
    %187 = vector.extract_strided_slice %184 {offsets = [0, 0], sizes = [1, 32], strides = [1, 1]} : vector<1x96xf32> to vector<1x32xf32>
    %188 = vector.extract_strided_slice %186 {offsets = [0, 0], sizes = [1, 32], strides = [1, 1]} : vector<1x96xf32> to vector<1x32xf32>
    %189 = arith.addf %187, %188 : vector<1x32xf32>
    %190 = arith.negf %189 : vector<1x32xf32>
    %191 = math.exp %190 : vector<1x32xf32>
    %cst_78 = arith.constant 1.000000e+00 : f32
    %192 = vector.broadcast %cst_78 : f32 to vector<1x32xf32>
    %193 = arith.addf %192, %191 : vector<1x32xf32>
    %194 = arith.divf %192, %193 : vector<1x32xf32>
    %195 = vector.extract_strided_slice %184 {offsets = [0, 32], sizes = [1, 32], strides = [1, 1]} : vector<1x96xf32> to vector<1x32xf32>
    %196 = vector.extract_strided_slice %186 {offsets = [0, 32], sizes = [1, 32], strides = [1, 1]} : vector<1x96xf32> to vector<1x32xf32>
    %197 = arith.addf %195, %196 : vector<1x32xf32>
    %198 = arith.negf %197 : vector<1x32xf32>
    %199 = math.exp %198 : vector<1x32xf32>
    %cst_79 = arith.constant 1.000000e+00 : f32
    %200 = vector.broadcast %cst_79 : f32 to vector<1x32xf32>
    %201 = arith.addf %200, %199 : vector<1x32xf32>
    %202 = arith.divf %200, %201 : vector<1x32xf32>
    %203 = vector.extract_strided_slice %184 {offsets = [0, 64], sizes = [1, 32], strides = [1, 1]} : vector<1x96xf32> to vector<1x32xf32>
    %204 = vector.extract_strided_slice %186 {offsets = [0, 64], sizes = [1, 32], strides = [1, 1]} : vector<1x96xf32> to vector<1x32xf32>
    %c0_80 = arith.constant 0 : index
    %c0_81 = arith.constant 0 : index
    %205 = vector.load %arg6[%c0_80, %c0_81] : memref<1x32xf32, #tpu.memory_space<vmem>>, vector<1x32xf32>
    %206 = arith.addf %204, %205 : vector<1x32xf32>
    %207 = arith.mulf %194, %206 : vector<1x32xf32>
    %208 = arith.addf %203, %207 : vector<1x32xf32>
    %209 = math.tanh %208 : vector<1x32xf32>
    %cst_82 = arith.constant 1.000000e+00 : f32
    %210 = vector.broadcast %cst_82 : f32 to vector<1x32xf32>
    %211 = arith.subf %210, %202 : vector<1x32xf32>
    %212 = arith.mulf %211, %209 : vector<1x32xf32>
    %213 = arith.mulf %202, %174 : vector<1x32xf32>
    %214 = arith.addf %212, %213 : vector<1x32xf32>
    %c4_i32 = arith.constant 4 : i32
    %215 = vector.broadcast %c4_i32 : i32 to vector<1x32xi32>
    %216 = vector.broadcast %0 : i32 to vector<1x32xi32>
    %217 = arith.cmpi slt, %215, %216 : vector<1x32xi32>
    %218 = arith.select %217, %214, %174 : vector<1x32xi1>, vector<1x32xf32>
    %cst_83 = arith.constant 0.000000e+00 : f32
    %219 = vector.broadcast %cst_83 : f32 to vector<1x32xf32>
    %220 = arith.select %217, %214, %219 : vector<1x32xi1>, vector<1x32xf32>
    %c4_84 = arith.constant 4 : index
    %c0_85 = arith.constant 0 : index
    %221 = vector.load %arg17[%c4_84, %c0_85] : memref<8x32xf32, #tpu.memory_space<vmem>>, vector<1x32xf32>
    tpu.vector_store %arg17[%c4_84, %c0_85], %220 {strides = array<i32>} : memref<8x32xf32, #tpu.memory_space<vmem>>, vector<1x32xf32>,
    %c5 = arith.constant 5 : index
    %222 = memref.load %arg0[%c5] : memref<8xi32, #tpu.memory_space<smem>>
    %223 = arith.index_cast %222 : i32 to index
    %c0_86 = arith.constant 0 : index
    %224 = vector.load %arg2[%223, %c0_86] : memref<64x32xf32, #tpu.memory_space<vmem>>, vector<1x32xf32>
    %c0_87 = arith.constant 0 : index
    %c0_88 = arith.constant 0 : index
    %225 = vector.load %arg3[%c0_87, %c0_88] : memref<32x96xf32, #tpu.memory_space<vmem>>, vector<32x96xf32>
    %cst_89 = arith.constant dense<0.000000e+00> : vector<1x96xf32>
    %226 = tpu.matmul %224, %225, %cst_89 {dimension_numbers = #tpu.dot_dimension_numbers<[1], [0], [0], [1], [0, 0, 1, 1], [], []>} : vector<1x32xf32>, vector<32x96xf32>, vector<1x96xf32> -> vector<1x96xf32>
    %c0_90 = arith.constant 0 : index
    %c0_91 = arith.constant 0 : index
    %227 = vector.load %arg5[%c0_90, %c0_91] : memref<1x96xf32, #tpu.memory_space<vmem>>, vector<1x96xf32>
    %228 = arith.addf %226, %227 : vector<1x96xf32>
    %c0_92 = arith.constant 0 : index
    %c0_93 = arith.constant 0 : index
    %229 = vector.load %arg4[%c0_92, %c0_93] : memref<32x96xf32, #tpu.memory_space<vmem>>, vector<32x96xf32>
    %cst_94 = arith.constant dense<0.000000e+00> : vector<1x96xf32>
    %230 = tpu.matmul %218, %229, %cst_94 {dimension_numbers = #tpu.dot_dimension_numbers<[1], [0], [0], [1], [0, 0, 1, 1], [], []>} : vector<1x32xf32>, vector<32x96xf32>, vector<1x96xf32> -> vector<1x96xf32>
    %231 = vector.extract_strided_slice %228 {offsets = [0, 0], sizes = [1, 32], strides = [1, 1]} : vector<1x96xf32> to vector<1x32xf32>
    %232 = vector.extract_strided_slice %230 {offsets = [0, 0], sizes = [1, 32], strides = [1, 1]} : vector<1x96xf32> to vector<1x32xf32>
    %233 = arith.addf %231, %232 : vector<1x32xf32>
    %234 = arith.negf %233 : vector<1x32xf32>
    %235 = math.exp %234 : vector<1x32xf32>
    %cst_95 = arith.constant 1.000000e+00 : f32
    %236 = vector.broadcast %cst_95 : f32 to vector<1x32xf32>
    %237 = arith.addf %236, %235 : vector<1x32xf32>
    %238 = arith.divf %236, %237 : vector<1x32xf32>
    %239 = vector.extract_strided_slice %228 {offsets = [0, 32], sizes = [1, 32], strides = [1, 1]} : vector<1x96xf32> to vector<1x32xf32>
    %240 = vector.extract_strided_slice %230 {offsets = [0, 32], sizes = [1, 32], strides = [1, 1]} : vector<1x96xf32> to vector<1x32xf32>
    %241 = arith.addf %239, %240 : vector<1x32xf32>
    %242 = arith.negf %241 : vector<1x32xf32>
    %243 = math.exp %242 : vector<1x32xf32>
    %cst_96 = arith.constant 1.000000e+00 : f32
    %244 = vector.broadcast %cst_96 : f32 to vector<1x32xf32>
    %245 = arith.addf %244, %243 : vector<1x32xf32>
    %246 = arith.divf %244, %245 : vector<1x32xf32>
    %247 = vector.extract_strided_slice %228 {offsets = [0, 64], sizes = [1, 32], strides = [1, 1]} : vector<1x96xf32> to vector<1x32xf32>
    %248 = vector.extract_strided_slice %230 {offsets = [0, 64], sizes = [1, 32], strides = [1, 1]} : vector<1x96xf32> to vector<1x32xf32>
    %c0_97 = arith.constant 0 : index
    %c0_98 = arith.constant 0 : index
    %249 = vector.load %arg6[%c0_97, %c0_98] : memref<1x32xf32, #tpu.memory_space<vmem>>, vector<1x32xf32>
    %250 = arith.addf %248, %249 : vector<1x32xf32>
    %251 = arith.mulf %238, %250 : vector<1x32xf32>
    %252 = arith.addf %247, %251 : vector<1x32xf32>
    %253 = math.tanh %252 : vector<1x32xf32>
    %cst_99 = arith.constant 1.000000e+00 : f32
    %254 = vector.broadcast %cst_99 : f32 to vector<1x32xf32>
    %255 = arith.subf %254, %246 : vector<1x32xf32>
    %256 = arith.mulf %255, %253 : vector<1x32xf32>
    %257 = arith.mulf %246, %218 : vector<1x32xf32>
    %258 = arith.addf %256, %257 : vector<1x32xf32>
    %c5_i32 = arith.constant 5 : i32
    %259 = vector.broadcast %c5_i32 : i32 to vector<1x32xi32>
    %260 = vector.broadcast %0 : i32 to vector<1x32xi32>
    %261 = arith.cmpi slt, %259, %260 : vector<1x32xi32>
    %262 = arith.select %261, %258, %218 : vector<1x32xi1>, vector<1x32xf32>
    %cst_100 = arith.constant 0.000000e+00 : f32
    %263 = vector.broadcast %cst_100 : f32 to vector<1x32xf32>
    %264 = arith.select %261, %258, %263 : vector<1x32xi1>, vector<1x32xf32>
    %c5_101 = arith.constant 5 : index
    %c0_102 = arith.constant 0 : index
    %265 = vector.load %arg17[%c5_101, %c0_102] : memref<8x32xf32, #tpu.memory_space<vmem>>, vector<1x32xf32>
    tpu.vector_store %arg17[%c5_101, %c0_102], %264 {strides = array<i32>} : memref<8x32xf32, #tpu.memory_space<vmem>>, vector<1x32xf32>,
    %c6 = arith.constant 6 : index
    %266 = memref.load %arg0[%c6] : memref<8xi32, #tpu.memory_space<smem>>
    %267 = arith.index_cast %266 : i32 to index
    %c0_103 = arith.constant 0 : index
    %268 = vector.load %arg2[%267, %c0_103] : memref<64x32xf32, #tpu.memory_space<vmem>>, vector<1x32xf32>
    %c0_104 = arith.constant 0 : index
    %c0_105 = arith.constant 0 : index
    %269 = vector.load %arg3[%c0_104, %c0_105] : memref<32x96xf32, #tpu.memory_space<vmem>>, vector<32x96xf32>
    %cst_106 = arith.constant dense<0.000000e+00> : vector<1x96xf32>
    %270 = tpu.matmul %268, %269, %cst_106 {dimension_numbers = #tpu.dot_dimension_numbers<[1], [0], [0], [1], [0, 0, 1, 1], [], []>} : vector<1x32xf32>, vector<32x96xf32>, vector<1x96xf32> -> vector<1x96xf32>
    %c0_107 = arith.constant 0 : index
    %c0_108 = arith.constant 0 : index
    %271 = vector.load %arg5[%c0_107, %c0_108] : memref<1x96xf32, #tpu.memory_space<vmem>>, vector<1x96xf32>
    %272 = arith.addf %270, %271 : vector<1x96xf32>
    %c0_109 = arith.constant 0 : index
    %c0_110 = arith.constant 0 : index
    %273 = vector.load %arg4[%c0_109, %c0_110] : memref<32x96xf32, #tpu.memory_space<vmem>>, vector<32x96xf32>
    %cst_111 = arith.constant dense<0.000000e+00> : vector<1x96xf32>
    %274 = tpu.matmul %262, %273, %cst_111 {dimension_numbers = #tpu.dot_dimension_numbers<[1], [0], [0], [1], [0, 0, 1, 1], [], []>} : vector<1x32xf32>, vector<32x96xf32>, vector<1x96xf32> -> vector<1x96xf32>
    %275 = vector.extract_strided_slice %272 {offsets = [0, 0], sizes = [1, 32], strides = [1, 1]} : vector<1x96xf32> to vector<1x32xf32>
    %276 = vector.extract_strided_slice %274 {offsets = [0, 0], sizes = [1, 32], strides = [1, 1]} : vector<1x96xf32> to vector<1x32xf32>
    %277 = arith.addf %275, %276 : vector<1x32xf32>
    %278 = arith.negf %277 : vector<1x32xf32>
    %279 = math.exp %278 : vector<1x32xf32>
    %cst_112 = arith.constant 1.000000e+00 : f32
    %280 = vector.broadcast %cst_112 : f32 to vector<1x32xf32>
    %281 = arith.addf %280, %279 : vector<1x32xf32>
    %282 = arith.divf %280, %281 : vector<1x32xf32>
    %283 = vector.extract_strided_slice %272 {offsets = [0, 32], sizes = [1, 32], strides = [1, 1]} : vector<1x96xf32> to vector<1x32xf32>
    %284 = vector.extract_strided_slice %274 {offsets = [0, 32], sizes = [1, 32], strides = [1, 1]} : vector<1x96xf32> to vector<1x32xf32>
    %285 = arith.addf %283, %284 : vector<1x32xf32>
    %286 = arith.negf %285 : vector<1x32xf32>
    %287 = math.exp %286 : vector<1x32xf32>
    %cst_113 = arith.constant 1.000000e+00 : f32
    %288 = vector.broadcast %cst_113 : f32 to vector<1x32xf32>
    %289 = arith.addf %288, %287 : vector<1x32xf32>
    %290 = arith.divf %288, %289 : vector<1x32xf32>
    %291 = vector.extract_strided_slice %272 {offsets = [0, 64], sizes = [1, 32], strides = [1, 1]} : vector<1x96xf32> to vector<1x32xf32>
    %292 = vector.extract_strided_slice %274 {offsets = [0, 64], sizes = [1, 32], strides = [1, 1]} : vector<1x96xf32> to vector<1x32xf32>
    %c0_114 = arith.constant 0 : index
    %c0_115 = arith.constant 0 : index
    %293 = vector.load %arg6[%c0_114, %c0_115] : memref<1x32xf32, #tpu.memory_space<vmem>>, vector<1x32xf32>
    %294 = arith.addf %292, %293 : vector<1x32xf32>
    %295 = arith.mulf %282, %294 : vector<1x32xf32>
    %296 = arith.addf %291, %295 : vector<1x32xf32>
    %297 = math.tanh %296 : vector<1x32xf32>
    %cst_116 = arith.constant 1.000000e+00 : f32
    %298 = vector.broadcast %cst_116 : f32 to vector<1x32xf32>
    %299 = arith.subf %298, %290 : vector<1x32xf32>
    %300 = arith.mulf %299, %297 : vector<1x32xf32>
    %301 = arith.mulf %290, %262 : vector<1x32xf32>
    %302 = arith.addf %300, %301 : vector<1x32xf32>
    %c6_i32 = arith.constant 6 : i32
    %303 = vector.broadcast %c6_i32 : i32 to vector<1x32xi32>
    %304 = vector.broadcast %0 : i32 to vector<1x32xi32>
    %305 = arith.cmpi slt, %303, %304 : vector<1x32xi32>
    %306 = arith.select %305, %302, %262 : vector<1x32xi1>, vector<1x32xf32>
    %cst_117 = arith.constant 0.000000e+00 : f32
    %307 = vector.broadcast %cst_117 : f32 to vector<1x32xf32>
    %308 = arith.select %305, %302, %307 : vector<1x32xi1>, vector<1x32xf32>
    %c6_118 = arith.constant 6 : index
    %c0_119 = arith.constant 0 : index
    %309 = vector.load %arg17[%c6_118, %c0_119] : memref<8x32xf32, #tpu.memory_space<vmem>>, vector<1x32xf32>
    tpu.vector_store %arg17[%c6_118, %c0_119], %308 {strides = array<i32>} : memref<8x32xf32, #tpu.memory_space<vmem>>, vector<1x32xf32>,
    %c7 = arith.constant 7 : index
    %310 = memref.load %arg0[%c7] : memref<8xi32, #tpu.memory_space<smem>>
    %311 = arith.index_cast %310 : i32 to index
    %c0_120 = arith.constant 0 : index
    %312 = vector.load %arg2[%311, %c0_120] : memref<64x32xf32, #tpu.memory_space<vmem>>, vector<1x32xf32>
    %c0_121 = arith.constant 0 : index
    %c0_122 = arith.constant 0 : index
    %313 = vector.load %arg3[%c0_121, %c0_122] : memref<32x96xf32, #tpu.memory_space<vmem>>, vector<32x96xf32>
    %cst_123 = arith.constant dense<0.000000e+00> : vector<1x96xf32>
    %314 = tpu.matmul %312, %313, %cst_123 {dimension_numbers = #tpu.dot_dimension_numbers<[1], [0], [0], [1], [0, 0, 1, 1], [], []>} : vector<1x32xf32>, vector<32x96xf32>, vector<1x96xf32> -> vector<1x96xf32>
    %c0_124 = arith.constant 0 : index
    %c0_125 = arith.constant 0 : index
    %315 = vector.load %arg5[%c0_124, %c0_125] : memref<1x96xf32, #tpu.memory_space<vmem>>, vector<1x96xf32>
    %316 = arith.addf %314, %315 : vector<1x96xf32>
    %c0_126 = arith.constant 0 : index
    %c0_127 = arith.constant 0 : index
    %317 = vector.load %arg4[%c0_126, %c0_127] : memref<32x96xf32, #tpu.memory_space<vmem>>, vector<32x96xf32>
    %cst_128 = arith.constant dense<0.000000e+00> : vector<1x96xf32>
    %318 = tpu.matmul %306, %317, %cst_128 {dimension_numbers = #tpu.dot_dimension_numbers<[1], [0], [0], [1], [0, 0, 1, 1], [], []>} : vector<1x32xf32>, vector<32x96xf32>, vector<1x96xf32> -> vector<1x96xf32>
    %319 = vector.extract_strided_slice %316 {offsets = [0, 0], sizes = [1, 32], strides = [1, 1]} : vector<1x96xf32> to vector<1x32xf32>
    %320 = vector.extract_strided_slice %318 {offsets = [0, 0], sizes = [1, 32], strides = [1, 1]} : vector<1x96xf32> to vector<1x32xf32>
    %321 = arith.addf %319, %320 : vector<1x32xf32>
    %322 = arith.negf %321 : vector<1x32xf32>
    %323 = math.exp %322 : vector<1x32xf32>
    %cst_129 = arith.constant 1.000000e+00 : f32
    %324 = vector.broadcast %cst_129 : f32 to vector<1x32xf32>
    %325 = arith.addf %324, %323 : vector<1x32xf32>
    %326 = arith.divf %324, %325 : vector<1x32xf32>
    %327 = vector.extract_strided_slice %316 {offsets = [0, 32], sizes = [1, 32], strides = [1, 1]} : vector<1x96xf32> to vector<1x32xf32>
    %328 = vector.extract_strided_slice %318 {offsets = [0, 32], sizes = [1, 32], strides = [1, 1]} : vector<1x96xf32> to vector<1x32xf32>
    %329 = arith.addf %327, %328 : vector<1x32xf32>
    %330 = arith.negf %329 : vector<1x32xf32>
    %331 = math.exp %330 : vector<1x32xf32>
    %cst_130 = arith.constant 1.000000e+00 : f32
    %332 = vector.broadcast %cst_130 : f32 to vector<1x32xf32>
    %333 = arith.addf %332, %331 : vector<1x32xf32>
    %334 = arith.divf %332, %333 : vector<1x32xf32>
    %335 = vector.extract_strided_slice %316 {offsets = [0, 64], sizes = [1, 32], strides = [1, 1]} : vector<1x96xf32> to vector<1x32xf32>
    %336 = vector.extract_strided_slice %318 {offsets = [0, 64], sizes = [1, 32], strides = [1, 1]} : vector<1x96xf32> to vector<1x32xf32>
    %c0_131 = arith.constant 0 : index
    %c0_132 = arith.constant 0 : index
    %337 = vector.load %arg6[%c0_131, %c0_132] : memref<1x32xf32, #tpu.memory_space<vmem>>, vector<1x32xf32>
    %338 = arith.addf %336, %337 : vector<1x32xf32>
    %339 = arith.mulf %326, %338 : vector<1x32xf32>
    %340 = arith.addf %335, %339 : vector<1x32xf32>
    %341 = math.tanh %340 : vector<1x32xf32>
    %cst_133 = arith.constant 1.000000e+00 : f32
    %342 = vector.broadcast %cst_133 : f32 to vector<1x32xf32>
    %343 = arith.subf %342, %334 : vector<1x32xf32>
    %344 = arith.mulf %343, %341 : vector<1x32xf32>
    %345 = arith.mulf %334, %306 : vector<1x32xf32>
    %346 = arith.addf %344, %345 : vector<1x32xf32>
    %c7_i32 = arith.constant 7 : i32
    %347 = vector.broadcast %c7_i32 : i32 to vector<1x32xi32>
    %348 = vector.broadcast %0 : i32 to vector<1x32xi32>
    %349 = arith.cmpi slt, %347, %348 : vector<1x32xi32>
    %350 = arith.select %349, %346, %306 : vector<1x32xi1>, vector<1x32xf32>
    %cst_134 = arith.constant 0.000000e+00 : f32
    %351 = vector.broadcast %cst_134 : f32 to vector<1x32xf32>
    %352 = arith.select %349, %346, %351 : vector<1x32xi1>, vector<1x32xf32>
    %c7_135 = arith.constant 7 : index
    %c0_136 = arith.constant 0 : index
    %353 = vector.load %arg17[%c7_135, %c0_136] : memref<8x32xf32, #tpu.memory_space<vmem>>, vector<1x32xf32>
    tpu.vector_store %arg17[%c7_135, %c0_136], %352 {strides = array<i32>} : memref<8x32xf32, #tpu.memory_space<vmem>>, vector<1x32xf32>,
    %c0_137 = arith.constant 0 : index
    %c0_138 = arith.constant 0 : index
    %354 = vector.load %arg17[%c0_137, %c0_138] : memref<8x32xf32, #tpu.memory_space<vmem>>, vector<8x32xf32>
    %355 = tpu.iota {dimensions = array<i32: 1>} : vector<1x64xi32>
    %356 = tpu.iota {dimensions = array<i32: 1>} : vector<1x128xi32>
    %357 = tpu.iota {dimensions = array<i32: 1>} : vector<1x10xi32>
    %c1_i32_139 = arith.constant 1 : i32
    %358 = vector.broadcast %c1_i32_139 : i32 to vector<1x1xi32>
    %c0_i32_140 = arith.constant 0 : i32
    %359 = vector.broadcast %c0_i32_140 : i32 to vector<1x10xi32>
    %cst_141 = arith.constant 0.000000e+00 : f32
    %360 = vector.broadcast %cst_141 : f32 to vector<1x10xf32>
    %361 = vector.broadcast %358 : vector<1x1xi32> to vector<1x64xi32>
    %362 = arith.cmpi eq, %355, %361 : vector<1x64xi32>
    %363 = arith.extui %362 : vector<1x64xi1> to vector<1x64xi32>
    %364 = arith.sitofp %363 : vector<1x64xi32> to vector<1x64xf32>
    %c0_142 = arith.constant 0 : index
    %c0_143 = arith.constant 0 : index
    %365 = vector.load %arg2[%c0_142, %c0_143] : memref<64x32xf32, #tpu.memory_space<vmem>>, vector<64x32xf32>
    %cst_144 = arith.constant dense<0.000000e+00> : vector<1x32xf32>
    %366 = tpu.matmul %364, %365, %cst_144 {dimension_numbers = #tpu.dot_dimension_numbers<[1], [0], [0], [1], [0, 0, 1, 1], [], []>} : vector<1x64xf32>, vector<64x32xf32>, vector<1x32xf32> -> vector<1x32xf32>
    %c0_145 = arith.constant 0 : index
    %c0_146 = arith.constant 0 : index
    %367 = vector.load %arg7[%c0_145, %c0_146] : memref<32x96xf32, #tpu.memory_space<vmem>>, vector<32x96xf32>
    %cst_147 = arith.constant dense<0.000000e+00> : vector<1x96xf32>
    %368 = tpu.matmul %366, %367, %cst_147 {dimension_numbers = #tpu.dot_dimension_numbers<[1], [0], [0], [1], [0, 0, 1, 1], [], []>} : vector<1x32xf32>, vector<32x96xf32>, vector<1x96xf32> -> vector<1x96xf32>
    %c0_148 = arith.constant 0 : index
    %c0_149 = arith.constant 0 : index
    %369 = vector.load %arg9[%c0_148, %c0_149] : memref<1x96xf32, #tpu.memory_space<vmem>>, vector<1x96xf32>
    %370 = arith.addf %368, %369 : vector<1x96xf32>
    %c0_150 = arith.constant 0 : index
    %c0_151 = arith.constant 0 : index
    %371 = vector.load %arg8[%c0_150, %c0_151] : memref<32x96xf32, #tpu.memory_space<vmem>>, vector<32x96xf32>
    %cst_152 = arith.constant dense<0.000000e+00> : vector<1x96xf32>
    %372 = tpu.matmul %350, %371, %cst_152 {dimension_numbers = #tpu.dot_dimension_numbers<[1], [0], [0], [1], [0, 0, 1, 1], [], []>} : vector<1x32xf32>, vector<32x96xf32>, vector<1x96xf32> -> vector<1x96xf32>
    %373 = vector.extract_strided_slice %370 {offsets = [0, 0], sizes = [1, 32], strides = [1, 1]} : vector<1x96xf32> to vector<1x32xf32>
    %374 = vector.extract_strided_slice %372 {offsets = [0, 0], sizes = [1, 32], strides = [1, 1]} : vector<1x96xf32> to vector<1x32xf32>
    %375 = arith.addf %373, %374 : vector<1x32xf32>
    %376 = arith.negf %375 : vector<1x32xf32>
    %377 = math.exp %376 : vector<1x32xf32>
    %cst_153 = arith.constant 1.000000e+00 : f32
    %378 = vector.broadcast %cst_153 : f32 to vector<1x32xf32>
    %379 = arith.addf %378, %377 : vector<1x32xf32>
    %380 = arith.divf %378, %379 : vector<1x32xf32>
    %381 = vector.extract_strided_slice %370 {offsets = [0, 32], sizes = [1, 32], strides = [1, 1]} : vector<1x96xf32> to vector<1x32xf32>
    %382 = vector.extract_strided_slice %372 {offsets = [0, 32], sizes = [1, 32], strides = [1, 1]} : vector<1x96xf32> to vector<1x32xf32>
    %383 = arith.addf %381, %382 : vector<1x32xf32>
    %384 = arith.negf %383 : vector<1x32xf32>
    %385 = math.exp %384 : vector<1x32xf32>
    %cst_154 = arith.constant 1.000000e+00 : f32
    %386 = vector.broadcast %cst_154 : f32 to vector<1x32xf32>
    %387 = arith.addf %386, %385 : vector<1x32xf32>
    %388 = arith.divf %386, %387 : vector<1x32xf32>
    %389 = vector.extract_strided_slice %370 {offsets = [0, 64], sizes = [1, 32], strides = [1, 1]} : vector<1x96xf32> to vector<1x32xf32>
    %390 = vector.extract_strided_slice %372 {offsets = [0, 64], sizes = [1, 32], strides = [1, 1]} : vector<1x96xf32> to vector<1x32xf32>
    %c0_155 = arith.constant 0 : index
    %c0_156 = arith.constant 0 : index
    %391 = vector.load %arg10[%c0_155, %c0_156] : memref<1x32xf32, #tpu.memory_space<vmem>>, vector<1x32xf32>
    %392 = arith.addf %390, %391 : vector<1x32xf32>
    %393 = arith.mulf %380, %392 : vector<1x32xf32>
    %394 = arith.addf %389, %393 : vector<1x32xf32>
    %395 = math.tanh %394 : vector<1x32xf32>
    %cst_157 = arith.constant 1.000000e+00 : f32
    %396 = vector.broadcast %cst_157 : f32 to vector<1x32xf32>
    %397 = arith.subf %396, %388 : vector<1x32xf32>
    %398 = arith.mulf %397, %395 : vector<1x32xf32>
    %399 = arith.mulf %388, %350 : vector<1x32xf32>
    %400 = arith.addf %398, %399 : vector<1x32xf32>
    %cst_158 = arith.constant dense<0.000000e+00> : vector<1x8xf32>
    %401 = tpu.matmul %400, %354, %cst_158 {dimension_numbers = #tpu.dot_dimension_numbers<[1], [1], [0], [0], [0, 0, 1, 0], [], []>} : vector<1x32xf32>, vector<8x32xf32>, vector<1x8xf32> -> vector<1x8xf32>
    %cst_159 = arith.constant dense<0xFF800000> : vector<1xf32>
    %402 = vector.multi_reduction <maximumf>, %401, %cst_159 [1] : vector<1x8xf32> to vector<1xf32>
    %403 = vector.shape_cast %402 : vector<1xf32> to vector<1x1xf32>
    %404 = vector.broadcast %403 : vector<1x1xf32> to vector<1x8xf32>
    %405 = arith.subf %401, %404 : vector<1x8xf32>
    %406 = math.exp %405 : vector<1x8xf32>
    %cst_160 = arith.constant dense<0.000000e+00> : vector<1xf32>
    %407 = vector.multi_reduction <add>, %406, %cst_160 [1] : vector<1x8xf32> to vector<1xf32>
    %408 = vector.shape_cast %407 : vector<1xf32> to vector<1x1xf32>
    %409 = vector.broadcast %408 : vector<1x1xf32> to vector<1x8xf32>
    %410 = arith.divf %406, %409 : vector<1x8xf32>
    %cst_161 = arith.constant dense<0.000000e+00> : vector<1x32xf32>
    %411 = tpu.matmul %410, %354, %cst_161 {dimension_numbers = #tpu.dot_dimension_numbers<[1], [0], [0], [1], [0, 0, 1, 1], [], []>} : vector<1x8xf32>, vector<8x32xf32>, vector<1x32xf32> -> vector<1x32xf32>
    %412 = tpu.concatenate %400, %411 in 1 : vector<1x32xf32>, vector<1x32xf32> -> vector<1x64xf32>
    %c0_162 = arith.constant 0 : index
    %c0_163 = arith.constant 0 : index
    %413 = vector.load %arg11[%c0_162, %c0_163] : memref<64x32xf32, #tpu.memory_space<vmem>>, vector<64x32xf32>
    %cst_164 = arith.constant dense<0.000000e+00> : vector<1x32xf32>
    %414 = tpu.matmul %412, %413, %cst_164 {dimension_numbers = #tpu.dot_dimension_numbers<[1], [0], [0], [1], [0, 0, 1, 1], [], []>} : vector<1x64xf32>, vector<64x32xf32>, vector<1x32xf32> -> vector<1x32xf32>
    %c0_165 = arith.constant 0 : index
    %c0_166 = arith.constant 0 : index
    %415 = vector.load %arg12[%c0_165, %c0_166] : memref<1x32xf32, #tpu.memory_space<vmem>>, vector<1x32xf32>
    %416 = arith.addf %414, %415 : vector<1x32xf32>
    %417 = math.tanh %416 : vector<1x32xf32>
    %c0_167 = arith.constant 0 : index
    %c0_168 = arith.constant 0 : index
    %418 = vector.load %arg13[%c0_167, %c0_168] : memref<32x128xf32, #tpu.memory_space<vmem>>, vector<32x128xf32>
    %cst_169 = arith.constant dense<0.000000e+00> : vector<1x128xf32>
    %419 = tpu.matmul %417, %418, %cst_169 {dimension_numbers = #tpu.dot_dimension_numbers<[1], [0], [0], [1], [0, 0, 1, 1], [], []>} : vector<1x32xf32>, vector<32x128xf32>, vector<1x128xf32> -> vector<1x128xf32>
    %c0_170 = arith.constant 0 : index
    %c0_171 = arith.constant 0 : index
    %420 = vector.load %arg14[%c0_170, %c0_171] : memref<1x128xf32, #tpu.memory_space<vmem>>, vector<1x128xf32>
    %421 = arith.addf %419, %420 : vector<1x128xf32>
    %cst_172 = arith.constant dense<0xFF800000> : vector<1xf32>
    %422 = vector.multi_reduction <maximumf>, %421, %cst_172 [1] : vector<1x128xf32> to vector<1xf32>
    %423 = vector.shape_cast %422 : vector<1xf32> to vector<1x1xf32>
    %424 = vector.broadcast %423 : vector<1x1xf32> to vector<1x128xf32>
    %425 = arith.subf %421, %424 : vector<1x128xf32>
    %426 = math.exp %425 : vector<1x128xf32>
    %cst_173 = arith.constant dense<0.000000e+00> : vector<1xf32>
    %427 = vector.multi_reduction <add>, %426, %cst_173 [1] : vector<1x128xf32> to vector<1xf32>
    %428 = vector.shape_cast %427 : vector<1xf32> to vector<1x1xf32>
    %429 = tpu.reciprocal %428 {approx = true} : vector<1x1xf32> -> vector<1x1xf32>
    %430 = vector.broadcast %423 : vector<1x1xf32> to vector<1x128xf32>
    %431 = arith.cmpf oge, %421, %430 : vector<1x128xf32>
    %c128_i32 = arith.constant 128 : i32
    %432 = vector.broadcast %c128_i32 : i32 to vector<1x128xi32>
    %433 = arith.select %431, %356, %432 : vector<1x128xi1>, vector<1x128xi32>
    %cst_174 = arith.constant dense<2147483647> : vector<1xi32>
    %434 = vector.multi_reduction <minsi>, %433, %cst_174 [1] : vector<1x128xi32> to vector<1xi32>
    %435 = vector.shape_cast %434 : vector<1xi32> to vector<1x1xi32>
    %c0_i32_175 = arith.constant 0 : i32
    %436 = vector.broadcast %c0_i32_175 : i32 to vector<1x10xi32>
    %437 = arith.cmpi eq, %357, %436 : vector<1x10xi32>
    %438 = vector.shape_cast %435 : vector<1x1xi32> to vector<1x1xi32>
    %439 = vector.broadcast %438 : vector<1x1xi32> to vector<1x10xi32>
    %440 = arith.select %437, %439, %359 : vector<1x10xi1>, vector<1x10xi32>
    %441 = vector.shape_cast %429 : vector<1x1xf32> to vector<1x1xf32>
    %442 = vector.broadcast %441 : vector<1x1xf32> to vector<1x10xf32>
    %443 = arith.select %437, %442, %360 : vector<1x10xi1>, vector<1x10xf32>
    %444 = vector.broadcast %435 : vector<1x1xi32> to vector<1x64xi32>
    %445 = arith.cmpi eq, %355, %444 : vector<1x64xi32>
    %446 = arith.extui %445 : vector<1x64xi1> to vector<1x64xi32>
    %447 = arith.sitofp %446 : vector<1x64xi32> to vector<1x64xf32>
    %c0_176 = arith.constant 0 : index
    %c0_177 = arith.constant 0 : index
    %448 = vector.load %arg2[%c0_176, %c0_177] : memref<64x32xf32, #tpu.memory_space<vmem>>, vector<64x32xf32>
    %cst_178 = arith.constant dense<0.000000e+00> : vector<1x32xf32>
    %449 = tpu.matmul %447, %448, %cst_178 {dimension_numbers = #tpu.dot_dimension_numbers<[1], [0], [0], [1], [0, 0, 1, 1], [], []>} : vector<1x64xf32>, vector<64x32xf32>, vector<1x32xf32> -> vector<1x32xf32>
    %c0_179 = arith.constant 0 : index
    %c0_180 = arith.constant 0 : index
    %450 = vector.load %arg7[%c0_179, %c0_180] : memref<32x96xf32, #tpu.memory_space<vmem>>, vector<32x96xf32>
    %cst_181 = arith.constant dense<0.000000e+00> : vector<1x96xf32>
    %451 = tpu.matmul %449, %450, %cst_181 {dimension_numbers = #tpu.dot_dimension_numbers<[1], [0], [0], [1], [0, 0, 1, 1], [], []>} : vector<1x32xf32>, vector<32x96xf32>, vector<1x96xf32> -> vector<1x96xf32>
    %c0_182 = arith.constant 0 : index
    %c0_183 = arith.constant 0 : index
    %452 = vector.load %arg9[%c0_182, %c0_183] : memref<1x96xf32, #tpu.memory_space<vmem>>, vector<1x96xf32>
    %453 = arith.addf %451, %452 : vector<1x96xf32>
    %c0_184 = arith.constant 0 : index
    %c0_185 = arith.constant 0 : index
    %454 = vector.load %arg8[%c0_184, %c0_185] : memref<32x96xf32, #tpu.memory_space<vmem>>, vector<32x96xf32>
    %cst_186 = arith.constant dense<0.000000e+00> : vector<1x96xf32>
    %455 = tpu.matmul %400, %454, %cst_186 {dimension_numbers = #tpu.dot_dimension_numbers<[1], [0], [0], [1], [0, 0, 1, 1], [], []>} : vector<1x32xf32>, vector<32x96xf32>, vector<1x96xf32> -> vector<1x96xf32>
    %456 = vector.extract_strided_slice %453 {offsets = [0, 0], sizes = [1, 32], strides = [1, 1]} : vector<1x96xf32> to vector<1x32xf32>
    %457 = vector.extract_strided_slice %455 {offsets = [0, 0], sizes = [1, 32], strides = [1, 1]} : vector<1x96xf32> to vector<1x32xf32>
    %458 = arith.addf %456, %457 : vector<1x32xf32>
    %459 = arith.negf %458 : vector<1x32xf32>
    %460 = math.exp %459 : vector<1x32xf32>
    %cst_187 = arith.constant 1.000000e+00 : f32
    %461 = vector.broadcast %cst_187 : f32 to vector<1x32xf32>
    %462 = arith.addf %461, %460 : vector<1x32xf32>
    %463 = arith.divf %461, %462 : vector<1x32xf32>
    %464 = vector.extract_strided_slice %453 {offsets = [0, 32], sizes = [1, 32], strides = [1, 1]} : vector<1x96xf32> to vector<1x32xf32>
    %465 = vector.extract_strided_slice %455 {offsets = [0, 32], sizes = [1, 32], strides = [1, 1]} : vector<1x96xf32> to vector<1x32xf32>
    %466 = arith.addf %464, %465 : vector<1x32xf32>
    %467 = arith.negf %466 : vector<1x32xf32>
    %468 = math.exp %467 : vector<1x32xf32>
    %cst_188 = arith.constant 1.000000e+00 : f32
    %469 = vector.broadcast %cst_188 : f32 to vector<1x32xf32>
    %470 = arith.addf %469, %468 : vector<1x32xf32>
    %471 = arith.divf %469, %470 : vector<1x32xf32>
    %472 = vector.extract_strided_slice %453 {offsets = [0, 64], sizes = [1, 32], strides = [1, 1]} : vector<1x96xf32> to vector<1x32xf32>
    %473 = vector.extract_strided_slice %455 {offsets = [0, 64], sizes = [1, 32], strides = [1, 1]} : vector<1x96xf32> to vector<1x32xf32>
    %c0_189 = arith.constant 0 : index
    %c0_190 = arith.constant 0 : index
    %474 = vector.load %arg10[%c0_189, %c0_190] : memref<1x32xf32, #tpu.memory_space<vmem>>, vector<1x32xf32>
    %475 = arith.addf %473, %474 : vector<1x32xf32>
    %476 = arith.mulf %463, %475 : vector<1x32xf32>
    %477 = arith.addf %472, %476 : vector<1x32xf32>
    %478 = math.tanh %477 : vector<1x32xf32>
    %cst_191 = arith.constant 1.000000e+00 : f32
    %479 = vector.broadcast %cst_191 : f32 to vector<1x32xf32>
    %480 = arith.subf %479, %471 : vector<1x32xf32>
    %481 = arith.mulf %480, %478 : vector<1x32xf32>
    %482 = arith.mulf %471, %400 : vector<1x32xf32>
    %483 = arith.addf %481, %482 : vector<1x32xf32>
    %cst_192 = arith.constant dense<0.000000e+00> : vector<1x8xf32>
    %484 = tpu.matmul %483, %354, %cst_192 {dimension_numbers = #tpu.dot_dimension_numbers<[1], [1], [0], [0], [0, 0, 1, 0], [], []>} : vector<1x32xf32>, vector<8x32xf32>, vector<1x8xf32> -> vector<1x8xf32>
    %cst_193 = arith.constant dense<0xFF800000> : vector<1xf32>
    %485 = vector.multi_reduction <maximumf>, %484, %cst_193 [1] : vector<1x8xf32> to vector<1xf32>
    %486 = vector.shape_cast %485 : vector<1xf32> to vector<1x1xf32>
    %487 = vector.broadcast %486 : vector<1x1xf32> to vector<1x8xf32>
    %488 = arith.subf %484, %487 : vector<1x8xf32>
    %489 = math.exp %488 : vector<1x8xf32>
    %cst_194 = arith.constant dense<0.000000e+00> : vector<1xf32>
    %490 = vector.multi_reduction <add>, %489, %cst_194 [1] : vector<1x8xf32> to vector<1xf32>
    %491 = vector.shape_cast %490 : vector<1xf32> to vector<1x1xf32>
    %492 = vector.broadcast %491 : vector<1x1xf32> to vector<1x8xf32>
    %493 = arith.divf %489, %492 : vector<1x8xf32>
    %cst_195 = arith.constant dense<0.000000e+00> : vector<1x32xf32>
    %494 = tpu.matmul %493, %354, %cst_195 {dimension_numbers = #tpu.dot_dimension_numbers<[1], [0], [0], [1], [0, 0, 1, 1], [], []>} : vector<1x8xf32>, vector<8x32xf32>, vector<1x32xf32> -> vector<1x32xf32>
    %495 = tpu.concatenate %483, %494 in 1 : vector<1x32xf32>, vector<1x32xf32> -> vector<1x64xf32>
    %c0_196 = arith.constant 0 : index
    %c0_197 = arith.constant 0 : index
    %496 = vector.load %arg11[%c0_196, %c0_197] : memref<64x32xf32, #tpu.memory_space<vmem>>, vector<64x32xf32>
    %cst_198 = arith.constant dense<0.000000e+00> : vector<1x32xf32>
    %497 = tpu.matmul %495, %496, %cst_198 {dimension_numbers = #tpu.dot_dimension_numbers<[1], [0], [0], [1], [0, 0, 1, 1], [], []>} : vector<1x64xf32>, vector<64x32xf32>, vector<1x32xf32> -> vector<1x32xf32>
    %c0_199 = arith.constant 0 : index
    %c0_200 = arith.constant 0 : index
    %498 = vector.load %arg12[%c0_199, %c0_200] : memref<1x32xf32, #tpu.memory_space<vmem>>, vector<1x32xf32>
    %499 = arith.addf %497, %498 : vector<1x32xf32>
    %500 = math.tanh %499 : vector<1x32xf32>
    %c0_201 = arith.constant 0 : index
    %c0_202 = arith.constant 0 : index
    %501 = vector.load %arg13[%c0_201, %c0_202] : memref<32x128xf32, #tpu.memory_space<vmem>>, vector<32x128xf32>
    %cst_203 = arith.constant dense<0.000000e+00> : vector<1x128xf32>
    %502 = tpu.matmul %500, %501, %cst_203 {dimension_numbers = #tpu.dot_dimension_numbers<[1], [0], [0], [1], [0, 0, 1, 1], [], []>} : vector<1x32xf32>, vector<32x128xf32>, vector<1x128xf32> -> vector<1x128xf32>
    %c0_204 = arith.constant 0 : index
    %c0_205 = arith.constant 0 : index
    %503 = vector.load %arg14[%c0_204, %c0_205] : memref<1x128xf32, #tpu.memory_space<vmem>>, vector<1x128xf32>
    %504 = arith.addf %502, %503 : vector<1x128xf32>
    %cst_206 = arith.constant dense<0xFF800000> : vector<1xf32>
    %505 = vector.multi_reduction <maximumf>, %504, %cst_206 [1] : vector<1x128xf32> to vector<1xf32>
    %506 = vector.shape_cast %505 : vector<1xf32> to vector<1x1xf32>
    %507 = vector.broadcast %506 : vector<1x1xf32> to vector<1x128xf32>
    %508 = arith.subf %504, %507 : vector<1x128xf32>
    %509 = math.exp %508 : vector<1x128xf32>
    %cst_207 = arith.constant dense<0.000000e+00> : vector<1xf32>
    %510 = vector.multi_reduction <add>, %509, %cst_207 [1] : vector<1x128xf32> to vector<1xf32>
    %511 = vector.shape_cast %510 : vector<1xf32> to vector<1x1xf32>
    %512 = tpu.reciprocal %511 {approx = true} : vector<1x1xf32> -> vector<1x1xf32>
    %513 = vector.broadcast %506 : vector<1x1xf32> to vector<1x128xf32>
    %514 = arith.cmpf oge, %504, %513 : vector<1x128xf32>
    %c128_i32_208 = arith.constant 128 : i32
    %515 = vector.broadcast %c128_i32_208 : i32 to vector<1x128xi32>
    %516 = arith.select %514, %356, %515 : vector<1x128xi1>, vector<1x128xi32>
    %cst_209 = arith.constant dense<2147483647> : vector<1xi32>
    %517 = vector.multi_reduction <minsi>, %516, %cst_209 [1] : vector<1x128xi32> to vector<1xi32>
    %518 = vector.shape_cast %517 : vector<1xi32> to vector<1x1xi32>
    %c1_i32_210 = arith.constant 1 : i32
    %519 = vector.broadcast %c1_i32_210 : i32 to vector<1x10xi32>
    %520 = arith.cmpi eq, %357, %519 : vector<1x10xi32>
    %521 = vector.shape_cast %518 : vector<1x1xi32> to vector<1x1xi32>
    %522 = vector.broadcast %521 : vector<1x1xi32> to vector<1x10xi32>
    %523 = arith.select %520, %522, %440 : vector<1x10xi1>, vector<1x10xi32>
    %524 = vector.shape_cast %512 : vector<1x1xf32> to vector<1x1xf32>
    %525 = vector.broadcast %524 : vector<1x1xf32> to vector<1x10xf32>
    %526 = arith.select %520, %525, %443 : vector<1x10xi1>, vector<1x10xf32>
    %527 = vector.broadcast %518 : vector<1x1xi32> to vector<1x64xi32>
    %528 = arith.cmpi eq, %355, %527 : vector<1x64xi32>
    %529 = arith.extui %528 : vector<1x64xi1> to vector<1x64xi32>
    %530 = arith.sitofp %529 : vector<1x64xi32> to vector<1x64xf32>
    %c0_211 = arith.constant 0 : index
    %c0_212 = arith.constant 0 : index
    %531 = vector.load %arg2[%c0_211, %c0_212] : memref<64x32xf32, #tpu.memory_space<vmem>>, vector<64x32xf32>
    %cst_213 = arith.constant dense<0.000000e+00> : vector<1x32xf32>
    %532 = tpu.matmul %530, %531, %cst_213 {dimension_numbers = #tpu.dot_dimension_numbers<[1], [0], [0], [1], [0, 0, 1, 1], [], []>} : vector<1x64xf32>, vector<64x32xf32>, vector<1x32xf32> -> vector<1x32xf32>
    %c0_214 = arith.constant 0 : index
    %c0_215 = arith.constant 0 : index
    %533 = vector.load %arg7[%c0_214, %c0_215] : memref<32x96xf32, #tpu.memory_space<vmem>>, vector<32x96xf32>
    %cst_216 = arith.constant dense<0.000000e+00> : vector<1x96xf32>
    %534 = tpu.matmul %532, %533, %cst_216 {dimension_numbers = #tpu.dot_dimension_numbers<[1], [0], [0], [1], [0, 0, 1, 1], [], []>} : vector<1x32xf32>, vector<32x96xf32>, vector<1x96xf32> -> vector<1x96xf32>
    %c0_217 = arith.constant 0 : index
    %c0_218 = arith.constant 0 : index
    %535 = vector.load %arg9[%c0_217, %c0_218] : memref<1x96xf32, #tpu.memory_space<vmem>>, vector<1x96xf32>
    %536 = arith.addf %534, %535 : vector<1x96xf32>
    %c0_219 = arith.constant 0 : index
    %c0_220 = arith.constant 0 : index
    %537 = vector.load %arg8[%c0_219, %c0_220] : memref<32x96xf32, #tpu.memory_space<vmem>>, vector<32x96xf32>
    %cst_221 = arith.constant dense<0.000000e+00> : vector<1x96xf32>
    %538 = tpu.matmul %483, %537, %cst_221 {dimension_numbers = #tpu.dot_dimension_numbers<[1], [0], [0], [1], [0, 0, 1, 1], [], []>} : vector<1x32xf32>, vector<32x96xf32>, vector<1x96xf32> -> vector<1x96xf32>
    %539 = vector.extract_strided_slice %536 {offsets = [0, 0], sizes = [1, 32], strides = [1, 1]} : vector<1x96xf32> to vector<1x32xf32>
    %540 = vector.extract_strided_slice %538 {offsets = [0, 0], sizes = [1, 32], strides = [1, 1]} : vector<1x96xf32> to vector<1x32xf32>
    %541 = arith.addf %539, %540 : vector<1x32xf32>
    %542 = arith.negf %541 : vector<1x32xf32>
    %543 = math.exp %542 : vector<1x32xf32>
    %cst_222 = arith.constant 1.000000e+00 : f32
    %544 = vector.broadcast %cst_222 : f32 to vector<1x32xf32>
    %545 = arith.addf %544, %543 : vector<1x32xf32>
    %546 = arith.divf %544, %545 : vector<1x32xf32>
    %547 = vector.extract_strided_slice %536 {offsets = [0, 32], sizes = [1, 32], strides = [1, 1]} : vector<1x96xf32> to vector<1x32xf32>
    %548 = vector.extract_strided_slice %538 {offsets = [0, 32], sizes = [1, 32], strides = [1, 1]} : vector<1x96xf32> to vector<1x32xf32>
    %549 = arith.addf %547, %548 : vector<1x32xf32>
    %550 = arith.negf %549 : vector<1x32xf32>
    %551 = math.exp %550 : vector<1x32xf32>
    %cst_223 = arith.constant 1.000000e+00 : f32
    %552 = vector.broadcast %cst_223 : f32 to vector<1x32xf32>
    %553 = arith.addf %552, %551 : vector<1x32xf32>
    %554 = arith.divf %552, %553 : vector<1x32xf32>
    %555 = vector.extract_strided_slice %536 {offsets = [0, 64], sizes = [1, 32], strides = [1, 1]} : vector<1x96xf32> to vector<1x32xf32>
    %556 = vector.extract_strided_slice %538 {offsets = [0, 64], sizes = [1, 32], strides = [1, 1]} : vector<1x96xf32> to vector<1x32xf32>
    %c0_224 = arith.constant 0 : index
    %c0_225 = arith.constant 0 : index
    %557 = vector.load %arg10[%c0_224, %c0_225] : memref<1x32xf32, #tpu.memory_space<vmem>>, vector<1x32xf32>
    %558 = arith.addf %556, %557 : vector<1x32xf32>
    %559 = arith.mulf %546, %558 : vector<1x32xf32>
    %560 = arith.addf %555, %559 : vector<1x32xf32>
    %561 = math.tanh %560 : vector<1x32xf32>
    %cst_226 = arith.constant 1.000000e+00 : f32
    %562 = vector.broadcast %cst_226 : f32 to vector<1x32xf32>
    %563 = arith.subf %562, %554 : vector<1x32xf32>
    %564 = arith.mulf %563, %561 : vector<1x32xf32>
    %565 = arith.mulf %554, %483 : vector<1x32xf32>
    %566 = arith.addf %564, %565 : vector<1x32xf32>
    %cst_227 = arith.constant dense<0.000000e+00> : vector<1x8xf32>
    %567 = tpu.matmul %566, %354, %cst_227 {dimension_numbers = #tpu.dot_dimension_numbers<[1], [1], [0], [0], [0, 0, 1, 0], [], []>} : vector<1x32xf32>, vector<8x32xf32>, vector<1x8xf32> -> vector<1x8xf32>
    %cst_228 = arith.constant dense<0xFF800000> : vector<1xf32>
    %568 = vector.multi_reduction <maximumf>, %567, %cst_228 [1] : vector<1x8xf32> to vector<1xf32>
    %569 = vector.shape_cast %568 : vector<1xf32> to vector<1x1xf32>
    %570 = vector.broadcast %569 : vector<1x1xf32> to vector<1x8xf32>
    %571 = arith.subf %567, %570 : vector<1x8xf32>
    %572 = math.exp %571 : vector<1x8xf32>
    %cst_229 = arith.constant dense<0.000000e+00> : vector<1xf32>
    %573 = vector.multi_reduction <add>, %572, %cst_229 [1] : vector<1x8xf32> to vector<1xf32>
    %574 = vector.shape_cast %573 : vector<1xf32> to vector<1x1xf32>
    %575 = vector.broadcast %574 : vector<1x1xf32> to vector<1x8xf32>
    %576 = arith.divf %572, %575 : vector<1x8xf32>
    %cst_230 = arith.constant dense<0.000000e+00> : vector<1x32xf32>
    %577 = tpu.matmul %576, %354, %cst_230 {dimension_numbers = #tpu.dot_dimension_numbers<[1], [0], [0], [1], [0, 0, 1, 1], [], []>} : vector<1x8xf32>, vector<8x32xf32>, vector<1x32xf32> -> vector<1x32xf32>
    %578 = tpu.concatenate %566, %577 in 1 : vector<1x32xf32>, vector<1x32xf32> -> vector<1x64xf32>
    %c0_231 = arith.constant 0 : index
    %c0_232 = arith.constant 0 : index
    %579 = vector.load %arg11[%c0_231, %c0_232] : memref<64x32xf32, #tpu.memory_space<vmem>>, vector<64x32xf32>
    %cst_233 = arith.constant dense<0.000000e+00> : vector<1x32xf32>
    %580 = tpu.matmul %578, %579, %cst_233 {dimension_numbers = #tpu.dot_dimension_numbers<[1], [0], [0], [1], [0, 0, 1, 1], [], []>} : vector<1x64xf32>, vector<64x32xf32>, vector<1x32xf32> -> vector<1x32xf32>
    %c0_234 = arith.constant 0 : index
    %c0_235 = arith.constant 0 : index
    %581 = vector.load %arg12[%c0_234, %c0_235] : memref<1x32xf32, #tpu.memory_space<vmem>>, vector<1x32xf32>
    %582 = arith.addf %580, %581 : vector<1x32xf32>
    %583 = math.tanh %582 : vector<1x32xf32>
    %c0_236 = arith.constant 0 : index
    %c0_237 = arith.constant 0 : index
    %584 = vector.load %arg13[%c0_236, %c0_237] : memref<32x128xf32, #tpu.memory_space<vmem>>, vector<32x128xf32>
    %cst_238 = arith.constant dense<0.000000e+00> : vector<1x128xf32>
    %585 = tpu.matmul %583, %584, %cst_238 {dimension_numbers = #tpu.dot_dimension_numbers<[1], [0], [0], [1], [0, 0, 1, 1], [], []>} : vector<1x32xf32>, vector<32x128xf32>, vector<1x128xf32> -> vector<1x128xf32>
    %c0_239 = arith.constant 0 : index
    %c0_240 = arith.constant 0 : index
    %586 = vector.load %arg14[%c0_239, %c0_240] : memref<1x128xf32, #tpu.memory_space<vmem>>, vector<1x128xf32>
    %587 = arith.addf %585, %586 : vector<1x128xf32>
    %cst_241 = arith.constant dense<0xFF800000> : vector<1xf32>
    %588 = vector.multi_reduction <maximumf>, %587, %cst_241 [1] : vector<1x128xf32> to vector<1xf32>
    %589 = vector.shape_cast %588 : vector<1xf32> to vector<1x1xf32>
    %590 = vector.broadcast %589 : vector<1x1xf32> to vector<1x128xf32>
    %591 = arith.subf %587, %590 : vector<1x128xf32>
    %592 = math.exp %591 : vector<1x128xf32>
    %cst_242 = arith.constant dense<0.000000e+00> : vector<1xf32>
    %593 = vector.multi_reduction <add>, %592, %cst_242 [1] : vector<1x128xf32> to vector<1xf32>
    %594 = vector.shape_cast %593 : vector<1xf32> to vector<1x1xf32>
    %595 = tpu.reciprocal %594 {approx = true} : vector<1x1xf32> -> vector<1x1xf32>
    %596 = vector.broadcast %589 : vector<1x1xf32> to vector<1x128xf32>
    %597 = arith.cmpf oge, %587, %596 : vector<1x128xf32>
    %c128_i32_243 = arith.constant 128 : i32
    %598 = vector.broadcast %c128_i32_243 : i32 to vector<1x128xi32>
    %599 = arith.select %597, %356, %598 : vector<1x128xi1>, vector<1x128xi32>
    %cst_244 = arith.constant dense<2147483647> : vector<1xi32>
    %600 = vector.multi_reduction <minsi>, %599, %cst_244 [1] : vector<1x128xi32> to vector<1xi32>
    %601 = vector.shape_cast %600 : vector<1xi32> to vector<1x1xi32>
    %c2_i32_245 = arith.constant 2 : i32
    %602 = vector.broadcast %c2_i32_245 : i32 to vector<1x10xi32>
    %603 = arith.cmpi eq, %357, %602 : vector<1x10xi32>
    %604 = vector.shape_cast %601 : vector<1x1xi32> to vector<1x1xi32>
    %605 = vector.broadcast %604 : vector<1x1xi32> to vector<1x10xi32>
    %606 = arith.select %603, %605, %523 : vector<1x10xi1>, vector<1x10xi32>
    %607 = vector.shape_cast %595 : vector<1x1xf32> to vector<1x1xf32>
    %608 = vector.broadcast %607 : vector<1x1xf32> to vector<1x10xf32>
    %609 = arith.select %603, %608, %526 : vector<1x10xi1>, vector<1x10xf32>
    %610 = vector.broadcast %601 : vector<1x1xi32> to vector<1x64xi32>
    %611 = arith.cmpi eq, %355, %610 : vector<1x64xi32>
    %612 = arith.extui %611 : vector<1x64xi1> to vector<1x64xi32>
    %613 = arith.sitofp %612 : vector<1x64xi32> to vector<1x64xf32>
    %c0_246 = arith.constant 0 : index
    %c0_247 = arith.constant 0 : index
    %614 = vector.load %arg2[%c0_246, %c0_247] : memref<64x32xf32, #tpu.memory_space<vmem>>, vector<64x32xf32>
    %cst_248 = arith.constant dense<0.000000e+00> : vector<1x32xf32>
    %615 = tpu.matmul %613, %614, %cst_248 {dimension_numbers = #tpu.dot_dimension_numbers<[1], [0], [0], [1], [0, 0, 1, 1], [], []>} : vector<1x64xf32>, vector<64x32xf32>, vector<1x32xf32> -> vector<1x32xf32>
    %c0_249 = arith.constant 0 : index
    %c0_250 = arith.constant 0 : index
    %616 = vector.load %arg7[%c0_249, %c0_250] : memref<32x96xf32, #tpu.memory_space<vmem>>, vector<32x96xf32>
    %cst_251 = arith.constant dense<0.000000e+00> : vector<1x96xf32>
    %617 = tpu.matmul %615, %616, %cst_251 {dimension_numbers = #tpu.dot_dimension_numbers<[1], [0], [0], [1], [0, 0, 1, 1], [], []>} : vector<1x32xf32>, vector<32x96xf32>, vector<1x96xf32> -> vector<1x96xf32>
    %c0_252 = arith.constant 0 : index
    %c0_253 = arith.constant 0 : index
    %618 = vector.load %arg9[%c0_252, %c0_253] : memref<1x96xf32, #tpu.memory_space<vmem>>, vector<1x96xf32>
    %619 = arith.addf %617, %618 : vector<1x96xf32>
    %c0_254 = arith.constant 0 : index
    %c0_255 = arith.constant 0 : index
    %620 = vector.load %arg8[%c0_254, %c0_255] : memref<32x96xf32, #tpu.memory_space<vmem>>, vector<32x96xf32>
    %cst_256 = arith.constant dense<0.000000e+00> : vector<1x96xf32>
    %621 = tpu.matmul %566, %620, %cst_256 {dimension_numbers = #tpu.dot_dimension_numbers<[1], [0], [0], [1], [0, 0, 1, 1], [], []>} : vector<1x32xf32>, vector<32x96xf32>, vector<1x96xf32> -> vector<1x96xf32>
    %622 = vector.extract_strided_slice %619 {offsets = [0, 0], sizes = [1, 32], strides = [1, 1]} : vector<1x96xf32> to vector<1x32xf32>
    %623 = vector.extract_strided_slice %621 {offsets = [0, 0], sizes = [1, 32], strides = [1, 1]} : vector<1x96xf32> to vector<1x32xf32>
    %624 = arith.addf %622, %623 : vector<1x32xf32>
    %625 = arith.negf %624 : vector<1x32xf32>
    %626 = math.exp %625 : vector<1x32xf32>
    %cst_257 = arith.constant 1.000000e+00 : f32
    %627 = vector.broadcast %cst_257 : f32 to vector<1x32xf32>
    %628 = arith.addf %627, %626 : vector<1x32xf32>
    %629 = arith.divf %627, %628 : vector<1x32xf32>
    %630 = vector.extract_strided_slice %619 {offsets = [0, 32], sizes = [1, 32], strides = [1, 1]} : vector<1x96xf32> to vector<1x32xf32>
    %631 = vector.extract_strided_slice %621 {offsets = [0, 32], sizes = [1, 32], strides = [1, 1]} : vector<1x96xf32> to vector<1x32xf32>
    %632 = arith.addf %630, %631 : vector<1x32xf32>
    %633 = arith.negf %632 : vector<1x32xf32>
    %634 = math.exp %633 : vector<1x32xf32>
    %cst_258 = arith.constant 1.000000e+00 : f32
    %635 = vector.broadcast %cst_258 : f32 to vector<1x32xf32>
    %636 = arith.addf %635, %634 : vector<1x32xf32>
    %637 = arith.divf %635, %636 : vector<1x32xf32>
    %638 = vector.extract_strided_slice %619 {offsets = [0, 64], sizes = [1, 32], strides = [1, 1]} : vector<1x96xf32> to vector<1x32xf32>
    %639 = vector.extract_strided_slice %621 {offsets = [0, 64], sizes = [1, 32], strides = [1, 1]} : vector<1x96xf32> to vector<1x32xf32>
    %c0_259 = arith.constant 0 : index
    %c0_260 = arith.constant 0 : index
    %640 = vector.load %arg10[%c0_259, %c0_260] : memref<1x32xf32, #tpu.memory_space<vmem>>, vector<1x32xf32>
    %641 = arith.addf %639, %640 : vector<1x32xf32>
    %642 = arith.mulf %629, %641 : vector<1x32xf32>
    %643 = arith.addf %638, %642 : vector<1x32xf32>
    %644 = math.tanh %643 : vector<1x32xf32>
    %cst_261 = arith.constant 1.000000e+00 : f32
    %645 = vector.broadcast %cst_261 : f32 to vector<1x32xf32>
    %646 = arith.subf %645, %637 : vector<1x32xf32>
    %647 = arith.mulf %646, %644 : vector<1x32xf32>
    %648 = arith.mulf %637, %566 : vector<1x32xf32>
    %649 = arith.addf %647, %648 : vector<1x32xf32>
    %cst_262 = arith.constant dense<0.000000e+00> : vector<1x8xf32>
    %650 = tpu.matmul %649, %354, %cst_262 {dimension_numbers = #tpu.dot_dimension_numbers<[1], [1], [0], [0], [0, 0, 1, 0], [], []>} : vector<1x32xf32>, vector<8x32xf32>, vector<1x8xf32> -> vector<1x8xf32>
    %cst_263 = arith.constant dense<0xFF800000> : vector<1xf32>
    %651 = vector.multi_reduction <maximumf>, %650, %cst_263 [1] : vector<1x8xf32> to vector<1xf32>
    %652 = vector.shape_cast %651 : vector<1xf32> to vector<1x1xf32>
    %653 = vector.broadcast %652 : vector<1x1xf32> to vector<1x8xf32>
    %654 = arith.subf %650, %653 : vector<1x8xf32>
    %655 = math.exp %654 : vector<1x8xf32>
    %cst_264 = arith.constant dense<0.000000e+00> : vector<1xf32>
    %656 = vector.multi_reduction <add>, %655, %cst_264 [1] : vector<1x8xf32> to vector<1xf32>
    %657 = vector.shape_cast %656 : vector<1xf32> to vector<1x1xf32>
    %658 = vector.broadcast %657 : vector<1x1xf32> to vector<1x8xf32>
    %659 = arith.divf %655, %658 : vector<1x8xf32>
    %cst_265 = arith.constant dense<0.000000e+00> : vector<1x32xf32>
    %660 = tpu.matmul %659, %354, %cst_265 {dimension_numbers = #tpu.dot_dimension_numbers<[1], [0], [0], [1], [0, 0, 1, 1], [], []>} : vector<1x8xf32>, vector<8x32xf32>, vector<1x32xf32> -> vector<1x32xf32>
    %661 = tpu.concatenate %649, %660 in 1 : vector<1x32xf32>, vector<1x32xf32> -> vector<1x64xf32>
    %c0_266 = arith.constant 0 : index
    %c0_267 = arith.constant 0 : index
    %662 = vector.load %arg11[%c0_266, %c0_267] : memref<64x32xf32, #tpu.memory_space<vmem>>, vector<64x32xf32>
    %cst_268 = arith.constant dense<0.000000e+00> : vector<1x32xf32>
    %663 = tpu.matmul %661, %662, %cst_268 {dimension_numbers = #tpu.dot_dimension_numbers<[1], [0], [0], [1], [0, 0, 1, 1], [], []>} : vector<1x64xf32>, vector<64x32xf32>, vector<1x32xf32> -> vector<1x32xf32>
    %c0_269 = arith.constant 0 : index
    %c0_270 = arith.constant 0 : index
    %664 = vector.load %arg12[%c0_269, %c0_270] : memref<1x32xf32, #tpu.memory_space<vmem>>, vector<1x32xf32>
    %665 = arith.addf %663, %664 : vector<1x32xf32>
    %666 = math.tanh %665 : vector<1x32xf32>
    %c0_271 = arith.constant 0 : index
    %c0_272 = arith.constant 0 : index
    %667 = vector.load %arg13[%c0_271, %c0_272] : memref<32x128xf32, #tpu.memory_space<vmem>>, vector<32x128xf32>
    %cst_273 = arith.constant dense<0.000000e+00> : vector<1x128xf32>
    %668 = tpu.matmul %666, %667, %cst_273 {dimension_numbers = #tpu.dot_dimension_numbers<[1], [0], [0], [1], [0, 0, 1, 1], [], []>} : vector<1x32xf32>, vector<32x128xf32>, vector<1x128xf32> -> vector<1x128xf32>
    %c0_274 = arith.constant 0 : index
    %c0_275 = arith.constant 0 : index
    %669 = vector.load %arg14[%c0_274, %c0_275] : memref<1x128xf32, #tpu.memory_space<vmem>>, vector<1x128xf32>
    %670 = arith.addf %668, %669 : vector<1x128xf32>
    %cst_276 = arith.constant dense<0xFF800000> : vector<1xf32>
    %671 = vector.multi_reduction <maximumf>, %670, %cst_276 [1] : vector<1x128xf32> to vector<1xf32>
    %672 = vector.shape_cast %671 : vector<1xf32> to vector<1x1xf32>
    %673 = vector.broadcast %672 : vector<1x1xf32> to vector<1x128xf32>
    %674 = arith.subf %670, %673 : vector<1x128xf32>
    %675 = math.exp %674 : vector<1x128xf32>
    %cst_277 = arith.constant dense<0.000000e+00> : vector<1xf32>
    %676 = vector.multi_reduction <add>, %675, %cst_277 [1] : vector<1x128xf32> to vector<1xf32>
    %677 = vector.shape_cast %676 : vector<1xf32> to vector<1x1xf32>
    %678 = tpu.reciprocal %677 {approx = true} : vector<1x1xf32> -> vector<1x1xf32>
    %679 = vector.broadcast %672 : vector<1x1xf32> to vector<1x128xf32>
    %680 = arith.cmpf oge, %670, %679 : vector<1x128xf32>
    %c128_i32_278 = arith.constant 128 : i32
    %681 = vector.broadcast %c128_i32_278 : i32 to vector<1x128xi32>
    %682 = arith.select %680, %356, %681 : vector<1x128xi1>, vector<1x128xi32>
    %cst_279 = arith.constant dense<2147483647> : vector<1xi32>
    %683 = vector.multi_reduction <minsi>, %682, %cst_279 [1] : vector<1x128xi32> to vector<1xi32>
    %684 = vector.shape_cast %683 : vector<1xi32> to vector<1x1xi32>
    %c3_i32_280 = arith.constant 3 : i32
    %685 = vector.broadcast %c3_i32_280 : i32 to vector<1x10xi32>
    %686 = arith.cmpi eq, %357, %685 : vector<1x10xi32>
    %687 = vector.shape_cast %684 : vector<1x1xi32> to vector<1x1xi32>
    %688 = vector.broadcast %687 : vector<1x1xi32> to vector<1x10xi32>
    %689 = arith.select %686, %688, %606 : vector<1x10xi1>, vector<1x10xi32>
    %690 = vector.shape_cast %678 : vector<1x1xf32> to vector<1x1xf32>
    %691 = vector.broadcast %690 : vector<1x1xf32> to vector<1x10xf32>
    %692 = arith.select %686, %691, %609 : vector<1x10xi1>, vector<1x10xf32>
    %693 = vector.broadcast %684 : vector<1x1xi32> to vector<1x64xi32>
    %694 = arith.cmpi eq, %355, %693 : vector<1x64xi32>
    %695 = arith.extui %694 : vector<1x64xi1> to vector<1x64xi32>
    %696 = arith.sitofp %695 : vector<1x64xi32> to vector<1x64xf32>
    %c0_281 = arith.constant 0 : index
    %c0_282 = arith.constant 0 : index
    %697 = vector.load %arg2[%c0_281, %c0_282] : memref<64x32xf32, #tpu.memory_space<vmem>>, vector<64x32xf32>
    %cst_283 = arith.constant dense<0.000000e+00> : vector<1x32xf32>
    %698 = tpu.matmul %696, %697, %cst_283 {dimension_numbers = #tpu.dot_dimension_numbers<[1], [0], [0], [1], [0, 0, 1, 1], [], []>} : vector<1x64xf32>, vector<64x32xf32>, vector<1x32xf32> -> vector<1x32xf32>
    %c0_284 = arith.constant 0 : index
    %c0_285 = arith.constant 0 : index
    %699 = vector.load %arg7[%c0_284, %c0_285] : memref<32x96xf32, #tpu.memory_space<vmem>>, vector<32x96xf32>
    %cst_286 = arith.constant dense<0.000000e+00> : vector<1x96xf32>
    %700 = tpu.matmul %698, %699, %cst_286 {dimension_numbers = #tpu.dot_dimension_numbers<[1], [0], [0], [1], [0, 0, 1, 1], [], []>} : vector<1x32xf32>, vector<32x96xf32>, vector<1x96xf32> -> vector<1x96xf32>
    %c0_287 = arith.constant 0 : index
    %c0_288 = arith.constant 0 : index
    %701 = vector.load %arg9[%c0_287, %c0_288] : memref<1x96xf32, #tpu.memory_space<vmem>>, vector<1x96xf32>
    %702 = arith.addf %700, %701 : vector<1x96xf32>
    %c0_289 = arith.constant 0 : index
    %c0_290 = arith.constant 0 : index
    %703 = vector.load %arg8[%c0_289, %c0_290] : memref<32x96xf32, #tpu.memory_space<vmem>>, vector<32x96xf32>
    %cst_291 = arith.constant dense<0.000000e+00> : vector<1x96xf32>
    %704 = tpu.matmul %649, %703, %cst_291 {dimension_numbers = #tpu.dot_dimension_numbers<[1], [0], [0], [1], [0, 0, 1, 1], [], []>} : vector<1x32xf32>, vector<32x96xf32>, vector<1x96xf32> -> vector<1x96xf32>
    %705 = vector.extract_strided_slice %702 {offsets = [0, 0], sizes = [1, 32], strides = [1, 1]} : vector<1x96xf32> to vector<1x32xf32>
    %706 = vector.extract_strided_slice %704 {offsets = [0, 0], sizes = [1, 32], strides = [1, 1]} : vector<1x96xf32> to vector<1x32xf32>
    %707 = arith.addf %705, %706 : vector<1x32xf32>
    %708 = arith.negf %707 : vector<1x32xf32>
    %709 = math.exp %708 : vector<1x32xf32>
    %cst_292 = arith.constant 1.000000e+00 : f32
    %710 = vector.broadcast %cst_292 : f32 to vector<1x32xf32>
    %711 = arith.addf %710, %709 : vector<1x32xf32>
    %712 = arith.divf %710, %711 : vector<1x32xf32>
    %713 = vector.extract_strided_slice %702 {offsets = [0, 32], sizes = [1, 32], strides = [1, 1]} : vector<1x96xf32> to vector<1x32xf32>
    %714 = vector.extract_strided_slice %704 {offsets = [0, 32], sizes = [1, 32], strides = [1, 1]} : vector<1x96xf32> to vector<1x32xf32>
    %715 = arith.addf %713, %714 : vector<1x32xf32>
    %716 = arith.negf %715 : vector<1x32xf32>
    %717 = math.exp %716 : vector<1x32xf32>
    %cst_293 = arith.constant 1.000000e+00 : f32
    %718 = vector.broadcast %cst_293 : f32 to vector<1x32xf32>
    %719 = arith.addf %718, %717 : vector<1x32xf32>
    %720 = arith.divf %718, %719 : vector<1x32xf32>
    %721 = vector.extract_strided_slice %702 {offsets = [0, 64], sizes = [1, 32], strides = [1, 1]} : vector<1x96xf32> to vector<1x32xf32>
    %722 = vector.extract_strided_slice %704 {offsets = [0, 64], sizes = [1, 32], strides = [1, 1]} : vector<1x96xf32> to vector<1x32xf32>
    %c0_294 = arith.constant 0 : index
    %c0_295 = arith.constant 0 : index
    %723 = vector.load %arg10[%c0_294, %c0_295] : memref<1x32xf32, #tpu.memory_space<vmem>>, vector<1x32xf32>
    %724 = arith.addf %722, %723 : vector<1x32xf32>
    %725 = arith.mulf %712, %724 : vector<1x32xf32>
    %726 = arith.addf %721, %725 : vector<1x32xf32>
    %727 = math.tanh %726 : vector<1x32xf32>
    %cst_296 = arith.constant 1.000000e+00 : f32
    %728 = vector.broadcast %cst_296 : f32 to vector<1x32xf32>
    %729 = arith.subf %728, %720 : vector<1x32xf32>
    %730 = arith.mulf %729, %727 : vector<1x32xf32>
    %731 = arith.mulf %720, %649 : vector<1x32xf32>
    %732 = arith.addf %730, %731 : vector<1x32xf32>
    %cst_297 = arith.constant dense<0.000000e+00> : vector<1x8xf32>
    %733 = tpu.matmul %732, %354, %cst_297 {dimension_numbers = #tpu.dot_dimension_numbers<[1], [1], [0], [0], [0, 0, 1, 0], [], []>} : vector<1x32xf32>, vector<8x32xf32>, vector<1x8xf32> -> vector<1x8xf32>
    %cst_298 = arith.constant dense<0xFF800000> : vector<1xf32>
    %734 = vector.multi_reduction <maximumf>, %733, %cst_298 [1] : vector<1x8xf32> to vector<1xf32>
    %735 = vector.shape_cast %734 : vector<1xf32> to vector<1x1xf32>
    %736 = vector.broadcast %735 : vector<1x1xf32> to vector<1x8xf32>
    %737 = arith.subf %733, %736 : vector<1x8xf32>
    %738 = math.exp %737 : vector<1x8xf32>
    %cst_299 = arith.constant dense<0.000000e+00> : vector<1xf32>
    %739 = vector.multi_reduction <add>, %738, %cst_299 [1] : vector<1x8xf32> to vector<1xf32>
    %740 = vector.shape_cast %739 : vector<1xf32> to vector<1x1xf32>
    %741 = vector.broadcast %740 : vector<1x1xf32> to vector<1x8xf32>
    %742 = arith.divf %738, %741 : vector<1x8xf32>
    %cst_300 = arith.constant dense<0.000000e+00> : vector<1x32xf32>
    %743 = tpu.matmul %742, %354, %cst_300 {dimension_numbers = #tpu.dot_dimension_numbers<[1], [0], [0], [1], [0, 0, 1, 1], [], []>} : vector<1x8xf32>, vector<8x32xf32>, vector<1x32xf32> -> vector<1x32xf32>
    %744 = tpu.concatenate %732, %743 in 1 : vector<1x32xf32>, vector<1x32xf32> -> vector<1x64xf32>
    %c0_301 = arith.constant 0 : index
    %c0_302 = arith.constant 0 : index
    %745 = vector.load %arg11[%c0_301, %c0_302] : memref<64x32xf32, #tpu.memory_space<vmem>>, vector<64x32xf32>
    %cst_303 = arith.constant dense<0.000000e+00> : vector<1x32xf32>
    %746 = tpu.matmul %744, %745, %cst_303 {dimension_numbers = #tpu.dot_dimension_numbers<[1], [0], [0], [1], [0, 0, 1, 1], [], []>} : vector<1x64xf32>, vector<64x32xf32>, vector<1x32xf32> -> vector<1x32xf32>
    %c0_304 = arith.constant 0 : index
    %c0_305 = arith.constant 0 : index
    %747 = vector.load %arg12[%c0_304, %c0_305] : memref<1x32xf32, #tpu.memory_space<vmem>>, vector<1x32xf32>
    %748 = arith.addf %746, %747 : vector<1x32xf32>
    %749 = math.tanh %748 : vector<1x32xf32>
    %c0_306 = arith.constant 0 : index
    %c0_307 = arith.constant 0 : index
    %750 = vector.load %arg13[%c0_306, %c0_307] : memref<32x128xf32, #tpu.memory_space<vmem>>, vector<32x128xf32>
    %cst_308 = arith.constant dense<0.000000e+00> : vector<1x128xf32>
    %751 = tpu.matmul %749, %750, %cst_308 {dimension_numbers = #tpu.dot_dimension_numbers<[1], [0], [0], [1], [0, 0, 1, 1], [], []>} : vector<1x32xf32>, vector<32x128xf32>, vector<1x128xf32> -> vector<1x128xf32>
    %c0_309 = arith.constant 0 : index
    %c0_310 = arith.constant 0 : index
    %752 = vector.load %arg14[%c0_309, %c0_310] : memref<1x128xf32, #tpu.memory_space<vmem>>, vector<1x128xf32>
    %753 = arith.addf %751, %752 : vector<1x128xf32>
    %cst_311 = arith.constant dense<0xFF800000> : vector<1xf32>
    %754 = vector.multi_reduction <maximumf>, %753, %cst_311 [1] : vector<1x128xf32> to vector<1xf32>
    %755 = vector.shape_cast %754 : vector<1xf32> to vector<1x1xf32>
    %756 = vector.broadcast %755 : vector<1x1xf32> to vector<1x128xf32>
    %757 = arith.subf %753, %756 : vector<1x128xf32>
    %758 = math.exp %757 : vector<1x128xf32>
    %cst_312 = arith.constant dense<0.000000e+00> : vector<1xf32>
    %759 = vector.multi_reduction <add>, %758, %cst_312 [1] : vector<1x128xf32> to vector<1xf32>
    %760 = vector.shape_cast %759 : vector<1xf32> to vector<1x1xf32>
    %761 = tpu.reciprocal %760 {approx = true} : vector<1x1xf32> -> vector<1x1xf32>
    %762 = vector.broadcast %755 : vector<1x1xf32> to vector<1x128xf32>
    %763 = arith.cmpf oge, %753, %762 : vector<1x128xf32>
    %c128_i32_313 = arith.constant 128 : i32
    %764 = vector.broadcast %c128_i32_313 : i32 to vector<1x128xi32>
    %765 = arith.select %763, %356, %764 : vector<1x128xi1>, vector<1x128xi32>
    %cst_314 = arith.constant dense<2147483647> : vector<1xi32>
    %766 = vector.multi_reduction <minsi>, %765, %cst_314 [1] : vector<1x128xi32> to vector<1xi32>
    %767 = vector.shape_cast %766 : vector<1xi32> to vector<1x1xi32>
    %c4_i32_315 = arith.constant 4 : i32
    %768 = vector.broadcast %c4_i32_315 : i32 to vector<1x10xi32>
    %769 = arith.cmpi eq, %357, %768 : vector<1x10xi32>
    %770 = vector.shape_cast %767 : vector<1x1xi32> to vector<1x1xi32>
    %771 = vector.broadcast %770 : vector<1x1xi32> to vector<1x10xi32>
    %772 = arith.select %769, %771, %689 : vector<1x10xi1>, vector<1x10xi32>
    %773 = vector.shape_cast %761 : vector<1x1xf32> to vector<1x1xf32>
    %774 = vector.broadcast %773 : vector<1x1xf32> to vector<1x10xf32>
    %775 = arith.select %769, %774, %692 : vector<1x10xi1>, vector<1x10xf32>
    %776 = vector.broadcast %767 : vector<1x1xi32> to vector<1x64xi32>
    %777 = arith.cmpi eq, %355, %776 : vector<1x64xi32>
    %778 = arith.extui %777 : vector<1x64xi1> to vector<1x64xi32>
    %779 = arith.sitofp %778 : vector<1x64xi32> to vector<1x64xf32>
    %c0_316 = arith.constant 0 : index
    %c0_317 = arith.constant 0 : index
    %780 = vector.load %arg2[%c0_316, %c0_317] : memref<64x32xf32, #tpu.memory_space<vmem>>, vector<64x32xf32>
    %cst_318 = arith.constant dense<0.000000e+00> : vector<1x32xf32>
    %781 = tpu.matmul %779, %780, %cst_318 {dimension_numbers = #tpu.dot_dimension_numbers<[1], [0], [0], [1], [0, 0, 1, 1], [], []>} : vector<1x64xf32>, vector<64x32xf32>, vector<1x32xf32> -> vector<1x32xf32>
    %c0_319 = arith.constant 0 : index
    %c0_320 = arith.constant 0 : index
    %782 = vector.load %arg7[%c0_319, %c0_320] : memref<32x96xf32, #tpu.memory_space<vmem>>, vector<32x96xf32>
    %cst_321 = arith.constant dense<0.000000e+00> : vector<1x96xf32>
    %783 = tpu.matmul %781, %782, %cst_321 {dimension_numbers = #tpu.dot_dimension_numbers<[1], [0], [0], [1], [0, 0, 1, 1], [], []>} : vector<1x32xf32>, vector<32x96xf32>, vector<1x96xf32> -> vector<1x96xf32>
    %c0_322 = arith.constant 0 : index
    %c0_323 = arith.constant 0 : index
    %784 = vector.load %arg9[%c0_322, %c0_323] : memref<1x96xf32, #tpu.memory_space<vmem>>, vector<1x96xf32>
    %785 = arith.addf %783, %784 : vector<1x96xf32>
    %c0_324 = arith.constant 0 : index
    %c0_325 = arith.constant 0 : index
    %786 = vector.load %arg8[%c0_324, %c0_325] : memref<32x96xf32, #tpu.memory_space<vmem>>, vector<32x96xf32>
    %cst_326 = arith.constant dense<0.000000e+00> : vector<1x96xf32>
    %787 = tpu.matmul %732, %786, %cst_326 {dimension_numbers = #tpu.dot_dimension_numbers<[1], [0], [0], [1], [0, 0, 1, 1], [], []>} : vector<1x32xf32>, vector<32x96xf32>, vector<1x96xf32> -> vector<1x96xf32>
    %788 = vector.extract_strided_slice %785 {offsets = [0, 0], sizes = [1, 32], strides = [1, 1]} : vector<1x96xf32> to vector<1x32xf32>
    %789 = vector.extract_strided_slice %787 {offsets = [0, 0], sizes = [1, 32], strides = [1, 1]} : vector<1x96xf32> to vector<1x32xf32>
    %790 = arith.addf %788, %789 : vector<1x32xf32>
    %791 = arith.negf %790 : vector<1x32xf32>
    %792 = math.exp %791 : vector<1x32xf32>
    %cst_327 = arith.constant 1.000000e+00 : f32
    %793 = vector.broadcast %cst_327 : f32 to vector<1x32xf32>
    %794 = arith.addf %793, %792 : vector<1x32xf32>
    %795 = arith.divf %793, %794 : vector<1x32xf32>
    %796 = vector.extract_strided_slice %785 {offsets = [0, 32], sizes = [1, 32], strides = [1, 1]} : vector<1x96xf32> to vector<1x32xf32>
    %797 = vector.extract_strided_slice %787 {offsets = [0, 32], sizes = [1, 32], strides = [1, 1]} : vector<1x96xf32> to vector<1x32xf32>
    %798 = arith.addf %796, %797 : vector<1x32xf32>
    %799 = arith.negf %798 : vector<1x32xf32>
    %800 = math.exp %799 : vector<1x32xf32>
    %cst_328 = arith.constant 1.000000e+00 : f32
    %801 = vector.broadcast %cst_328 : f32 to vector<1x32xf32>
    %802 = arith.addf %801, %800 : vector<1x32xf32>
    %803 = arith.divf %801, %802 : vector<1x32xf32>
    %804 = vector.extract_strided_slice %785 {offsets = [0, 64], sizes = [1, 32], strides = [1, 1]} : vector<1x96xf32> to vector<1x32xf32>
    %805 = vector.extract_strided_slice %787 {offsets = [0, 64], sizes = [1, 32], strides = [1, 1]} : vector<1x96xf32> to vector<1x32xf32>
    %c0_329 = arith.constant 0 : index
    %c0_330 = arith.constant 0 : index
    %806 = vector.load %arg10[%c0_329, %c0_330] : memref<1x32xf32, #tpu.memory_space<vmem>>, vector<1x32xf32>
    %807 = arith.addf %805, %806 : vector<1x32xf32>
    %808 = arith.mulf %795, %807 : vector<1x32xf32>
    %809 = arith.addf %804, %808 : vector<1x32xf32>
    %810 = math.tanh %809 : vector<1x32xf32>
    %cst_331 = arith.constant 1.000000e+00 : f32
    %811 = vector.broadcast %cst_331 : f32 to vector<1x32xf32>
    %812 = arith.subf %811, %803 : vector<1x32xf32>
    %813 = arith.mulf %812, %810 : vector<1x32xf32>
    %814 = arith.mulf %803, %732 : vector<1x32xf32>
    %815 = arith.addf %813, %814 : vector<1x32xf32>
    %cst_332 = arith.constant dense<0.000000e+00> : vector<1x8xf32>
    %816 = tpu.matmul %815, %354, %cst_332 {dimension_numbers = #tpu.dot_dimension_numbers<[1], [1], [0], [0], [0, 0, 1, 0], [], []>} : vector<1x32xf32>, vector<8x32xf32>, vector<1x8xf32> -> vector<1x8xf32>
    %cst_333 = arith.constant dense<0xFF800000> : vector<1xf32>
    %817 = vector.multi_reduction <maximumf>, %816, %cst_333 [1] : vector<1x8xf32> to vector<1xf32>
    %818 = vector.shape_cast %817 : vector<1xf32> to vector<1x1xf32>
    %819 = vector.broadcast %818 : vector<1x1xf32> to vector<1x8xf32>
    %820 = arith.subf %816, %819 : vector<1x8xf32>
    %821 = math.exp %820 : vector<1x8xf32>
    %cst_334 = arith.constant dense<0.000000e+00> : vector<1xf32>
    %822 = vector.multi_reduction <add>, %821, %cst_334 [1] : vector<1x8xf32> to vector<1xf32>
    %823 = vector.shape_cast %822 : vector<1xf32> to vector<1x1xf32>
    %824 = vector.broadcast %823 : vector<1x1xf32> to vector<1x8xf32>
    %825 = arith.divf %821, %824 : vector<1x8xf32>
    %cst_335 = arith.constant dense<0.000000e+00> : vector<1x32xf32>
    %826 = tpu.matmul %825, %354, %cst_335 {dimension_numbers = #tpu.dot_dimension_numbers<[1], [0], [0], [1], [0, 0, 1, 1], [], []>} : vector<1x8xf32>, vector<8x32xf32>, vector<1x32xf32> -> vector<1x32xf32>
    %827 = tpu.concatenate %815, %826 in 1 : vector<1x32xf32>, vector<1x32xf32> -> vector<1x64xf32>
    %c0_336 = arith.constant 0 : index
    %c0_337 = arith.constant 0 : index
    %828 = vector.load %arg11[%c0_336, %c0_337] : memref<64x32xf32, #tpu.memory_space<vmem>>, vector<64x32xf32>
    %cst_338 = arith.constant dense<0.000000e+00> : vector<1x32xf32>
    %829 = tpu.matmul %827, %828, %cst_338 {dimension_numbers = #tpu.dot_dimension_numbers<[1], [0], [0], [1], [0, 0, 1, 1], [], []>} : vector<1x64xf32>, vector<64x32xf32>, vector<1x32xf32> -> vector<1x32xf32>
    %c0_339 = arith.constant 0 : index
    %c0_340 = arith.constant 0 : index
    %830 = vector.load %arg12[%c0_339, %c0_340] : memref<1x32xf32, #tpu.memory_space<vmem>>, vector<1x32xf32>
    %831 = arith.addf %829, %830 : vector<1x32xf32>
    %832 = math.tanh %831 : vector<1x32xf32>
    %c0_341 = arith.constant 0 : index
    %c0_342 = arith.constant 0 : index
    %833 = vector.load %arg13[%c0_341, %c0_342] : memref<32x128xf32, #tpu.memory_space<vmem>>, vector<32x128xf32>
    %cst_343 = arith.constant dense<0.000000e+00> : vector<1x128xf32>
    %834 = tpu.matmul %832, %833, %cst_343 {dimension_numbers = #tpu.dot_dimension_numbers<[1], [0], [0], [1], [0, 0, 1, 1], [], []>} : vector<1x32xf32>, vector<32x128xf32>, vector<1x128xf32> -> vector<1x128xf32>
    %c0_344 = arith.constant 0 : index
    %c0_345 = arith.constant 0 : index
    %835 = vector.load %arg14[%c0_344, %c0_345] : memref<1x128xf32, #tpu.memory_space<vmem>>, vector<1x128xf32>
    %836 = arith.addf %834, %835 : vector<1x128xf32>
    %cst_346 = arith.constant dense<0xFF800000> : vector<1xf32>
    %837 = vector.multi_reduction <maximumf>, %836, %cst_346 [1] : vector<1x128xf32> to vector<1xf32>
    %838 = vector.shape_cast %837 : vector<1xf32> to vector<1x1xf32>
    %839 = vector.broadcast %838 : vector<1x1xf32> to vector<1x128xf32>
    %840 = arith.subf %836, %839 : vector<1x128xf32>
    %841 = math.exp %840 : vector<1x128xf32>
    %cst_347 = arith.constant dense<0.000000e+00> : vector<1xf32>
    %842 = vector.multi_reduction <add>, %841, %cst_347 [1] : vector<1x128xf32> to vector<1xf32>
    %843 = vector.shape_cast %842 : vector<1xf32> to vector<1x1xf32>
    %844 = tpu.reciprocal %843 {approx = true} : vector<1x1xf32> -> vector<1x1xf32>
    %845 = vector.broadcast %838 : vector<1x1xf32> to vector<1x128xf32>
    %846 = arith.cmpf oge, %836, %845 : vector<1x128xf32>
    %c128_i32_348 = arith.constant 128 : i32
    %847 = vector.broadcast %c128_i32_348 : i32 to vector<1x128xi32>
    %848 = arith.select %846, %356, %847 : vector<1x128xi1>, vector<1x128xi32>
    %cst_349 = arith.constant dense<2147483647> : vector<1xi32>
    %849 = vector.multi_reduction <minsi>, %848, %cst_349 [1] : vector<1x128xi32> to vector<1xi32>
    %850 = vector.shape_cast %849 : vector<1xi32> to vector<1x1xi32>
    %c5_i32_350 = arith.constant 5 : i32
    %851 = vector.broadcast %c5_i32_350 : i32 to vector<1x10xi32>
    %852 = arith.cmpi eq, %357, %851 : vector<1x10xi32>
    %853 = vector.shape_cast %850 : vector<1x1xi32> to vector<1x1xi32>
    %854 = vector.broadcast %853 : vector<1x1xi32> to vector<1x10xi32>
    %855 = arith.select %852, %854, %772 : vector<1x10xi1>, vector<1x10xi32>
    %856 = vector.shape_cast %844 : vector<1x1xf32> to vector<1x1xf32>
    %857 = vector.broadcast %856 : vector<1x1xf32> to vector<1x10xf32>
    %858 = arith.select %852, %857, %775 : vector<1x10xi1>, vector<1x10xf32>
    %859 = vector.broadcast %850 : vector<1x1xi32> to vector<1x64xi32>
    %860 = arith.cmpi eq, %355, %859 : vector<1x64xi32>
    %861 = arith.extui %860 : vector<1x64xi1> to vector<1x64xi32>
    %862 = arith.sitofp %861 : vector<1x64xi32> to vector<1x64xf32>
    %c0_351 = arith.constant 0 : index
    %c0_352 = arith.constant 0 : index
    %863 = vector.load %arg2[%c0_351, %c0_352] : memref<64x32xf32, #tpu.memory_space<vmem>>, vector<64x32xf32>
    %cst_353 = arith.constant dense<0.000000e+00> : vector<1x32xf32>
    %864 = tpu.matmul %862, %863, %cst_353 {dimension_numbers = #tpu.dot_dimension_numbers<[1], [0], [0], [1], [0, 0, 1, 1], [], []>} : vector<1x64xf32>, vector<64x32xf32>, vector<1x32xf32> -> vector<1x32xf32>
    %c0_354 = arith.constant 0 : index
    %c0_355 = arith.constant 0 : index
    %865 = vector.load %arg7[%c0_354, %c0_355] : memref<32x96xf32, #tpu.memory_space<vmem>>, vector<32x96xf32>
    %cst_356 = arith.constant dense<0.000000e+00> : vector<1x96xf32>
    %866 = tpu.matmul %864, %865, %cst_356 {dimension_numbers = #tpu.dot_dimension_numbers<[1], [0], [0], [1], [0, 0, 1, 1], [], []>} : vector<1x32xf32>, vector<32x96xf32>, vector<1x96xf32> -> vector<1x96xf32>
    %c0_357 = arith.constant 0 : index
    %c0_358 = arith.constant 0 : index
    %867 = vector.load %arg9[%c0_357, %c0_358] : memref<1x96xf32, #tpu.memory_space<vmem>>, vector<1x96xf32>
    %868 = arith.addf %866, %867 : vector<1x96xf32>
    %c0_359 = arith.constant 0 : index
    %c0_360 = arith.constant 0 : index
    %869 = vector.load %arg8[%c0_359, %c0_360] : memref<32x96xf32, #tpu.memory_space<vmem>>, vector<32x96xf32>
    %cst_361 = arith.constant dense<0.000000e+00> : vector<1x96xf32>
    %870 = tpu.matmul %815, %869, %cst_361 {dimension_numbers = #tpu.dot_dimension_numbers<[1], [0], [0], [1], [0, 0, 1, 1], [], []>} : vector<1x32xf32>, vector<32x96xf32>, vector<1x96xf32> -> vector<1x96xf32>
    %871 = vector.extract_strided_slice %868 {offsets = [0, 0], sizes = [1, 32], strides = [1, 1]} : vector<1x96xf32> to vector<1x32xf32>
    %872 = vector.extract_strided_slice %870 {offsets = [0, 0], sizes = [1, 32], strides = [1, 1]} : vector<1x96xf32> to vector<1x32xf32>
    %873 = arith.addf %871, %872 : vector<1x32xf32>
    %874 = arith.negf %873 : vector<1x32xf32>
    %875 = math.exp %874 : vector<1x32xf32>
    %cst_362 = arith.constant 1.000000e+00 : f32
    %876 = vector.broadcast %cst_362 : f32 to vector<1x32xf32>
    %877 = arith.addf %876, %875 : vector<1x32xf32>
    %878 = arith.divf %876, %877 : vector<1x32xf32>
    %879 = vector.extract_strided_slice %868 {offsets = [0, 32], sizes = [1, 32], strides = [1, 1]} : vector<1x96xf32> to vector<1x32xf32>
    %880 = vector.extract_strided_slice %870 {offsets = [0, 32], sizes = [1, 32], strides = [1, 1]} : vector<1x96xf32> to vector<1x32xf32>
    %881 = arith.addf %879, %880 : vector<1x32xf32>
    %882 = arith.negf %881 : vector<1x32xf32>
    %883 = math.exp %882 : vector<1x32xf32>
    %cst_363 = arith.constant 1.000000e+00 : f32
    %884 = vector.broadcast %cst_363 : f32 to vector<1x32xf32>
    %885 = arith.addf %884, %883 : vector<1x32xf32>
    %886 = arith.divf %884, %885 : vector<1x32xf32>
    %887 = vector.extract_strided_slice %868 {offsets = [0, 64], sizes = [1, 32], strides = [1, 1]} : vector<1x96xf32> to vector<1x32xf32>
    %888 = vector.extract_strided_slice %870 {offsets = [0, 64], sizes = [1, 32], strides = [1, 1]} : vector<1x96xf32> to vector<1x32xf32>
    %c0_364 = arith.constant 0 : index
    %c0_365 = arith.constant 0 : index
    %889 = vector.load %arg10[%c0_364, %c0_365] : memref<1x32xf32, #tpu.memory_space<vmem>>, vector<1x32xf32>
    %890 = arith.addf %888, %889 : vector<1x32xf32>
    %891 = arith.mulf %878, %890 : vector<1x32xf32>
    %892 = arith.addf %887, %891 : vector<1x32xf32>
    %893 = math.tanh %892 : vector<1x32xf32>
    %cst_366 = arith.constant 1.000000e+00 : f32
    %894 = vector.broadcast %cst_366 : f32 to vector<1x32xf32>
    %895 = arith.subf %894, %886 : vector<1x32xf32>
    %896 = arith.mulf %895, %893 : vector<1x32xf32>
    %897 = arith.mulf %886, %815 : vector<1x32xf32>
    %898 = arith.addf %896, %897 : vector<1x32xf32>
    %cst_367 = arith.constant dense<0.000000e+00> : vector<1x8xf32>
    %899 = tpu.matmul %898, %354, %cst_367 {dimension_numbers = #tpu.dot_dimension_numbers<[1], [1], [0], [0], [0, 0, 1, 0], [], []>} : vector<1x32xf32>, vector<8x32xf32>, vector<1x8xf32> -> vector<1x8xf32>
    %cst_368 = arith.constant dense<0xFF800000> : vector<1xf32>
    %900 = vector.multi_reduction <maximumf>, %899, %cst_368 [1] : vector<1x8xf32> to vector<1xf32>
    %901 = vector.shape_cast %900 : vector<1xf32> to vector<1x1xf32>
    %902 = vector.broadcast %901 : vector<1x1xf32> to vector<1x8xf32>
    %903 = arith.subf %899, %902 : vector<1x8xf32>
    %904 = math.exp %903 : vector<1x8xf32>
    %cst_369 = arith.constant dense<0.000000e+00> : vector<1xf32>
    %905 = vector.multi_reduction <add>, %904, %cst_369 [1] : vector<1x8xf32> to vector<1xf32>
    %906 = vector.shape_cast %905 : vector<1xf32> to vector<1x1xf32>
    %907 = vector.broadcast %906 : vector<1x1xf32> to vector<1x8xf32>
    %908 = arith.divf %904, %907 : vector<1x8xf32>
    %cst_370 = arith.constant dense<0.000000e+00> : vector<1x32xf32>
    %909 = tpu.matmul %908, %354, %cst_370 {dimension_numbers = #tpu.dot_dimension_numbers<[1], [0], [0], [1], [0, 0, 1, 1], [], []>} : vector<1x8xf32>, vector<8x32xf32>, vector<1x32xf32> -> vector<1x32xf32>
    %910 = tpu.concatenate %898, %909 in 1 : vector<1x32xf32>, vector<1x32xf32> -> vector<1x64xf32>
    %c0_371 = arith.constant 0 : index
    %c0_372 = arith.constant 0 : index
    %911 = vector.load %arg11[%c0_371, %c0_372] : memref<64x32xf32, #tpu.memory_space<vmem>>, vector<64x32xf32>
    %cst_373 = arith.constant dense<0.000000e+00> : vector<1x32xf32>
    %912 = tpu.matmul %910, %911, %cst_373 {dimension_numbers = #tpu.dot_dimension_numbers<[1], [0], [0], [1], [0, 0, 1, 1], [], []>} : vector<1x64xf32>, vector<64x32xf32>, vector<1x32xf32> -> vector<1x32xf32>
    %c0_374 = arith.constant 0 : index
    %c0_375 = arith.constant 0 : index
    %913 = vector.load %arg12[%c0_374, %c0_375] : memref<1x32xf32, #tpu.memory_space<vmem>>, vector<1x32xf32>
    %914 = arith.addf %912, %913 : vector<1x32xf32>
    %915 = math.tanh %914 : vector<1x32xf32>
    %c0_376 = arith.constant 0 : index
    %c0_377 = arith.constant 0 : index
    %916 = vector.load %arg13[%c0_376, %c0_377] : memref<32x128xf32, #tpu.memory_space<vmem>>, vector<32x128xf32>
    %cst_378 = arith.constant dense<0.000000e+00> : vector<1x128xf32>
    %917 = tpu.matmul %915, %916, %cst_378 {dimension_numbers = #tpu.dot_dimension_numbers<[1], [0], [0], [1], [0, 0, 1, 1], [], []>} : vector<1x32xf32>, vector<32x128xf32>, vector<1x128xf32> -> vector<1x128xf32>
    %c0_379 = arith.constant 0 : index
    %c0_380 = arith.constant 0 : index
    %918 = vector.load %arg14[%c0_379, %c0_380] : memref<1x128xf32, #tpu.memory_space<vmem>>, vector<1x128xf32>
    %919 = arith.addf %917, %918 : vector<1x128xf32>
    %cst_381 = arith.constant dense<0xFF800000> : vector<1xf32>
    %920 = vector.multi_reduction <maximumf>, %919, %cst_381 [1] : vector<1x128xf32> to vector<1xf32>
    %921 = vector.shape_cast %920 : vector<1xf32> to vector<1x1xf32>
    %922 = vector.broadcast %921 : vector<1x1xf32> to vector<1x128xf32>
    %923 = arith.subf %919, %922 : vector<1x128xf32>
    %924 = math.exp %923 : vector<1x128xf32>
    %cst_382 = arith.constant dense<0.000000e+00> : vector<1xf32>
    %925 = vector.multi_reduction <add>, %924, %cst_382 [1] : vector<1x128xf32> to vector<1xf32>
    %926 = vector.shape_cast %925 : vector<1xf32> to vector<1x1xf32>
    %927 = tpu.reciprocal %926 {approx = true} : vector<1x1xf32> -> vector<1x1xf32>
    %928 = vector.broadcast %921 : vector<1x1xf32> to vector<1x128xf32>
    %929 = arith.cmpf oge, %919, %928 : vector<1x128xf32>
    %c128_i32_383 = arith.constant 128 : i32
    %930 = vector.broadcast %c128_i32_383 : i32 to vector<1x128xi32>
    %931 = arith.select %929, %356, %930 : vector<1x128xi1>, vector<1x128xi32>
    %cst_384 = arith.constant dense<2147483647> : vector<1xi32>
    %932 = vector.multi_reduction <minsi>, %931, %cst_384 [1] : vector<1x128xi32> to vector<1xi32>
    %933 = vector.shape_cast %932 : vector<1xi32> to vector<1x1xi32>
    %c6_i32_385 = arith.constant 6 : i32
    %934 = vector.broadcast %c6_i32_385 : i32 to vector<1x10xi32>
    %935 = arith.cmpi eq, %357, %934 : vector<1x10xi32>
    %936 = vector.shape_cast %933 : vector<1x1xi32> to vector<1x1xi32>
    %937 = vector.broadcast %936 : vector<1x1xi32> to vector<1x10xi32>
    %938 = arith.select %935, %937, %855 : vector<1x10xi1>, vector<1x10xi32>
    %939 = vector.shape_cast %927 : vector<1x1xf32> to vector<1x1xf32>
    %940 = vector.broadcast %939 : vector<1x1xf32> to vector<1x10xf32>
    %941 = arith.select %935, %940, %858 : vector<1x10xi1>, vector<1x10xf32>
    %942 = vector.broadcast %933 : vector<1x1xi32> to vector<1x64xi32>
    %943 = arith.cmpi eq, %355, %942 : vector<1x64xi32>
    %944 = arith.extui %943 : vector<1x64xi1> to vector<1x64xi32>
    %945 = arith.sitofp %944 : vector<1x64xi32> to vector<1x64xf32>
    %c0_386 = arith.constant 0 : index
    %c0_387 = arith.constant 0 : index
    %946 = vector.load %arg2[%c0_386, %c0_387] : memref<64x32xf32, #tpu.memory_space<vmem>>, vector<64x32xf32>
    %cst_388 = arith.constant dense<0.000000e+00> : vector<1x32xf32>
    %947 = tpu.matmul %945, %946, %cst_388 {dimension_numbers = #tpu.dot_dimension_numbers<[1], [0], [0], [1], [0, 0, 1, 1], [], []>} : vector<1x64xf32>, vector<64x32xf32>, vector<1x32xf32> -> vector<1x32xf32>
    %c0_389 = arith.constant 0 : index
    %c0_390 = arith.constant 0 : index
    %948 = vector.load %arg7[%c0_389, %c0_390] : memref<32x96xf32, #tpu.memory_space<vmem>>, vector<32x96xf32>
    %cst_391 = arith.constant dense<0.000000e+00> : vector<1x96xf32>
    %949 = tpu.matmul %947, %948, %cst_391 {dimension_numbers = #tpu.dot_dimension_numbers<[1], [0], [0], [1], [0, 0, 1, 1], [], []>} : vector<1x32xf32>, vector<32x96xf32>, vector<1x96xf32> -> vector<1x96xf32>
    %c0_392 = arith.constant 0 : index
    %c0_393 = arith.constant 0 : index
    %950 = vector.load %arg9[%c0_392, %c0_393] : memref<1x96xf32, #tpu.memory_space<vmem>>, vector<1x96xf32>
    %951 = arith.addf %949, %950 : vector<1x96xf32>
    %c0_394 = arith.constant 0 : index
    %c0_395 = arith.constant 0 : index
    %952 = vector.load %arg8[%c0_394, %c0_395] : memref<32x96xf32, #tpu.memory_space<vmem>>, vector<32x96xf32>
    %cst_396 = arith.constant dense<0.000000e+00> : vector<1x96xf32>
    %953 = tpu.matmul %898, %952, %cst_396 {dimension_numbers = #tpu.dot_dimension_numbers<[1], [0], [0], [1], [0, 0, 1, 1], [], []>} : vector<1x32xf32>, vector<32x96xf32>, vector<1x96xf32> -> vector<1x96xf32>
    %954 = vector.extract_strided_slice %951 {offsets = [0, 0], sizes = [1, 32], strides = [1, 1]} : vector<1x96xf32> to vector<1x32xf32>
    %955 = vector.extract_strided_slice %953 {offsets = [0, 0], sizes = [1, 32], strides = [1, 1]} : vector<1x96xf32> to vector<1x32xf32>
    %956 = arith.addf %954, %955 : vector<1x32xf32>
    %957 = arith.negf %956 : vector<1x32xf32>
    %958 = math.exp %957 : vector<1x32xf32>
    %cst_397 = arith.constant 1.000000e+00 : f32
    %959 = vector.broadcast %cst_397 : f32 to vector<1x32xf32>
    %960 = arith.addf %959, %958 : vector<1x32xf32>
    %961 = arith.divf %959, %960 : vector<1x32xf32>
    %962 = vector.extract_strided_slice %951 {offsets = [0, 32], sizes = [1, 32], strides = [1, 1]} : vector<1x96xf32> to vector<1x32xf32>
    %963 = vector.extract_strided_slice %953 {offsets = [0, 32], sizes = [1, 32], strides = [1, 1]} : vector<1x96xf32> to vector<1x32xf32>
    %964 = arith.addf %962, %963 : vector<1x32xf32>
    %965 = arith.negf %964 : vector<1x32xf32>
    %966 = math.exp %965 : vector<1x32xf32>
    %cst_398 = arith.constant 1.000000e+00 : f32
    %967 = vector.broadcast %cst_398 : f32 to vector<1x32xf32>
    %968 = arith.addf %967, %966 : vector<1x32xf32>
    %969 = arith.divf %967, %968 : vector<1x32xf32>
    %970 = vector.extract_strided_slice %951 {offsets = [0, 64], sizes = [1, 32], strides = [1, 1]} : vector<1x96xf32> to vector<1x32xf32>
    %971 = vector.extract_strided_slice %953 {offsets = [0, 64], sizes = [1, 32], strides = [1, 1]} : vector<1x96xf32> to vector<1x32xf32>
    %c0_399 = arith.constant 0 : index
    %c0_400 = arith.constant 0 : index
    %972 = vector.load %arg10[%c0_399, %c0_400] : memref<1x32xf32, #tpu.memory_space<vmem>>, vector<1x32xf32>
    %973 = arith.addf %971, %972 : vector<1x32xf32>
    %974 = arith.mulf %961, %973 : vector<1x32xf32>
    %975 = arith.addf %970, %974 : vector<1x32xf32>
    %976 = math.tanh %975 : vector<1x32xf32>
    %cst_401 = arith.constant 1.000000e+00 : f32
    %977 = vector.broadcast %cst_401 : f32 to vector<1x32xf32>
    %978 = arith.subf %977, %969 : vector<1x32xf32>
    %979 = arith.mulf %978, %976 : vector<1x32xf32>
    %980 = arith.mulf %969, %898 : vector<1x32xf32>
    %981 = arith.addf %979, %980 : vector<1x32xf32>
    %cst_402 = arith.constant dense<0.000000e+00> : vector<1x8xf32>
    %982 = tpu.matmul %981, %354, %cst_402 {dimension_numbers = #tpu.dot_dimension_numbers<[1], [1], [0], [0], [0, 0, 1, 0], [], []>} : vector<1x32xf32>, vector<8x32xf32>, vector<1x8xf32> -> vector<1x8xf32>
    %cst_403 = arith.constant dense<0xFF800000> : vector<1xf32>
    %983 = vector.multi_reduction <maximumf>, %982, %cst_403 [1] : vector<1x8xf32> to vector<1xf32>
    %984 = vector.shape_cast %983 : vector<1xf32> to vector<1x1xf32>
    %985 = vector.broadcast %984 : vector<1x1xf32> to vector<1x8xf32>
    %986 = arith.subf %982, %985 : vector<1x8xf32>
    %987 = math.exp %986 : vector<1x8xf32>
    %cst_404 = arith.constant dense<0.000000e+00> : vector<1xf32>
    %988 = vector.multi_reduction <add>, %987, %cst_404 [1] : vector<1x8xf32> to vector<1xf32>
    %989 = vector.shape_cast %988 : vector<1xf32> to vector<1x1xf32>
    %990 = vector.broadcast %989 : vector<1x1xf32> to vector<1x8xf32>
    %991 = arith.divf %987, %990 : vector<1x8xf32>
    %cst_405 = arith.constant dense<0.000000e+00> : vector<1x32xf32>
    %992 = tpu.matmul %991, %354, %cst_405 {dimension_numbers = #tpu.dot_dimension_numbers<[1], [0], [0], [1], [0, 0, 1, 1], [], []>} : vector<1x8xf32>, vector<8x32xf32>, vector<1x32xf32> -> vector<1x32xf32>
    %993 = tpu.concatenate %981, %992 in 1 : vector<1x32xf32>, vector<1x32xf32> -> vector<1x64xf32>
    %c0_406 = arith.constant 0 : index
    %c0_407 = arith.constant 0 : index
    %994 = vector.load %arg11[%c0_406, %c0_407] : memref<64x32xf32, #tpu.memory_space<vmem>>, vector<64x32xf32>
    %cst_408 = arith.constant dense<0.000000e+00> : vector<1x32xf32>
    %995 = tpu.matmul %993, %994, %cst_408 {dimension_numbers = #tpu.dot_dimension_numbers<[1], [0], [0], [1], [0, 0, 1, 1], [], []>} : vector<1x64xf32>, vector<64x32xf32>, vector<1x32xf32> -> vector<1x32xf32>
    %c0_409 = arith.constant 0 : index
    %c0_410 = arith.constant 0 : index
    %996 = vector.load %arg12[%c0_409, %c0_410] : memref<1x32xf32, #tpu.memory_space<vmem>>, vector<1x32xf32>
    %997 = arith.addf %995, %996 : vector<1x32xf32>
    %998 = math.tanh %997 : vector<1x32xf32>
    %c0_411 = arith.constant 0 : index
    %c0_412 = arith.constant 0 : index
    %999 = vector.load %arg13[%c0_411, %c0_412] : memref<32x128xf32, #tpu.memory_space<vmem>>, vector<32x128xf32>
    %cst_413 = arith.constant dense<0.000000e+00> : vector<1x128xf32>
    %1000 = tpu.matmul %998, %999, %cst_413 {dimension_numbers = #tpu.dot_dimension_numbers<[1], [0], [0], [1], [0, 0, 1, 1], [], []>} : vector<1x32xf32>, vector<32x128xf32>, vector<1x128xf32> -> vector<1x128xf32>
    %c0_414 = arith.constant 0 : index
    %c0_415 = arith.constant 0 : index
    %1001 = vector.load %arg14[%c0_414, %c0_415] : memref<1x128xf32, #tpu.memory_space<vmem>>, vector<1x128xf32>
    %1002 = arith.addf %1000, %1001 : vector<1x128xf32>
    %cst_416 = arith.constant dense<0xFF800000> : vector<1xf32>
    %1003 = vector.multi_reduction <maximumf>, %1002, %cst_416 [1] : vector<1x128xf32> to vector<1xf32>
    %1004 = vector.shape_cast %1003 : vector<1xf32> to vector<1x1xf32>
    %1005 = vector.broadcast %1004 : vector<1x1xf32> to vector<1x128xf32>
    %1006 = arith.subf %1002, %1005 : vector<1x128xf32>
    %1007 = math.exp %1006 : vector<1x128xf32>
    %cst_417 = arith.constant dense<0.000000e+00> : vector<1xf32>
    %1008 = vector.multi_reduction <add>, %1007, %cst_417 [1] : vector<1x128xf32> to vector<1xf32>
    %1009 = vector.shape_cast %1008 : vector<1xf32> to vector<1x1xf32>
    %1010 = tpu.reciprocal %1009 {approx = true} : vector<1x1xf32> -> vector<1x1xf32>
    %1011 = vector.broadcast %1004 : vector<1x1xf32> to vector<1x128xf32>
    %1012 = arith.cmpf oge, %1002, %1011 : vector<1x128xf32>
    %c128_i32_418 = arith.constant 128 : i32
    %1013 = vector.broadcast %c128_i32_418 : i32 to vector<1x128xi32>
    %1014 = arith.select %1012, %356, %1013 : vector<1x128xi1>, vector<1x128xi32>
    %cst_419 = arith.constant dense<2147483647> : vector<1xi32>
    %1015 = vector.multi_reduction <minsi>, %1014, %cst_419 [1] : vector<1x128xi32> to vector<1xi32>
    %1016 = vector.shape_cast %1015 : vector<1xi32> to vector<1x1xi32>
    %c7_i32_420 = arith.constant 7 : i32
    %1017 = vector.broadcast %c7_i32_420 : i32 to vector<1x10xi32>
    %1018 = arith.cmpi eq, %357, %1017 : vector<1x10xi32>
    %1019 = vector.shape_cast %1016 : vector<1x1xi32> to vector<1x1xi32>
    %1020 = vector.broadcast %1019 : vector<1x1xi32> to vector<1x10xi32>
    %1021 = arith.select %1018, %1020, %938 : vector<1x10xi1>, vector<1x10xi32>
    %1022 = vector.shape_cast %1010 : vector<1x1xf32> to vector<1x1xf32>
    %1023 = vector.broadcast %1022 : vector<1x1xf32> to vector<1x10xf32>
    %1024 = arith.select %1018, %1023, %941 : vector<1x10xi1>, vector<1x10xf32>
    %1025 = vector.broadcast %1016 : vector<1x1xi32> to vector<1x64xi32>
    %1026 = arith.cmpi eq, %355, %1025 : vector<1x64xi32>
    %1027 = arith.extui %1026 : vector<1x64xi1> to vector<1x64xi32>
    %1028 = arith.sitofp %1027 : vector<1x64xi32> to vector<1x64xf32>
    %c0_421 = arith.constant 0 : index
    %c0_422 = arith.constant 0 : index
    %1029 = vector.load %arg2[%c0_421, %c0_422] : memref<64x32xf32, #tpu.memory_space<vmem>>, vector<64x32xf32>
    %cst_423 = arith.constant dense<0.000000e+00> : vector<1x32xf32>
    %1030 = tpu.matmul %1028, %1029, %cst_423 {dimension_numbers = #tpu.dot_dimension_numbers<[1], [0], [0], [1], [0, 0, 1, 1], [], []>} : vector<1x64xf32>, vector<64x32xf32>, vector<1x32xf32> -> vector<1x32xf32>
    %c0_424 = arith.constant 0 : index
    %c0_425 = arith.constant 0 : index
    %1031 = vector.load %arg7[%c0_424, %c0_425] : memref<32x96xf32, #tpu.memory_space<vmem>>, vector<32x96xf32>
    %cst_426 = arith.constant dense<0.000000e+00> : vector<1x96xf32>
    %1032 = tpu.matmul %1030, %1031, %cst_426 {dimension_numbers = #tpu.dot_dimension_numbers<[1], [0], [0], [1], [0, 0, 1, 1], [], []>} : vector<1x32xf32>, vector<32x96xf32>, vector<1x96xf32> -> vector<1x96xf32>
    %c0_427 = arith.constant 0 : index
    %c0_428 = arith.constant 0 : index
    %1033 = vector.load %arg9[%c0_427, %c0_428] : memref<1x96xf32, #tpu.memory_space<vmem>>, vector<1x96xf32>
    %1034 = arith.addf %1032, %1033 : vector<1x96xf32>
    %c0_429 = arith.constant 0 : index
    %c0_430 = arith.constant 0 : index
    %1035 = vector.load %arg8[%c0_429, %c0_430] : memref<32x96xf32, #tpu.memory_space<vmem>>, vector<32x96xf32>
    %cst_431 = arith.constant dense<0.000000e+00> : vector<1x96xf32>
    %1036 = tpu.matmul %981, %1035, %cst_431 {dimension_numbers = #tpu.dot_dimension_numbers<[1], [0], [0], [1], [0, 0, 1, 1], [], []>} : vector<1x32xf32>, vector<32x96xf32>, vector<1x96xf32> -> vector<1x96xf32>
    %1037 = vector.extract_strided_slice %1034 {offsets = [0, 0], sizes = [1, 32], strides = [1, 1]} : vector<1x96xf32> to vector<1x32xf32>
    %1038 = vector.extract_strided_slice %1036 {offsets = [0, 0], sizes = [1, 32], strides = [1, 1]} : vector<1x96xf32> to vector<1x32xf32>
    %1039 = arith.addf %1037, %1038 : vector<1x32xf32>
    %1040 = arith.negf %1039 : vector<1x32xf32>
    %1041 = math.exp %1040 : vector<1x32xf32>
    %cst_432 = arith.constant 1.000000e+00 : f32
    %1042 = vector.broadcast %cst_432 : f32 to vector<1x32xf32>
    %1043 = arith.addf %1042, %1041 : vector<1x32xf32>
    %1044 = arith.divf %1042, %1043 : vector<1x32xf32>
    %1045 = vector.extract_strided_slice %1034 {offsets = [0, 32], sizes = [1, 32], strides = [1, 1]} : vector<1x96xf32> to vector<1x32xf32>
    %1046 = vector.extract_strided_slice %1036 {offsets = [0, 32], sizes = [1, 32], strides = [1, 1]} : vector<1x96xf32> to vector<1x32xf32>
    %1047 = arith.addf %1045, %1046 : vector<1x32xf32>
    %1048 = arith.negf %1047 : vector<1x32xf32>
    %1049 = math.exp %1048 : vector<1x32xf32>
    %cst_433 = arith.constant 1.000000e+00 : f32
    %1050 = vector.broadcast %cst_433 : f32 to vector<1x32xf32>
    %1051 = arith.addf %1050, %1049 : vector<1x32xf32>
    %1052 = arith.divf %1050, %1051 : vector<1x32xf32>
    %1053 = vector.extract_strided_slice %1034 {offsets = [0, 64], sizes = [1, 32], strides = [1, 1]} : vector<1x96xf32> to vector<1x32xf32>
    %1054 = vector.extract_strided_slice %1036 {offsets = [0, 64], sizes = [1, 32], strides = [1, 1]} : vector<1x96xf32> to vector<1x32xf32>
    %c0_434 = arith.constant 0 : index
    %c0_435 = arith.constant 0 : index
    %1055 = vector.load %arg10[%c0_434, %c0_435] : memref<1x32xf32, #tpu.memory_space<vmem>>, vector<1x32xf32>
    %1056 = arith.addf %1054, %1055 : vector<1x32xf32>
    %1057 = arith.mulf %1044, %1056 : vector<1x32xf32>
    %1058 = arith.addf %1053, %1057 : vector<1x32xf32>
    %1059 = math.tanh %1058 : vector<1x32xf32>
    %cst_436 = arith.constant 1.000000e+00 : f32
    %1060 = vector.broadcast %cst_436 : f32 to vector<1x32xf32>
    %1061 = arith.subf %1060, %1052 : vector<1x32xf32>
    %1062 = arith.mulf %1061, %1059 : vector<1x32xf32>
    %1063 = arith.mulf %1052, %981 : vector<1x32xf32>
    %1064 = arith.addf %1062, %1063 : vector<1x32xf32>
    %cst_437 = arith.constant dense<0.000000e+00> : vector<1x8xf32>
    %1065 = tpu.matmul %1064, %354, %cst_437 {dimension_numbers = #tpu.dot_dimension_numbers<[1], [1], [0], [0], [0, 0, 1, 0], [], []>} : vector<1x32xf32>, vector<8x32xf32>, vector<1x8xf32> -> vector<1x8xf32>
    %cst_438 = arith.constant dense<0xFF800000> : vector<1xf32>
    %1066 = vector.multi_reduction <maximumf>, %1065, %cst_438 [1] : vector<1x8xf32> to vector<1xf32>
    %1067 = vector.shape_cast %1066 : vector<1xf32> to vector<1x1xf32>
    %1068 = vector.broadcast %1067 : vector<1x1xf32> to vector<1x8xf32>
    %1069 = arith.subf %1065, %1068 : vector<1x8xf32>
    %1070 = math.exp %1069 : vector<1x8xf32>
    %cst_439 = arith.constant dense<0.000000e+00> : vector<1xf32>
    %1071 = vector.multi_reduction <add>, %1070, %cst_439 [1] : vector<1x8xf32> to vector<1xf32>
    %1072 = vector.shape_cast %1071 : vector<1xf32> to vector<1x1xf32>
    %1073 = vector.broadcast %1072 : vector<1x1xf32> to vector<1x8xf32>
    %1074 = arith.divf %1070, %1073 : vector<1x8xf32>
    %cst_440 = arith.constant dense<0.000000e+00> : vector<1x32xf32>
    %1075 = tpu.matmul %1074, %354, %cst_440 {dimension_numbers = #tpu.dot_dimension_numbers<[1], [0], [0], [1], [0, 0, 1, 1], [], []>} : vector<1x8xf32>, vector<8x32xf32>, vector<1x32xf32> -> vector<1x32xf32>
    %1076 = tpu.concatenate %1064, %1075 in 1 : vector<1x32xf32>, vector<1x32xf32> -> vector<1x64xf32>
    %c0_441 = arith.constant 0 : index
    %c0_442 = arith.constant 0 : index
    %1077 = vector.load %arg11[%c0_441, %c0_442] : memref<64x32xf32, #tpu.memory_space<vmem>>, vector<64x32xf32>
    %cst_443 = arith.constant dense<0.000000e+00> : vector<1x32xf32>
    %1078 = tpu.matmul %1076, %1077, %cst_443 {dimension_numbers = #tpu.dot_dimension_numbers<[1], [0], [0], [1], [0, 0, 1, 1], [], []>} : vector<1x64xf32>, vector<64x32xf32>, vector<1x32xf32> -> vector<1x32xf32>
    %c0_444 = arith.constant 0 : index
    %c0_445 = arith.constant 0 : index
    %1079 = vector.load %arg12[%c0_444, %c0_445] : memref<1x32xf32, #tpu.memory_space<vmem>>, vector<1x32xf32>
    %1080 = arith.addf %1078, %1079 : vector<1x32xf32>
    %1081 = math.tanh %1080 : vector<1x32xf32>
    %c0_446 = arith.constant 0 : index
    %c0_447 = arith.constant 0 : index
    %1082 = vector.load %arg13[%c0_446, %c0_447] : memref<32x128xf32, #tpu.memory_space<vmem>>, vector<32x128xf32>
    %cst_448 = arith.constant dense<0.000000e+00> : vector<1x128xf32>
    %1083 = tpu.matmul %1081, %1082, %cst_448 {dimension_numbers = #tpu.dot_dimension_numbers<[1], [0], [0], [1], [0, 0, 1, 1], [], []>} : vector<1x32xf32>, vector<32x128xf32>, vector<1x128xf32> -> vector<1x128xf32>
    %c0_449 = arith.constant 0 : index
    %c0_450 = arith.constant 0 : index
    %1084 = vector.load %arg14[%c0_449, %c0_450] : memref<1x128xf32, #tpu.memory_space<vmem>>, vector<1x128xf32>
    %1085 = arith.addf %1083, %1084 : vector<1x128xf32>
    %cst_451 = arith.constant dense<0xFF800000> : vector<1xf32>
    %1086 = vector.multi_reduction <maximumf>, %1085, %cst_451 [1] : vector<1x128xf32> to vector<1xf32>
    %1087 = vector.shape_cast %1086 : vector<1xf32> to vector<1x1xf32>
    %1088 = vector.broadcast %1087 : vector<1x1xf32> to vector<1x128xf32>
    %1089 = arith.subf %1085, %1088 : vector<1x128xf32>
    %1090 = math.exp %1089 : vector<1x128xf32>
    %cst_452 = arith.constant dense<0.000000e+00> : vector<1xf32>
    %1091 = vector.multi_reduction <add>, %1090, %cst_452 [1] : vector<1x128xf32> to vector<1xf32>
    %1092 = vector.shape_cast %1091 : vector<1xf32> to vector<1x1xf32>
    %1093 = tpu.reciprocal %1092 {approx = true} : vector<1x1xf32> -> vector<1x1xf32>
    %1094 = vector.broadcast %1087 : vector<1x1xf32> to vector<1x128xf32>
    %1095 = arith.cmpf oge, %1085, %1094 : vector<1x128xf32>
    %c128_i32_453 = arith.constant 128 : i32
    %1096 = vector.broadcast %c128_i32_453 : i32 to vector<1x128xi32>
    %1097 = arith.select %1095, %356, %1096 : vector<1x128xi1>, vector<1x128xi32>
    %cst_454 = arith.constant dense<2147483647> : vector<1xi32>
    %1098 = vector.multi_reduction <minsi>, %1097, %cst_454 [1] : vector<1x128xi32> to vector<1xi32>
    %1099 = vector.shape_cast %1098 : vector<1xi32> to vector<1x1xi32>
    %c8_i32 = arith.constant 8 : i32
    %1100 = vector.broadcast %c8_i32 : i32 to vector<1x10xi32>
    %1101 = arith.cmpi eq, %357, %1100 : vector<1x10xi32>
    %1102 = vector.shape_cast %1099 : vector<1x1xi32> to vector<1x1xi32>
    %1103 = vector.broadcast %1102 : vector<1x1xi32> to vector<1x10xi32>
    %1104 = arith.select %1101, %1103, %1021 : vector<1x10xi1>, vector<1x10xi32>
    %1105 = vector.shape_cast %1093 : vector<1x1xf32> to vector<1x1xf32>
    %1106 = vector.broadcast %1105 : vector<1x1xf32> to vector<1x10xf32>
    %1107 = arith.select %1101, %1106, %1024 : vector<1x10xi1>, vector<1x10xf32>
    %1108 = vector.broadcast %1099 : vector<1x1xi32> to vector<1x64xi32>
    %1109 = arith.cmpi eq, %355, %1108 : vector<1x64xi32>
    %1110 = arith.extui %1109 : vector<1x64xi1> to vector<1x64xi32>
    %1111 = arith.sitofp %1110 : vector<1x64xi32> to vector<1x64xf32>
    %c0_455 = arith.constant 0 : index
    %c0_456 = arith.constant 0 : index
    %1112 = vector.load %arg2[%c0_455, %c0_456] : memref<64x32xf32, #tpu.memory_space<vmem>>, vector<64x32xf32>
    %cst_457 = arith.constant dense<0.000000e+00> : vector<1x32xf32>
    %1113 = tpu.matmul %1111, %1112, %cst_457 {dimension_numbers = #tpu.dot_dimension_numbers<[1], [0], [0], [1], [0, 0, 1, 1], [], []>} : vector<1x64xf32>, vector<64x32xf32>, vector<1x32xf32> -> vector<1x32xf32>
    %c0_458 = arith.constant 0 : index
    %c0_459 = arith.constant 0 : index
    %1114 = vector.load %arg7[%c0_458, %c0_459] : memref<32x96xf32, #tpu.memory_space<vmem>>, vector<32x96xf32>
    %cst_460 = arith.constant dense<0.000000e+00> : vector<1x96xf32>
    %1115 = tpu.matmul %1113, %1114, %cst_460 {dimension_numbers = #tpu.dot_dimension_numbers<[1], [0], [0], [1], [0, 0, 1, 1], [], []>} : vector<1x32xf32>, vector<32x96xf32>, vector<1x96xf32> -> vector<1x96xf32>
    %c0_461 = arith.constant 0 : index
    %c0_462 = arith.constant 0 : index
    %1116 = vector.load %arg9[%c0_461, %c0_462] : memref<1x96xf32, #tpu.memory_space<vmem>>, vector<1x96xf32>
    %1117 = arith.addf %1115, %1116 : vector<1x96xf32>
    %c0_463 = arith.constant 0 : index
    %c0_464 = arith.constant 0 : index
    %1118 = vector.load %arg8[%c0_463, %c0_464] : memref<32x96xf32, #tpu.memory_space<vmem>>, vector<32x96xf32>
    %cst_465 = arith.constant dense<0.000000e+00> : vector<1x96xf32>
    %1119 = tpu.matmul %1064, %1118, %cst_465 {dimension_numbers = #tpu.dot_dimension_numbers<[1], [0], [0], [1], [0, 0, 1, 1], [], []>} : vector<1x32xf32>, vector<32x96xf32>, vector<1x96xf32> -> vector<1x96xf32>
    %1120 = vector.extract_strided_slice %1117 {offsets = [0, 0], sizes = [1, 32], strides = [1, 1]} : vector<1x96xf32> to vector<1x32xf32>
    %1121 = vector.extract_strided_slice %1119 {offsets = [0, 0], sizes = [1, 32], strides = [1, 1]} : vector<1x96xf32> to vector<1x32xf32>
    %1122 = arith.addf %1120, %1121 : vector<1x32xf32>
    %1123 = arith.negf %1122 : vector<1x32xf32>
    %1124 = math.exp %1123 : vector<1x32xf32>
    %cst_466 = arith.constant 1.000000e+00 : f32
    %1125 = vector.broadcast %cst_466 : f32 to vector<1x32xf32>
    %1126 = arith.addf %1125, %1124 : vector<1x32xf32>
    %1127 = arith.divf %1125, %1126 : vector<1x32xf32>
    %1128 = vector.extract_strided_slice %1117 {offsets = [0, 32], sizes = [1, 32], strides = [1, 1]} : vector<1x96xf32> to vector<1x32xf32>
    %1129 = vector.extract_strided_slice %1119 {offsets = [0, 32], sizes = [1, 32], strides = [1, 1]} : vector<1x96xf32> to vector<1x32xf32>
    %1130 = arith.addf %1128, %1129 : vector<1x32xf32>
    %1131 = arith.negf %1130 : vector<1x32xf32>
    %1132 = math.exp %1131 : vector<1x32xf32>
    %cst_467 = arith.constant 1.000000e+00 : f32
    %1133 = vector.broadcast %cst_467 : f32 to vector<1x32xf32>
    %1134 = arith.addf %1133, %1132 : vector<1x32xf32>
    %1135 = arith.divf %1133, %1134 : vector<1x32xf32>
    %1136 = vector.extract_strided_slice %1117 {offsets = [0, 64], sizes = [1, 32], strides = [1, 1]} : vector<1x96xf32> to vector<1x32xf32>
    %1137 = vector.extract_strided_slice %1119 {offsets = [0, 64], sizes = [1, 32], strides = [1, 1]} : vector<1x96xf32> to vector<1x32xf32>
    %c0_468 = arith.constant 0 : index
    %c0_469 = arith.constant 0 : index
    %1138 = vector.load %arg10[%c0_468, %c0_469] : memref<1x32xf32, #tpu.memory_space<vmem>>, vector<1x32xf32>
    %1139 = arith.addf %1137, %1138 : vector<1x32xf32>
    %1140 = arith.mulf %1127, %1139 : vector<1x32xf32>
    %1141 = arith.addf %1136, %1140 : vector<1x32xf32>
    %1142 = math.tanh %1141 : vector<1x32xf32>
    %cst_470 = arith.constant 1.000000e+00 : f32
    %1143 = vector.broadcast %cst_470 : f32 to vector<1x32xf32>
    %1144 = arith.subf %1143, %1135 : vector<1x32xf32>
    %1145 = arith.mulf %1144, %1142 : vector<1x32xf32>
    %1146 = arith.mulf %1135, %1064 : vector<1x32xf32>
    %1147 = arith.addf %1145, %1146 : vector<1x32xf32>
    %cst_471 = arith.constant dense<0.000000e+00> : vector<1x8xf32>
    %1148 = tpu.matmul %1147, %354, %cst_471 {dimension_numbers = #tpu.dot_dimension_numbers<[1], [1], [0], [0], [0, 0, 1, 0], [], []>} : vector<1x32xf32>, vector<8x32xf32>, vector<1x8xf32> -> vector<1x8xf32>
    %cst_472 = arith.constant dense<0xFF800000> : vector<1xf32>
    %1149 = vector.multi_reduction <maximumf>, %1148, %cst_472 [1] : vector<1x8xf32> to vector<1xf32>
    %1150 = vector.shape_cast %1149 : vector<1xf32> to vector<1x1xf32>
    %1151 = vector.broadcast %1150 : vector<1x1xf32> to vector<1x8xf32>
    %1152 = arith.subf %1148, %1151 : vector<1x8xf32>
    %1153 = math.exp %1152 : vector<1x8xf32>
    %cst_473 = arith.constant dense<0.000000e+00> : vector<1xf32>
    %1154 = vector.multi_reduction <add>, %1153, %cst_473 [1] : vector<1x8xf32> to vector<1xf32>
    %1155 = vector.shape_cast %1154 : vector<1xf32> to vector<1x1xf32>
    %1156 = vector.broadcast %1155 : vector<1x1xf32> to vector<1x8xf32>
    %1157 = arith.divf %1153, %1156 : vector<1x8xf32>
    %cst_474 = arith.constant dense<0.000000e+00> : vector<1x32xf32>
    %1158 = tpu.matmul %1157, %354, %cst_474 {dimension_numbers = #tpu.dot_dimension_numbers<[1], [0], [0], [1], [0, 0, 1, 1], [], []>} : vector<1x8xf32>, vector<8x32xf32>, vector<1x32xf32> -> vector<1x32xf32>
    %1159 = tpu.concatenate %1147, %1158 in 1 : vector<1x32xf32>, vector<1x32xf32> -> vector<1x64xf32>
    %c0_475 = arith.constant 0 : index
    %c0_476 = arith.constant 0 : index
    %1160 = vector.load %arg11[%c0_475, %c0_476] : memref<64x32xf32, #tpu.memory_space<vmem>>, vector<64x32xf32>
    %cst_477 = arith.constant dense<0.000000e+00> : vector<1x32xf32>
    %1161 = tpu.matmul %1159, %1160, %cst_477 {dimension_numbers = #tpu.dot_dimension_numbers<[1], [0], [0], [1], [0, 0, 1, 1], [], []>} : vector<1x64xf32>, vector<64x32xf32>, vector<1x32xf32> -> vector<1x32xf32>
    %c0_478 = arith.constant 0 : index
    %c0_479 = arith.constant 0 : index
    %1162 = vector.load %arg12[%c0_478, %c0_479] : memref<1x32xf32, #tpu.memory_space<vmem>>, vector<1x32xf32>
    %1163 = arith.addf %1161, %1162 : vector<1x32xf32>
    %1164 = math.tanh %1163 : vector<1x32xf32>
    %c0_480 = arith.constant 0 : index
    %c0_481 = arith.constant 0 : index
    %1165 = vector.load %arg13[%c0_480, %c0_481] : memref<32x128xf32, #tpu.memory_space<vmem>>, vector<32x128xf32>
    %cst_482 = arith.constant dense<0.000000e+00> : vector<1x128xf32>
    %1166 = tpu.matmul %1164, %1165, %cst_482 {dimension_numbers = #tpu.dot_dimension_numbers<[1], [0], [0], [1], [0, 0, 1, 1], [], []>} : vector<1x32xf32>, vector<32x128xf32>, vector<1x128xf32> -> vector<1x128xf32>
    %c0_483 = arith.constant 0 : index
    %c0_484 = arith.constant 0 : index
    %1167 = vector.load %arg14[%c0_483, %c0_484] : memref<1x128xf32, #tpu.memory_space<vmem>>, vector<1x128xf32>
    %1168 = arith.addf %1166, %1167 : vector<1x128xf32>
    %cst_485 = arith.constant dense<0xFF800000> : vector<1xf32>
    %1169 = vector.multi_reduction <maximumf>, %1168, %cst_485 [1] : vector<1x128xf32> to vector<1xf32>
    %1170 = vector.shape_cast %1169 : vector<1xf32> to vector<1x1xf32>
    %1171 = vector.broadcast %1170 : vector<1x1xf32> to vector<1x128xf32>
    %1172 = arith.subf %1168, %1171 : vector<1x128xf32>
    %1173 = math.exp %1172 : vector<1x128xf32>
    %cst_486 = arith.constant dense<0.000000e+00> : vector<1xf32>
    %1174 = vector.multi_reduction <add>, %1173, %cst_486 [1] : vector<1x128xf32> to vector<1xf32>
    %1175 = vector.shape_cast %1174 : vector<1xf32> to vector<1x1xf32>
    %1176 = tpu.reciprocal %1175 {approx = true} : vector<1x1xf32> -> vector<1x1xf32>
    %1177 = vector.broadcast %1170 : vector<1x1xf32> to vector<1x128xf32>
    %1178 = arith.cmpf oge, %1168, %1177 : vector<1x128xf32>
    %c128_i32_487 = arith.constant 128 : i32
    %1179 = vector.broadcast %c128_i32_487 : i32 to vector<1x128xi32>
    %1180 = arith.select %1178, %356, %1179 : vector<1x128xi1>, vector<1x128xi32>
    %cst_488 = arith.constant dense<2147483647> : vector<1xi32>
    %1181 = vector.multi_reduction <minsi>, %1180, %cst_488 [1] : vector<1x128xi32> to vector<1xi32>
    %1182 = vector.shape_cast %1181 : vector<1xi32> to vector<1x1xi32>
    %c9_i32 = arith.constant 9 : i32
    %1183 = vector.broadcast %c9_i32 : i32 to vector<1x10xi32>
    %1184 = arith.cmpi eq, %357, %1183 : vector<1x10xi32>
    %1185 = vector.shape_cast %1182 : vector<1x1xi32> to vector<1x1xi32>
    %1186 = vector.broadcast %1185 : vector<1x1xi32> to vector<1x10xi32>
    %1187 = arith.select %1184, %1186, %1104 : vector<1x10xi1>, vector<1x10xi32>
    %1188 = vector.shape_cast %1176 : vector<1x1xf32> to vector<1x1xf32>
    %1189 = vector.broadcast %1188 : vector<1x1xf32> to vector<1x10xf32>
    %1190 = arith.select %1184, %1189, %1107 : vector<1x10xi1>, vector<1x10xf32>
    %c0_489 = arith.constant 0 : index
    %c0_490 = arith.constant 0 : index
    %1191 = vector.load %arg15[%c0_489, %c0_490] : memref<1x10xi32, #tpu.memory_space<vmem>>, vector<1x10xi32>
    tpu.vector_store %arg15[%c0_489, %c0_490], %1187 {strides = array<i32>} : memref<1x10xi32, #tpu.memory_space<vmem>>, vector<1x10xi32>,
    %c0_491 = arith.constant 0 : index
    %c0_492 = arith.constant 0 : index
    %1192 = vector.load %arg16[%c0_491, %c0_492] : memref<1x10xf32, #tpu.memory_space<vmem>>, vector<1x10xf32>
    tpu.vector_store %arg16[%c0_491, %c0_492], %1190 {strides = array<i32>} : memref<1x10xf32, #tpu.memory_space<vmem>>, vector<1x10xf32>,
    return
  }
}

</mosaic_0001>

<llo_original>
// kernel: greedy_search_decode.1
$region0: #{greedy_search_decode.1}
  #allocation0 [shape = 'u32[]', space=smem, size = 0x4, offset = 0x4, fixed_abs, tag = 'smem constant byte address 0x4 - core index']
  #allocation1 [shape = 'u32[72,128]{1,0:T(1,128)}', space=vmem, size = 0x9000, scoped, tag = 'internal scratch']
  #allocation2 [shape = 'f32[8,32]{1,0:T(8,128)}', space=vmem, size = 0x1000, scoped, tag = 'scratch operand']
  #allocation3 [shape = 's32[1]{0:T(128)S(6)}', space=smem, size = 0x200, scoped, tag = 'scoped memory for greedy_search_decode.1']
  %s0 = inlined_call_operand.vmem [shape: s32[8], index: 0, kind: input, shape index: {}]
  %s1 = inlined_call_operand.<no memory space> [shape: s32[1], index: 1, kind: input, shape index: {}]
  %s2 = inlined_call_operand.vmem [shape: f32[64,32], index: 2, kind: input, shape index: {}]
  %s3 = inlined_call_operand.vmem [shape: f32[32,96], index: 3, kind: input, shape index: {}]
  %s4 = inlined_call_operand.vmem [shape: f32[32,96], index: 4, kind: input, shape index: {}]
  %s5 = inlined_call_operand.vmem [shape: f32[1,96], index: 5, kind: input, shape index: {}]
  %s6 = inlined_call_operand.vmem [shape: f32[1,32], index: 6, kind: input, shape index: {}]
  %s7 = inlined_call_operand.vmem [shape: f32[32,96], index: 7, kind: input, shape index: {}]
  %s8 = inlined_call_operand.vmem [shape: f32[32,96], index: 8, kind: input, shape index: {}]
  %s9 = inlined_call_operand.vmem [shape: f32[1,96], index: 9, kind: input, shape index: {}]
  %s10 = inlined_call_operand.vmem [shape: f32[1,32], index: 10, kind: input, shape index: {}]
  %s11 = inlined_call_operand.vmem [shape: f32[64,32], index: 11, kind: input, shape index: {}]
  %s12 = inlined_call_operand.vmem [shape: f32[1,32], index: 12, kind: input, shape index: {}]
  %s13 = inlined_call_operand.vmem [shape: f32[32,128], index: 13, kind: input, shape index: {}]
  %s14 = inlined_call_operand.vmem [shape: f32[1,128], index: 14, kind: input, shape index: {}]
  %s15 = inlined_call_operand.hbm [shape: s32[1,10], index: 15, kind: output, shape index: {0}]
  %s16 = inlined_call_operand.hbm [shape: f32[1,10], index: 16, kind: output, shape index: {1}]
  %17 = xla_tuple %s15, %s16
  %s18 = sld [smem:[#allocation0]]
  $region82: #{greedy_search_decode.1} parent=0
    _
  %s20 = ssub.s32 1, %s18
  %s21 = scalar_select 0, %s20, %s18
  %22 = sst [smem:[#allocation3]] %s1
  $region1: #{greedy_search_decode.1} parent=0
    #allocation4 [shape = 'u8[512]{0}', space=smem, size = 0x200, scoped, tag = 'input window, operand 0, single buffered']
    #allocation5 [shape = 's32[1]{0}', space=sflag, size = 0x4, scoped, tag = 'scoped memory for greedy_search_decode.1']
    #allocation6 [shape = 's32[1]{0}', space=sflag, size = 0x4, scoped, tag = 'scoped memory for greedy_search_decode.1']
    #allocation7 [shape = 'u8[512]{0}', space=vmem, size = 0x400, scoped, tag = 'output window, operand 0, single buffered']
    #allocation8 [shape = 'u8[512]{0}', space=vmem, size = 0x400, scoped, tag = 'output window, operand 1, single buffered']
    #allocation9 [shape = 's32[1]{0}', space=sflag, size = 0x4, scoped, tag = 'scoped memory for greedy_search_decode.1']
    %23 = vsyncpa [#allocation6], 0
    %24 = vsyncpa [#allocation5], 0
    %25 = vsyncpa [#allocation9], 0
    // Predicated region
    $region2: #{greedy_search_decode.1} parent=1 // pred_check
      _
    $region3: #{greedy_search_decode.1} parent=1 // pred_check_branch
      %27 = sbr.rel (0) target = $region5
    $region4: #{greedy_search_decode.1} parent=1 // pred_region
      %29 = vsyncadd [#allocation6], 0
      %s31 = sshll.u32 %s0, 4
      %s32 = int_to_ptr.vmem [resolvable:$true] %s31
      %34 = dma.vmem_to_smem %s32, 16, [#allocation4], [#allocation6]
    $region5: #{greedy_search_decode.1} parent=1 // pred_fallthru
      _
    // Predicated region
    $region6: #{greedy_search_decode.1} parent=1 // pred_check
      _
    $region7: #{greedy_search_decode.1} parent=1 // pred_check_branch
      %36 = sbr.rel (0) target = $region9
    $region8: #{greedy_search_decode.1} parent=1 // pred_region
      _
    $region9: #{greedy_search_decode.1} parent=1 // pred_fallthru
      _
    // Predicated region
    $region10: #{greedy_search_decode.1} parent=1 // pred_check
      _
    $region11: #{greedy_search_decode.1} parent=1 // pred_check_branch
      %38 = sbr.rel (0) target = $region13
    $region12: #{greedy_search_decode.1} parent=1 // pred_region
      _
    $region13: #{greedy_search_decode.1} parent=1 // pred_fallthru
      _
    // Predicated region
    $region14: #{greedy_search_decode.1} parent=1 // pred_check
      _
    $region15: #{greedy_search_decode.1} parent=1 // pred_check_branch
      %40 = sbr.rel (0) target = $region17
    $region16: #{greedy_search_decode.1} parent=1 // pred_region
      _
    $region17: #{greedy_search_decode.1} parent=1 // pred_fallthru
      _
    // Predicated region
    $region18: #{greedy_search_decode.1} parent=1 // pred_check
      _
    $region19: #{greedy_search_decode.1} parent=1 // pred_check_branch
      %42 = sbr.rel (0) target = $region21
    $region20: #{greedy_search_decode.1} parent=1 // pred_region
      _
    $region21: #{greedy_search_decode.1} parent=1 // pred_fallthru
      _
    // Predicated region
    $region22: #{greedy_search_decode.1} parent=1 // pred_check
      _
    $region23: #{greedy_search_decode.1} parent=1 // pred_check_branch
      %44 = sbr.rel (0) target = $region25
    $region24: #{greedy_search_decode.1} parent=1 // pred_region
      _
    $region25: #{greedy_search_decode.1} parent=1 // pred_fallthru
      _
    // Predicated region
    $region26: #{greedy_search_decode.1} parent=1 // pred_check
      _
    $region27: #{greedy_search_decode.1} parent=1 // pred_check_branch
      %46 = sbr.rel (0) target = $region29
    $region28: #{greedy_search_decode.1} parent=1 // pred_region
      _
    $region29: #{greedy_search_decode.1} parent=1 // pred_fallthru
      _
    // Predicated region
    $region30: #{greedy_search_decode.1} parent=1 // pred_check
      _
    $region31: #{greedy_search_decode.1} parent=1 // pred_check_branch
      %48 = sbr.rel (0) target = $region33
    $region32: #{greedy_search_decode.1} parent=1 // pred_region
      _
    $region33: #{greedy_search_decode.1} parent=1 // pred_fallthru
      _
    // Predicated region
    $region34: #{greedy_search_decode.1} parent=1 // pred_check
      _
    $region35: #{greedy_search_decode.1} parent=1 // pred_check_branch
      %50 = sbr.rel (0) target = $region37
    $region36: #{greedy_search_decode.1} parent=1 // pred_region
      _
    $region37: #{greedy_search_decode.1} parent=1 // pred_fallthru
      _
    // Predicated region
    $region38: #{greedy_search_decode.1} parent=1 // pred_check
      _
    $region39: #{greedy_search_decode.1} parent=1 // pred_check_branch
      %52 = sbr.rel (0) target = $region41
    $region40: #{greedy_search_decode.1} parent=1 // pred_region
      _
    $region41: #{greedy_search_decode.1} parent=1 // pred_fallthru
      _
    // Predicated region
    $region42: #{greedy_search_decode.1} parent=1 // pred_check
      _
    $region43: #{greedy_search_decode.1} parent=1 // pred_check_branch
      %54 = sbr.rel (0) target = $region45
    $region44: #{greedy_search_decode.1} parent=1 // pred_region
      _
    $region45: #{greedy_search_decode.1} parent=1 // pred_fallthru
      _
    // Predicated region
    $region46: #{greedy_search_decode.1} parent=1 // pred_check
      _
    $region47: #{greedy_search_decode.1} parent=1 // pred_check_branch
      %56 = sbr.rel (0) target = $region49
    $region48: #{greedy_search_decode.1} parent=1 // pred_region
      _
    $region49: #{greedy_search_decode.1} parent=1 // pred_fallthru
      _
    // Predicated region
    $region50: #{greedy_search_decode.1} parent=1 // pred_check
      _
    $region51: #{greedy_search_decode.1} parent=1 // pred_check_branch
      %58 = sbr.rel (0) target = $region53
    $region52: #{greedy_search_decode.1} parent=1 // pred_region
      _
    $region53: #{greedy_search_decode.1} parent=1 // pred_fallthru
      _
    // Predicated region
    $region54: #{greedy_search_decode.1} parent=1 // pred_check
      _
    $region55: #{greedy_search_decode.1} parent=1 // pred_check_branch
      %60 = sbr.rel (0) target = $region57
    $region56: #{greedy_search_decode.1} parent=1 // pred_region
      _
    $region57: #{greedy_search_decode.1} parent=1 // pred_fallthru
      _
    // Predicated region
    $region58: #{greedy_search_decode.1} parent=1 // pred_check
      _
    $region59: #{greedy_search_decode.1} parent=1 // pred_check_branch
      %62 = sbr.rel (0) target = $region61
    $region60: #{greedy_search_decode.1} parent=1 // pred_region
      _
    $region61: #{greedy_search_decode.1} parent=1 // pred_fallthru
      _
    // Predicated region
    $region62: #{greedy_search_decode.1} parent=1 // pred_check
      _
    $region63: #{greedy_search_decode.1} parent=1 // pred_check_branch
      %64 = sbr.rel (0) target = $region65
    $region64: #{greedy_search_decode.1} parent=1 // pred_region
      %66 = dma.done [#allocation6], 16
    $region65: #{greedy_search_decode.1} parent=1 // pred_fallthru
      _
    %67 = sfence
    %s68 = sld [smem:[#allocation3]]
    %s69 = sld [smem:[#allocation4]]
    %s70 = scalar_lea.vmem %s2, %s69
    %v71 = vld [vmem:[%s70] sm:$0x1]
    %v72 = vld [vmem:[%s3] sm:$0xff]
    %v73 = vld [vmem:[%s3 + $0x8] sm:$0xff]
    %v74 = vld [vmem:[%s3 + $0x10] sm:$0xff]
    %v75 = vld [vmem:[%s3 + $0x18] sm:$0xff]
    %v76 = vld [vmem:[%s5] sm:$0x1]
    %vm77 = vcmask 261120
    %v79 = vsel %vm77, %v71, 0
    %81 = vmatpush.msra.mxu0 0.0
    %82 = vmatpush.msra.mxu0 0.0
    %83 = vmatpush.msra.mxu0 0.0
    %84 = vmatpush.msra.mxu0 0.0
    %85 = vmatpush.msra.mxu0 0.0
    %86 = vmatpush.msra.mxu0 0.0
    %87 = vmatpush.msra.mxu0 0.0
    %88 = vmatpush.msra.mxu0 0.0
    %89 = vmatpush.msra.mxu0 0.0
    %90 = vmatpush.msra.mxu0 0.0
    %91 = vmatpush.msra.mxu0 0.0
    %92 = vmatpush.msra.mxu0 0.0
    %93 = vmatpush.msra.mxu0 %v75
    %94 = vmatpush.msra.mxu0 %v74
    %95 = vmatpush.msra.mxu0 %v73
    %96 = vmatpush.msra.mxu0 %v72
    %97 = vmatmul.f32.gmra.mxu0 %v79
    %v98 = vpop.f32.mrf.mxu0
    %v99 = vadd.f32 %v76, %v98
    %100 = vdwg.mxu0
    %v101 = vld [vmem:[%s4] sm:$0xff]
    %v102 = vld [vmem:[%s4 + $0x8] sm:$0xff]
    %v103 = vld [vmem:[%s4 + $0x10] sm:$0xff]
    %v104 = vld [vmem:[%s4 + $0x18] sm:$0xff]
    %v106 = vsel %vm77, 0.0, 0
    %108 = vmatpush.msra.mxu0 0.0
    %109 = vmatpush.msra.mxu0 0.0
    %110 = vmatpush.msra.mxu0 0.0
    %111 = vmatpush.msra.mxu0 0.0
    %112 = vmatpush.msra.mxu0 0.0
    %113 = vmatpush.msra.mxu0 0.0
    %114 = vmatpush.msra.mxu0 0.0
    %115 = vmatpush.msra.mxu0 0.0
    %116 = vmatpush.msra.mxu0 0.0
    %117 = vmatpush.msra.mxu0 0.0
    %118 = vmatpush.msra.mxu0 0.0
    %119 = vmatpush.msra.mxu0 0.0
    %120 = vmatpush.msra.mxu0 %v104
    %121 = vmatpush.msra.mxu0 %v103
    %122 = vmatpush.msra.mxu0 %v102
    %123 = vmatpush.msra.mxu0 %v101
    %124 = vmatmul.f32.gmra.mxu0 %v106
    %v125 = vpop.f32.mrf.mxu0
    %v126 = vadd.f32 0.0, %v125
    %127 = vdwg.mxu0
    %v128 = vadd.f32 %v99, %v126
    %v129 = vxor.u32 %v128, 2147483648
    %v130 = vmul.f32 %v129, 1.442695
    %v131 = vpow.pop %v130
    %v132 = vadd.f32 %v131, 1.0
    %v133 = vrcp.pop %v132
    %v134 = vmul.f32 %v132, %v133
    %v135 = vsub.f32 1.0, %v134
    %v136 = vmul.f32 %v133, %v135
    %v137 = vadd.f32 %v133, %v136
    %vm138 = vweird.f32 %v132
    %vm139 = vweird.f32 %v133
    %vm140 = vmor %vm138, %vm139
    %v141 = vsel %vm140, %v133, %v137
    %v142 = vand.u32 2147483647, %v132
    %vm143 = vcmp.eq.f32.partialorder %v142, 8.507059e+37
    %v144 = vand.u32 %v132, 2147483648
    %v145 = vor.u32 1.1754944e-38, %v144
    %v146 = vsel %vm143, %v145, %v141
    %v147 = vmul.f32 1.0, %v146
    %v148 = vld [vmem:[%s6] sm:$0x1]
    %v150 = vperm.slane %v148, 0
    %151 = vrot.lane.b32.xlu0 %v150, 64
    %v152 = vpop.permute.xlu0 %151
    %v154 = vadd.f32 %v126, %v152
    %156 = vrot.lane.b32.xlu0 %v154, 64
    %v157 = vpop.permute.xlu0 %156
    %v159 = vmul.f32 %v147, %v157
    %161 = vrot.lane.b32.xlu0 %v159, 64
    %v162 = vpop.permute.xlu0 %161
    %v164 = vadd.f32 %v99, %v162
    %v165 = vtanh.pop %v164
    %v166 = vsub.f32 1.0, %v147
    %168 = vrot.lane.b32.xlu0 %v165, 96
    %v169 = vpop.permute.xlu0 %168
    %v171 = vmul.f32 %v166, %v169
    %v172 = vmul.f32 %v147, 0.0
    %v173 = vadd.f32 %v171, %v172
    %v174 = vstv %s68
    %vm175 = vcmp.gt.s32.totalorder %v174, 0
    %v176 = vsel %vm175, %v173, 0.0
    %178 = vrot.lane.b32.xlu0 %v176, 96
    %v179 = vpop.permute.xlu0 %178
    %vm181 = vcmask 253952
    %182 = vst.msk [vmem:[#allocation2] sm:$0x1] %vm181, %v179
    %s183 = sld [smem:[#allocation4 + $0x1]]
    %s184 = scalar_lea.vmem %s2, %s183
    %v185 = vld [vmem:[%s184] sm:$0x1]
    %v186 = vld [vmem:[%s3] sm:$0xff]
    %v187 = vld [vmem:[%s3 + $0x8] sm:$0xff]
    %v188 = vld [vmem:[%s3 + $0x10] sm:$0xff]
    %v189 = vld [vmem:[%s3 + $0x18] sm:$0xff]
    %v190 = vld [vmem:[%s5] sm:$0x1]
    %v192 = vsel %vm77, %v185, 0
    %194 = vmatpush.msra.mxu0 0.0
    %195 = vmatpush.msra.mxu0 0.0
    %196 = vmatpush.msra.mxu0 0.0
    %197 = vmatpush.msra.mxu0 0.0
    %198 = vmatpush.msra.mxu0 0.0
    %199 = vmatpush.msra.mxu0 0.0
    %200 = vmatpush.msra.mxu0 0.0
    %201 = vmatpush.msra.mxu0 0.0
    %202 = vmatpush.msra.mxu0 0.0
    %203 = vmatpush.msra.mxu0 0.0
    %204 = vmatpush.msra.mxu0 0.0
    %205 = vmatpush.msra.mxu0 0.0
    %206 = vmatpush.msra.mxu0 %v189
    %207 = vmatpush.msra.mxu0 %v188
    %208 = vmatpush.msra.mxu0 %v187
    %209 = vmatpush.msra.mxu0 %v186
    %210 = vmatmul.f32.gmra.mxu0 %v192
    %v211 = vpop.f32.mrf.mxu0
    %v212 = vadd.f32 %v190, %v211
    %213 = vdwg.mxu0
    %v214 = vld [vmem:[%s4] sm:$0xff]
    %v215 = vld [vmem:[%s4 + $0x8] sm:$0xff]
    %v216 = vld [vmem:[%s4 + $0x10] sm:$0xff]
    %v217 = vld [vmem:[%s4 + $0x18] sm:$0xff]
    %v218 = vsel %vm77, %v179, 0
    %220 = vmatpush.msra.mxu0 0.0
    %221 = vmatpush.msra.mxu0 0.0
    %222 = vmatpush.msra.mxu0 0.0
    %223 = vmatpush.msra.mxu0 0.0
    %224 = vmatpush.msra.mxu0 0.0
    %225 = vmatpush.msra.mxu0 0.0
    %226 = vmatpush.msra.mxu0 0.0
    %227 = vmatpush.msra.mxu0 0.0
    %228 = vmatpush.msra.mxu0 0.0
    %229 = vmatpush.msra.mxu0 0.0
    %230 = vmatpush.msra.mxu0 0.0
    %231 = vmatpush.msra.mxu0 0.0
    %232 = vmatpush.msra.mxu0 %v217
    %233 = vmatpush.msra.mxu0 %v216
    %234 = vmatpush.msra.mxu0 %v215
    %235 = vmatpush.msra.mxu0 %v214
    %236 = vmatmul.f32.gmra.mxu0 %v218
    %v237 = vpop.f32.mrf.mxu0
    %v238 = vadd.f32 0.0, %v237
    %239 = vdwg.mxu0
    %v240 = vadd.f32 %v212, %v238
    %v241 = vxor.u32 %v240, 2147483648
    %v242 = vmul.f32 %v241, 1.442695
    %v243 = vpow.pop %v242
    %v244 = vadd.f32 %v243, 1.0
    %v245 = vrcp.pop %v244
    %v246 = vmul.f32 %v244, %v245
    %v247 = vsub.f32 1.0, %v246
    %v248 = vmul.f32 %v245, %v247
    %v249 = vadd.f32 %v245, %v248
    %vm250 = vweird.f32 %v244
    %vm251 = vweird.f32 %v245
    %vm252 = vmor %vm250, %vm251
    %v253 = vsel %vm252, %v245, %v249
    %v254 = vand.u32 2147483647, %v244
    %vm255 = vcmp.eq.f32.partialorder %v254, 8.507059e+37
    %v256 = vand.u32 %v244, 2147483648
    %v257 = vor.u32 1.1754944e-38, %v256
    %v258 = vsel %vm255, %v257, %v253
    %v259 = vmul.f32 1.0, %v258
    %v260 = vld [vmem:[%s6] sm:$0x1]
    %v262 = vperm.slane %v260, 0
    %263 = vrot.lane.b32.xlu0 %v262, 64
    %v264 = vpop.permute.xlu0 %263
    %v266 = vadd.f32 %v238, %v264
    %268 = vrot.lane.b32.xlu0 %v266, 64
    %v269 = vpop.permute.xlu0 %268
    %v271 = vmul.f32 %v259, %v269
    %273 = vrot.lane.b32.xlu0 %v271, 64
    %v274 = vpop.permute.xlu0 %273
    %v276 = vadd.f32 %v212, %v274
    %v277 = vtanh.pop %v276
    %v278 = vsub.f32 1.0, %v259
    %280 = vrot.lane.b32.xlu0 %v277, 96
    %v281 = vpop.permute.xlu0 %280
    %v283 = vmul.f32 %v278, %v281
    %v284 = vmul.f32 %v259, %v176
    %v285 = vadd.f32 %v283, %v284
    %vm286 = vcmp.gt.s32.totalorder %v174, 1
    %v287 = vsel %vm286, %v285, %v176
    %v288 = vsel %vm286, %v285, 0.0
    %290 = vrot.lane.b32.xlu0 %v288, 96
    %v291 = vpop.permute.xlu0 %290
    %293 = vst.msk [vmem:[#allocation2 + $0x1] sm:$0x1] %vm181, %v291
    %s294 = sld [smem:[#allocation4 + $0x2]]
    %s295 = scalar_lea.vmem %s2, %s294
    %v296 = vld [vmem:[%s295] sm:$0x1]
    %v297 = vld [vmem:[%s3] sm:$0xff]
    %v298 = vld [vmem:[%s3 + $0x8] sm:$0xff]
    %v299 = vld [vmem:[%s3 + $0x10] sm:$0xff]
    %v300 = vld [vmem:[%s3 + $0x18] sm:$0xff]
    %v301 = vld [vmem:[%s5] sm:$0x1]
    %v303 = vsel %vm77, %v296, 0
    %305 = vmatpush.msra.mxu0 0.0
    %306 = vmatpush.msra.mxu0 0.0
    %307 = vmatpush.msra.mxu0 0.0
    %308 = vmatpush.msra.mxu0 0.0
    %309 = vmatpush.msra.mxu0 0.0
    %310 = vmatpush.msra.mxu0 0.0
    %311 = vmatpush.msra.mxu0 0.0
    %312 = vmatpush.msra.mxu0 0.0
    %313 = vmatpush.msra.mxu0 0.0
    %314 = vmatpush.msra.mxu0 0.0
    %315 = vmatpush.msra.mxu0 0.0
    %316 = vmatpush.msra.mxu0 0.0
    %317 = vmatpush.msra.mxu0 %v300
    %318 = vmatpush.msra.mxu0 %v299
    %319 = vmatpush.msra.mxu0 %v298
    %320 = vmatpush.msra.mxu0 %v297
    %321 = vmatmul.f32.gmra.mxu0 %v303
    %v322 = vpop.f32.mrf.mxu0
    %v323 = vadd.f32 %v301, %v322
    %324 = vdwg.mxu0
    %v325 = vld [vmem:[%s4] sm:$0xff]
    %v326 = vld [vmem:[%s4 + $0x8] sm:$0xff]
    %v327 = vld [vmem:[%s4 + $0x10] sm:$0xff]
    %v328 = vld [vmem:[%s4 + $0x18] sm:$0xff]
    %330 = vrot.lane.b32.xlu0 %v287, 96
    %v331 = vpop.permute.xlu0 %330
    %v332 = vsel %vm77, %v331, 0
    %334 = vmatpush.msra.mxu0 0.0
    %335 = vmatpush.msra.mxu0 0.0
    %336 = vmatpush.msra.mxu0 0.0
    %337 = vmatpush.msra.mxu0 0.0
    %338 = vmatpush.msra.mxu0 0.0
    %339 = vmatpush.msra.mxu0 0.0
    %340 = vmatpush.msra.mxu0 0.0
    %341 = vmatpush.msra.mxu0 0.0
    %342 = vmatpush.msra.mxu0 0.0
    %343 = vmatpush.msra.mxu0 0.0
    %344 = vmatpush.msra.mxu0 0.0
    %345 = vmatpush.msra.mxu0 0.0
    %346 = vmatpush.msra.mxu0 %v328
    %347 = vmatpush.msra.mxu0 %v327
    %348 = vmatpush.msra.mxu0 %v326
    %349 = vmatpush.msra.mxu0 %v325
    %350 = vmatmul.f32.gmra.mxu0 %v332
    %v351 = vpop.f32.mrf.mxu0
    %v352 = vadd.f32 0.0, %v351
    %353 = vdwg.mxu0
    %v354 = vadd.f32 %v323, %v352
    %v355 = vxor.u32 %v354, 2147483648
    %v356 = vmul.f32 %v355, 1.442695
    %v357 = vpow.pop %v356
    %v358 = vadd.f32 %v357, 1.0
    %v359 = vrcp.pop %v358
    %v360 = vmul.f32 %v358, %v359
    %v361 = vsub.f32 1.0, %v360
    %v362 = vmul.f32 %v359, %v361
    %v363 = vadd.f32 %v359, %v362
    %vm364 = vweird.f32 %v358
    %vm365 = vweird.f32 %v359
    %vm366 = vmor %vm364, %vm365
    %v367 = vsel %vm366, %v359, %v363
    %v368 = vand.u32 2147483647, %v358
    %vm369 = vcmp.eq.f32.partialorder %v368, 8.507059e+37
    %v370 = vand.u32 %v358, 2147483648
    %v371 = vor.u32 1.1754944e-38, %v370
    %v372 = vsel %vm369, %v371, %v367
    %v373 = vmul.f32 1.0, %v372
    %v374 = vld [vmem:[%s6] sm:$0x1]
    %v376 = vperm.slane %v374, 0
    %377 = vrot.lane.b32.xlu0 %v376, 64
    %v378 = vpop.permute.xlu0 %377
    %v380 = vadd.f32 %v352, %v378
    %382 = vrot.lane.b32.xlu0 %v380, 64
    %v383 = vpop.permute.xlu0 %382
    %v385 = vmul.f32 %v373, %v383
    %387 = vrot.lane.b32.xlu0 %v385, 64
    %v388 = vpop.permute.xlu0 %387
    %v390 = vadd.f32 %v323, %v388
    %v391 = vtanh.pop %v390
    %v392 = vsub.f32 1.0, %v373
    %394 = vrot.lane.b32.xlu0 %v391, 96
    %v395 = vpop.permute.xlu0 %394
    %v397 = vmul.f32 %v392, %v395
    %v398 = vmul.f32 %v373, %v287
    %v399 = vadd.f32 %v397, %v398
    %vm400 = vcmp.gt.s32.totalorder %v174, 2
    %v401 = vsel %vm400, %v399, %v287
    %v402 = vsel %vm400, %v399, 0.0
    %404 = vrot.lane.b32.xlu0 %v402, 96
    %v405 = vpop.permute.xlu0 %404
    %407 = vst.msk [vmem:[#allocation2 + $0x2] sm:$0x1] %vm181, %v405
    %s408 = sld [smem:[#allocation4 + $0x3]]
    %s409 = scalar_lea.vmem %s2, %s408
    %v410 = vld [vmem:[%s409] sm:$0x1]
    %v411 = vld [vmem:[%s3] sm:$0xff]
    %v412 = vld [vmem:[%s3 + $0x8] sm:$0xff]
    %v413 = vld [vmem:[%s3 + $0x10] sm:$0xff]
    %v414 = vld [vmem:[%s3 + $0x18] sm:$0xff]
    %v415 = vld [vmem:[%s5] sm:$0x1]
    %v417 = vsel %vm77, %v410, 0
    %419 = vmatpush.msra.mxu0 0.0
    %420 = vmatpush.msra.mxu0 0.0
    %421 = vmatpush.msra.mxu0 0.0
    %422 = vmatpush.msra.mxu0 0.0
    %423 = vmatpush.msra.mxu0 0.0
    %424 = vmatpush.msra.mxu0 0.0
    %425 = vmatpush.msra.mxu0 0.0
    %426 = vmatpush.msra.mxu0 0.0
    %427 = vmatpush.msra.mxu0 0.0
    %428 = vmatpush.msra.mxu0 0.0
    %429 = vmatpush.msra.mxu0 0.0
    %430 = vmatpush.msra.mxu0 0.0
    %431 = vmatpush.msra.mxu0 %v414
    %432 = vmatpush.msra.mxu0 %v413
    %433 = vmatpush.msra.mxu0 %v412
    %434 = vmatpush.msra.mxu0 %v411
    %435 = vmatmul.f32.gmra.mxu0 %v417
    %v436 = vpop.f32.mrf.mxu0
    %v437 = vadd.f32 %v415, %v436
    %438 = vdwg.mxu0
    %v439 = vld [vmem:[%s4] sm:$0xff]
    %v440 = vld [vmem:[%s4 + $0x8] sm:$0xff]
    %v441 = vld [vmem:[%s4 + $0x10] sm:$0xff]
    %v442 = vld [vmem:[%s4 + $0x18] sm:$0xff]
    %444 = vrot.lane.b32.xlu0 %v401, 96
    %v445 = vpop.permute.xlu0 %444
    %v446 = vsel %vm77, %v445, 0
    %448 = vmatpush.msra.mxu0 0.0
    %449 = vmatpush.msra.mxu0 0.0
    %450 = vmatpush.msra.mxu0 0.0
    %451 = vmatpush.msra.mxu0 0.0
    %452 = vmatpush.msra.mxu0 0.0
    %453 = vmatpush.msra.mxu0 0.0
    %454 = vmatpush.msra.mxu0 0.0
    %455 = vmatpush.msra.mxu0 0.0
    %456 = vmatpush.msra.mxu0 0.0
    %457 = vmatpush.msra.mxu0 0.0
    %458 = vmatpush.msra.mxu0 0.0
    %459 = vmatpush.msra.mxu0 0.0
    %460 = vmatpush.msra.mxu0 %v442
    %461 = vmatpush.msra.mxu0 %v441
    %462 = vmatpush.msra.mxu0 %v440
    %463 = vmatpush.msra.mxu0 %v439
    %464 = vmatmul.f32.gmra.mxu0 %v446
    %v465 = vpop.f32.mrf.mxu0
    %v466 = vadd.f32 0.0, %v465
    %467 = vdwg.mxu0
    %v468 = vadd.f32 %v437, %v466
    %v469 = vxor.u32 %v468, 2147483648
    %v470 = vmul.f32 %v469, 1.442695
    %v471 = vpow.pop %v470
    %v472 = vadd.f32 %v471, 1.0
    %v473 = vrcp.pop %v472
    %v474 = vmul.f32 %v472, %v473
    %v475 = vsub.f32 1.0, %v474
    %v476 = vmul.f32 %v473, %v475
    %v477 = vadd.f32 %v473, %v476
    %vm478 = vweird.f32 %v472
    %vm479 = vweird.f32 %v473
    %vm480 = vmor %vm478, %vm479
    %v481 = vsel %vm480, %v473, %v477
    %v482 = vand.u32 2147483647, %v472
    %vm483 = vcmp.eq.f32.partialorder %v482, 8.507059e+37
    %v484 = vand.u32 %v472, 2147483648
    %v485 = vor.u32 1.1754944e-38, %v484
    %v486 = vsel %vm483, %v485, %v481
    %v487 = vmul.f32 1.0, %v486
    %v488 = vld [vmem:[%s6] sm:$0x1]
    %v490 = vperm.slane %v488, 0
    %491 = vrot.lane.b32.xlu0 %v490, 64
    %v492 = vpop.permute.xlu0 %491
    %v494 = vadd.f32 %v466, %v492
    %496 = vrot.lane.b32.xlu0 %v494, 64
    %v497 = vpop.permute.xlu0 %496
    %v499 = vmul.f32 %v487, %v497
    %501 = vrot.lane.b32.xlu0 %v499, 64
    %v502 = vpop.permute.xlu0 %501
    %v504 = vadd.f32 %v437, %v502
    %v505 = vtanh.pop %v504
    %v506 = vsub.f32 1.0, %v487
    %508 = vrot.lane.b32.xlu0 %v505, 96
    %v509 = vpop.permute.xlu0 %508
    %v511 = vmul.f32 %v506, %v509
    %v512 = vmul.f32 %v487, %v401
    %v513 = vadd.f32 %v511, %v512
    %vm514 = vcmp.gt.s32.totalorder %v174, 3
    %v515 = vsel %vm514, %v513, %v401
    %v516 = vsel %vm514, %v513, 0.0
    %518 = vrot.lane.b32.xlu0 %v516, 96
    %v519 = vpop.permute.xlu0 %518
    %521 = vst.msk [vmem:[#allocation2 + $0x3] sm:$0x1] %vm181, %v519
    %s522 = sld [smem:[#allocation4 + $0x4]]
    %s523 = scalar_lea.vmem %s2, %s522
    %v524 = vld [vmem:[%s523] sm:$0x1]
    %v525 = vld [vmem:[%s3] sm:$0xff]
    %v526 = vld [vmem:[%s3 + $0x8] sm:$0xff]
    %v527 = vld [vmem:[%s3 + $0x10] sm:$0xff]
    %v528 = vld [vmem:[%s3 + $0x18] sm:$0xff]
    %v529 = vld [vmem:[%s5] sm:$0x1]
    %v531 = vsel %vm77, %v524, 0
    %533 = vmatpush.msra.mxu0 0.0
    %534 = vmatpush.msra.mxu0 0.0
    %535 = vmatpush.msra.mxu0 0.0
    %536 = vmatpush.msra.mxu0 0.0
    %537 = vmatpush.msra.mxu0 0.0
    %538 = vmatpush.msra.mxu0 0.0
    %539 = vmatpush.msra.mxu0 0.0
    %540 = vmatpush.msra.mxu0 0.0
    %541 = vmatpush.msra.mxu0 0.0
    %542 = vmatpush.msra.mxu0 0.0
    %543 = vmatpush.msra.mxu0 0.0
    %544 = vmatpush.msra.mxu0 0.0
    %545 = vmatpush.msra.mxu0 %v528
    %546 = vmatpush.msra.mxu0 %v527
    %547 = vmatpush.msra.mxu0 %v526
    %548 = vmatpush.msra.mxu0 %v525
    %549 = vmatmul.f32.gmra.mxu0 %v531
    %v550 = vpop.f32.mrf.mxu0
    %v551 = vadd.f32 %v529, %v550
    %552 = vdwg.mxu0
    %v553 = vld [vmem:[%s4] sm:$0xff]
    %v554 = vld [vmem:[%s4 + $0x8] sm:$0xff]
    %v555 = vld [vmem:[%s4 + $0x10] sm:$0xff]
    %v556 = vld [vmem:[%s4 + $0x18] sm:$0xff]
    %558 = vrot.lane.b32.xlu0 %v515, 96
    %v559 = vpop.permute.xlu0 %558
    %v560 = vsel %vm77, %v559, 0
    %562 = vmatpush.msra.mxu0 0.0
    %563 = vmatpush.msra.mxu0 0.0
    %564 = vmatpush.msra.mxu0 0.0
    %565 = vmatpush.msra.mxu0 0.0
    %566 = vmatpush.msra.mxu0 0.0
    %567 = vmatpush.msra.mxu0 0.0
    %568 = vmatpush.msra.mxu0 0.0
    %569 = vmatpush.msra.mxu0 0.0
    %570 = vmatpush.msra.mxu0 0.0
    %571 = vmatpush.msra.mxu0 0.0
    %572 = vmatpush.msra.mxu0 0.0
    %573 = vmatpush.msra.mxu0 0.0
    %574 = vmatpush.msra.mxu0 %v556
    %575 = vmatpush.msra.mxu0 %v555
    %576 = vmatpush.msra.mxu0 %v554
    %577 = vmatpush.msra.mxu0 %v553
    %578 = vmatmul.f32.gmra.mxu0 %v560
    %v579 = vpop.f32.mrf.mxu0
    %v580 = vadd.f32 0.0, %v579
    %581 = vdwg.mxu0
    %v582 = vadd.f32 %v551, %v580
    %v583 = vxor.u32 %v582, 2147483648
    %v584 = vmul.f32 %v583, 1.442695
    %v585 = vpow.pop %v584
    %v586 = vadd.f32 %v585, 1.0
    %v587 = vrcp.pop %v586
    %v588 = vmul.f32 %v586, %v587
    %v589 = vsub.f32 1.0, %v588
    %v590 = vmul.f32 %v587, %v589
    %v591 = vadd.f32 %v587, %v590
    %vm592 = vweird.f32 %v586
    %vm593 = vweird.f32 %v587
    %vm594 = vmor %vm592, %vm593
    %v595 = vsel %vm594, %v587, %v591
    %v596 = vand.u32 2147483647, %v586
    %vm597 = vcmp.eq.f32.partialorder %v596, 8.507059e+37
    %v598 = vand.u32 %v586, 2147483648
    %v599 = vor.u32 1.1754944e-38, %v598
    %v600 = vsel %vm597, %v599, %v595
    %v601 = vmul.f32 1.0, %v600
    %v602 = vld [vmem:[%s6] sm:$0x1]
    %v604 = vperm.slane %v602, 0
    %605 = vrot.lane.b32.xlu0 %v604, 64
    %v606 = vpop.permute.xlu0 %605
    %v608 = vadd.f32 %v580, %v606
    %610 = vrot.lane.b32.xlu0 %v608, 64
    %v611 = vpop.permute.xlu0 %610
    %v613 = vmul.f32 %v601, %v611
    %615 = vrot.lane.b32.xlu0 %v613, 64
    %v616 = vpop.permute.xlu0 %615
    %v618 = vadd.f32 %v551, %v616
    %v619 = vtanh.pop %v618
    %v620 = vsub.f32 1.0, %v601
    %622 = vrot.lane.b32.xlu0 %v619, 96
    %v623 = vpop.permute.xlu0 %622
    %v625 = vmul.f32 %v620, %v623
    %v626 = vmul.f32 %v601, %v515
    %v627 = vadd.f32 %v625, %v626
    %vm628 = vcmp.gt.s32.totalorder %v174, 4
    %v629 = vsel %vm628, %v627, %v515
    %v630 = vsel %vm628, %v627, 0.0
    %632 = vrot.lane.b32.xlu0 %v630, 96
    %v633 = vpop.permute.xlu0 %632
    %635 = vst.msk [vmem:[#allocation2 + $0x4] sm:$0x1] %vm181, %v633
    %s636 = sld [smem:[#allocation4 + $0x5]]
    %s637 = scalar_lea.vmem %s2, %s636
    %v638 = vld [vmem:[%s637] sm:$0x1]
    %v639 = vld [vmem:[%s3] sm:$0xff]
    %v640 = vld [vmem:[%s3 + $0x8] sm:$0xff]
    %v641 = vld [vmem:[%s3 + $0x10] sm:$0xff]
    %v642 = vld [vmem:[%s3 + $0x18] sm:$0xff]
    %v643 = vld [vmem:[%s5] sm:$0x1]
    %v645 = vsel %vm77, %v638, 0
    %647 = vmatpush.msra.mxu0 0.0
    %648 = vmatpush.msra.mxu0 0.0
    %649 = vmatpush.msra.mxu0 0.0
    %650 = vmatpush.msra.mxu0 0.0
    %651 = vmatpush.msra.mxu0 0.0
    %652 = vmatpush.msra.mxu0 0.0
    %653 = vmatpush.msra.mxu0 0.0
    %654 = vmatpush.msra.mxu0 0.0
    %655 = vmatpush.msra.mxu0 0.0
    %656 = vmatpush.msra.mxu0 0.0
    %657 = vmatpush.msra.mxu0 0.0
    %658 = vmatpush.msra.mxu0 0.0
    %659 = vmatpush.msra.mxu0 %v642
    %660 = vmatpush.msra.mxu0 %v641
    %661 = vmatpush.msra.mxu0 %v640
    %662 = vmatpush.msra.mxu0 %v639
    %663 = vmatmul.f32.gmra.mxu0 %v645
    %v664 = vpop.f32.mrf.mxu0
    %v665 = vadd.f32 %v643, %v664
    %666 = vdwg.mxu0
    %v667 = vld [vmem:[%s4] sm:$0xff]
    %v668 = vld [vmem:[%s4 + $0x8] sm:$0xff]
    %v669 = vld [vmem:[%s4 + $0x10] sm:$0xff]
    %v670 = vld [vmem:[%s4 + $0x18] sm:$0xff]
    %672 = vrot.lane.b32.xlu0 %v629, 96
    %v673 = vpop.permute.xlu0 %672
    %v674 = vsel %vm77, %v673, 0
    %676 = vmatpush.msra.mxu0 0.0
    %677 = vmatpush.msra.mxu0 0.0
    %678 = vmatpush.msra.mxu0 0.0
    %679 = vmatpush.msra.mxu0 0.0
    %680 = vmatpush.msra.mxu0 0.0
    %681 = vmatpush.msra.mxu0 0.0
    %682 = vmatpush.msra.mxu0 0.0
    %683 = vmatpush.msra.mxu0 0.0
    %684 = vmatpush.msra.mxu0 0.0
    %685 = vmatpush.msra.mxu0 0.0
    %686 = vmatpush.msra.mxu0 0.0
    %687 = vmatpush.msra.mxu0 0.0
    %688 = vmatpush.msra.mxu0 %v670
    %689 = vmatpush.msra.mxu0 %v669
    %690 = vmatpush.msra.mxu0 %v668
    %691 = vmatpush.msra.mxu0 %v667
    %692 = vmatmul.f32.gmra.mxu0 %v674
    %v693 = vpop.f32.mrf.mxu0
    %v694 = vadd.f32 0.0, %v693
    %695 = vdwg.mxu0
    %v696 = vadd.f32 %v665, %v694
    %v697 = vxor.u32 %v696, 2147483648
    %v698 = vmul.f32 %v697, 1.442695
    %v699 = vpow.pop %v698
    %v700 = vadd.f32 %v699, 1.0
    %v701 = vrcp.pop %v700
    %v702 = vmul.f32 %v700, %v701
    %v703 = vsub.f32 1.0, %v702
    %v704 = vmul.f32 %v701, %v703
    %v705 = vadd.f32 %v701, %v704
    %vm706 = vweird.f32 %v700
    %vm707 = vweird.f32 %v701
    %vm708 = vmor %vm706, %vm707
    %v709 = vsel %vm708, %v701, %v705
    %v710 = vand.u32 2147483647, %v700
    %vm711 = vcmp.eq.f32.partialorder %v710, 8.507059e+37
    %v712 = vand.u32 %v700, 2147483648
    %v713 = vor.u32 1.1754944e-38, %v712
    %v714 = vsel %vm711, %v713, %v709
    %v715 = vmul.f32 1.0, %v714
    %v716 = vld [vmem:[%s6] sm:$0x1]
    %v718 = vperm.slane %v716, 0
    %719 = vrot.lane.b32.xlu0 %v718, 64
    %v720 = vpop.permute.xlu0 %719
    %v722 = vadd.f32 %v694, %v720
    %724 = vrot.lane.b32.xlu0 %v722, 64
    %v725 = vpop.permute.xlu0 %724
    %v727 = vmul.f32 %v715, %v725
    %729 = vrot.lane.b32.xlu0 %v727, 64
    %v730 = vpop.permute.xlu0 %729
    %v732 = vadd.f32 %v665, %v730
    %v733 = vtanh.pop %v732
    %v734 = vsub.f32 1.0, %v715
    %736 = vrot.lane.b32.xlu0 %v733, 96
    %v737 = vpop.permute.xlu0 %736
    %v739 = vmul.f32 %v734, %v737
    %v740 = vmul.f32 %v715, %v629
    %v741 = vadd.f32 %v739, %v740
    %vm742 = vcmp.gt.s32.totalorder %v174, 5
    %v743 = vsel %vm742, %v741, %v629
    %v744 = vsel %vm742, %v741, 0.0
    %746 = vrot.lane.b32.xlu0 %v744, 96
    %v747 = vpop.permute.xlu0 %746
    %749 = vst.msk [vmem:[#allocation2 + $0x5] sm:$0x1] %vm181, %v747
    %s750 = sld [smem:[#allocation4 + $0x6]]
    %s751 = scalar_lea.vmem %s2, %s750
    %v752 = vld [vmem:[%s751] sm:$0x1]
    %v753 = vld [vmem:[%s3] sm:$0xff]
    %v754 = vld [vmem:[%s3 + $0x8] sm:$0xff]
    %v755 = vld [vmem:[%s3 + $0x10] sm:$0xff]
    %v756 = vld [vmem:[%s3 + $0x18] sm:$0xff]
    %v757 = vld [vmem:[%s5] sm:$0x1]
    %v759 = vsel %vm77, %v752, 0
    %761 = vmatpush.msra.mxu0 0.0
    %762 = vmatpush.msra.mxu0 0.0
    %763 = vmatpush.msra.mxu0 0.0
    %764 = vmatpush.msra.mxu0 0.0
    %765 = vmatpush.msra.mxu0 0.0
    %766 = vmatpush.msra.mxu0 0.0
    %767 = vmatpush.msra.mxu0 0.0
    %768 = vmatpush.msra.mxu0 0.0
    %769 = vmatpush.msra.mxu0 0.0
    %770 = vmatpush.msra.mxu0 0.0
    %771 = vmatpush.msra.mxu0 0.0
    %772 = vmatpush.msra.mxu0 0.0
    %773 = vmatpush.msra.mxu0 %v756
    %774 = vmatpush.msra.mxu0 %v755
    %775 = vmatpush.msra.mxu0 %v754
    %776 = vmatpush.msra.mxu0 %v753
    %777 = vmatmul.f32.gmra.mxu0 %v759
    %v778 = vpop.f32.mrf.mxu0
    %v779 = vadd.f32 %v757, %v778
    %780 = vdwg.mxu0
    %v781 = vld [vmem:[%s4] sm:$0xff]
    %v782 = vld [vmem:[%s4 + $0x8] sm:$0xff]
    %v783 = vld [vmem:[%s4 + $0x10] sm:$0xff]
    %v784 = vld [vmem:[%s4 + $0x18] sm:$0xff]
    %786 = vrot.lane.b32.xlu0 %v743, 96
    %v787 = vpop.permute.xlu0 %786
    %v788 = vsel %vm77, %v787, 0
    %790 = vmatpush.msra.mxu0 0.0
    %791 = vmatpush.msra.mxu0 0.0
    %792 = vmatpush.msra.mxu0 0.0
    %793 = vmatpush.msra.mxu0 0.0
    %794 = vmatpush.msra.mxu0 0.0
    %795 = vmatpush.msra.mxu0 0.0
    %796 = vmatpush.msra.mxu0 0.0
    %797 = vmatpush.msra.mxu0 0.0
    %798 = vmatpush.msra.mxu0 0.0
    %799 = vmatpush.msra.mxu0 0.0
    %800 = vmatpush.msra.mxu0 0.0
    %801 = vmatpush.msra.mxu0 0.0
    %802 = vmatpush.msra.mxu0 %v784
    %803 = vmatpush.msra.mxu0 %v783
    %804 = vmatpush.msra.mxu0 %v782
    %805 = vmatpush.msra.mxu0 %v781
    %806 = vmatmul.f32.gmra.mxu0 %v788
    %v807 = vpop.f32.mrf.mxu0
    %v808 = vadd.f32 0.0, %v807
    %809 = vdwg.mxu0
    %v810 = vadd.f32 %v779, %v808
    %v811 = vxor.u32 %v810, 2147483648
    %v812 = vmul.f32 %v811, 1.442695
    %v813 = vpow.pop %v812
    %v814 = vadd.f32 %v813, 1.0
    %v815 = vrcp.pop %v814
    %v816 = vmul.f32 %v814, %v815
    %v817 = vsub.f32 1.0, %v816
    %v818 = vmul.f32 %v815, %v817
    %v819 = vadd.f32 %v815, %v818
    %vm820 = vweird.f32 %v814
    %vm821 = vweird.f32 %v815
    %vm822 = vmor %vm820, %vm821
    %v823 = vsel %vm822, %v815, %v819
    %v824 = vand.u32 2147483647, %v814
    %vm825 = vcmp.eq.f32.partialorder %v824, 8.507059e+37
    %v826 = vand.u32 %v814, 2147483648
    %v827 = vor.u32 1.1754944e-38, %v826
    %v828 = vsel %vm825, %v827, %v823
    %v829 = vmul.f32 1.0, %v828
    %v830 = vld [vmem:[%s6] sm:$0x1]
    %v832 = vperm.slane %v830, 0
    %833 = vrot.lane.b32.xlu0 %v832, 64
    %v834 = vpop.permute.xlu0 %833
    %v836 = vadd.f32 %v808, %v834
    %838 = vrot.lane.b32.xlu0 %v836, 64
    %v839 = vpop.permute.xlu0 %838
    %v841 = vmul.f32 %v829, %v839
    %843 = vrot.lane.b32.xlu0 %v841, 64
    %v844 = vpop.permute.xlu0 %843
    %v846 = vadd.f32 %v779, %v844
    %v847 = vtanh.pop %v846
    %v848 = vsub.f32 1.0, %v829
    %850 = vrot.lane.b32.xlu0 %v847, 96
    %v851 = vpop.permute.xlu0 %850
    %v853 = vmul.f32 %v848, %v851
    %v854 = vmul.f32 %v829, %v743
    %v855 = vadd.f32 %v853, %v854
    %vm856 = vcmp.gt.s32.totalorder %v174, 6
    %v857 = vsel %vm856, %v855, %v743
    %v858 = vsel %vm856, %v855, 0.0
    %860 = vrot.lane.b32.xlu0 %v858, 96
    %v861 = vpop.permute.xlu0 %860
    %863 = vst.msk [vmem:[#allocation2 + $0x6] sm:$0x1] %vm181, %v861
    %s864 = sld [smem:[#allocation4 + $0x7]]
    %s865 = scalar_lea.vmem %s2, %s864
    %v866 = vld [vmem:[%s865] sm:$0x1]
    %v867 = vld [vmem:[%s3] sm:$0xff]
    %v868 = vld [vmem:[%s3 + $0x8] sm:$0xff]
    %v869 = vld [vmem:[%s3 + $0x10] sm:$0xff]
    %v870 = vld [vmem:[%s3 + $0x18] sm:$0xff]
    %v871 = vld [vmem:[%s5] sm:$0x1]
    %v873 = vsel %vm77, %v866, 0
    %875 = vmatpush.msra.mxu0 0.0
    %876 = vmatpush.msra.mxu0 0.0
    %877 = vmatpush.msra.mxu0 0.0
    %878 = vmatpush.msra.mxu0 0.0
    %879 = vmatpush.msra.mxu0 0.0
    %880 = vmatpush.msra.mxu0 0.0
    %881 = vmatpush.msra.mxu0 0.0
    %882 = vmatpush.msra.mxu0 0.0
    %883 = vmatpush.msra.mxu0 0.0
    %884 = vmatpush.msra.mxu0 0.0
    %885 = vmatpush.msra.mxu0 0.0
    %886 = vmatpush.msra.mxu0 0.0
    %887 = vmatpush.msra.mxu0 %v870
    %888 = vmatpush.msra.mxu0 %v869
    %889 = vmatpush.msra.mxu0 %v868
    %890 = vmatpush.msra.mxu0 %v867
    %891 = vmatmul.f32.gmra.mxu0 %v873
    %v892 = vpop.f32.mrf.mxu0
    %v893 = vadd.f32 %v871, %v892
    %894 = vdwg.mxu0
    %v895 = vld [vmem:[%s4] sm:$0xff]
    %v896 = vld [vmem:[%s4 + $0x8] sm:$0xff]
    %v897 = vld [vmem:[%s4 + $0x10] sm:$0xff]
    %v898 = vld [vmem:[%s4 + $0x18] sm:$0xff]
    %900 = vrot.lane.b32.xlu0 %v857, 96
    %v901 = vpop.permute.xlu0 %900
    %v902 = vsel %vm77, %v901, 0
    %904 = vmatpush.msra.mxu0 0.0
    %905 = vmatpush.msra.mxu0 0.0
    %906 = vmatpush.msra.mxu0 0.0
    %907 = vmatpush.msra.mxu0 0.0
    %908 = vmatpush.msra.mxu0 0.0
    %909 = vmatpush.msra.mxu0 0.0
    %910 = vmatpush.msra.mxu0 0.0
    %911 = vmatpush.msra.mxu0 0.0
    %912 = vmatpush.msra.mxu0 0.0
    %913 = vmatpush.msra.mxu0 0.0
    %914 = vmatpush.msra.mxu0 0.0
    %915 = vmatpush.msra.mxu0 0.0
    %916 = vmatpush.msra.mxu0 %v898
    %917 = vmatpush.msra.mxu0 %v897
    %918 = vmatpush.msra.mxu0 %v896
    %919 = vmatpush.msra.mxu0 %v895
    %920 = vmatmul.f32.gmra.mxu0 %v902
    %v921 = vpop.f32.mrf.mxu0
    %v922 = vadd.f32 0.0, %v921
    %923 = vdwg.mxu0
    %v924 = vadd.f32 %v893, %v922
    %v925 = vxor.u32 %v924, 2147483648
    %v926 = vmul.f32 %v925, 1.442695
    %v927 = vpow.pop %v926
    %v928 = vadd.f32 %v927, 1.0
    %v929 = vrcp.pop %v928
    %v930 = vmul.f32 %v928, %v929
    %v931 = vsub.f32 1.0, %v930
    %v932 = vmul.f32 %v929, %v931
    %v933 = vadd.f32 %v929, %v932
    %vm934 = vweird.f32 %v928
    %vm935 = vweird.f32 %v929
    %vm936 = vmor %vm934, %vm935
    %v937 = vsel %vm936, %v929, %v933
    %v938 = vand.u32 2147483647, %v928
    %vm939 = vcmp.eq.f32.partialorder %v938, 8.507059e+37
    %v940 = vand.u32 %v928, 2147483648
    %v941 = vor.u32 1.1754944e-38, %v940
    %v942 = vsel %vm939, %v941, %v937
    %v943 = vmul.f32 1.0, %v942
    %v944 = vld [vmem:[%s6] sm:$0x1]
    %v946 = vperm.slane %v944, 0
    %947 = vrot.lane.b32.xlu0 %v946, 64
    %v948 = vpop.permute.xlu0 %947
    %v950 = vadd.f32 %v922, %v948
    %952 = vrot.lane.b32.xlu0 %v950, 64
    %v953 = vpop.permute.xlu0 %952
    %v955 = vmul.f32 %v943, %v953
    %957 = vrot.lane.b32.xlu0 %v955, 64
    %v958 = vpop.permute.xlu0 %957
    %v960 = vadd.f32 %v893, %v958
    %v961 = vtanh.pop %v960
    %v962 = vsub.f32 1.0, %v943
    %964 = vrot.lane.b32.xlu0 %v961, 96
    %v965 = vpop.permute.xlu0 %964
    %v967 = vmul.f32 %v962, %v965
    %v968 = vmul.f32 %v943, %v857
    %v969 = vadd.f32 %v967, %v968
    %vm970 = vcmp.gt.s32.totalorder %v174, 7
    %v971 = vsel %vm970, %v969, %v857
    %v972 = vsel %vm970, %v969, 0.0
    %974 = vrot.lane.b32.xlu0 %v972, 96
    %v975 = vpop.permute.xlu0 %974
    %977 = vst.msk [vmem:[#allocation2 + $0x7] sm:$0x1] %vm181, %v975
    %v978 = vld [vmem:[#allocation2] sm:$0xff]
    %v979 = vlaneseq
    %v980 = vand.u32 %v979, 127
    %vm981 = vcmp.eq.s32.totalorder %v980, 1
    %v982 = vsel %vm981, 1, 0
    %v983 = vcvt.s32.f32 %v982
    %v984 = vld [vmem:[%s2] sm:$0xff]
    %v985 = vld [vmem:[%s2 + $0x8] sm:$0xff]
    %v986 = vld [vmem:[%s2 + $0x10] sm:$0xff]
    %v987 = vld [vmem:[%s2 + $0x18] sm:$0xff]
    %v988 = vld [vmem:[%s2 + $0x20] sm:$0xff]
    %v989 = vld [vmem:[%s2 + $0x28] sm:$0xff]
    %v990 = vld [vmem:[%s2 + $0x30] sm:$0xff]
    %v991 = vld [vmem:[%s2 + $0x38] sm:$0xff]
    %vm992 = vcmask 523264
    %v994 = vsel %vm992, %v983, 0
    %996 = vmatpush.msra.mxu0 0.0
    %997 = vmatpush.msra.mxu0 0.0
    %998 = vmatpush.msra.mxu0 0.0
    %999 = vmatpush.msra.mxu0 0.0
    %1000 = vmatpush.msra.mxu0 0.0
    %1001 = vmatpush.msra.mxu0 0.0
    %1002 = vmatpush.msra.mxu0 0.0
    %1003 = vmatpush.msra.mxu0 0.0
    %1004 = vmatpush.msra.mxu0 %v991
    %1005 = vmatpush.msra.mxu0 %v990
    %1006 = vmatpush.msra.mxu0 %v989
    %1007 = vmatpush.msra.mxu0 %v988
    %1008 = vmatpush.msra.mxu0 %v987
    %1009 = vmatpush.msra.mxu0 %v986
    %1010 = vmatpush.msra.mxu0 %v985
    %1011 = vmatpush.msra.mxu0 %v984
    %1012 = vmatmul.f32.gmra.mxu0 %v994
    %v1013 = vpop.f32.mrf.mxu0
    %v1014 = vadd.f32 0.0, %v1013
    %1015 = vdwg.mxu0
    %v1016 = vld [vmem:[%s7] sm:$0xff]
    %v1017 = vld [vmem:[%s7 + $0x8] sm:$0xff]
    %v1018 = vld [vmem:[%s7 + $0x10] sm:$0xff]
    %v1019 = vld [vmem:[%s7 + $0x18] sm:$0xff]
    %v1020 = vld [vmem:[%s9] sm:$0x1]
    %v1022 = vsel %vm77, %v1014, 0
    %1024 = vmatpush.msra.mxu0 0.0
    %1025 = vmatpush.msra.mxu0 0.0
    %1026 = vmatpush.msra.mxu0 0.0
    %1027 = vmatpush.msra.mxu0 0.0
    %1028 = vmatpush.msra.mxu0 0.0
    %1029 = vmatpush.msra.mxu0 0.0
    %1030 = vmatpush.msra.mxu0 0.0
    %1031 = vmatpush.msra.mxu0 0.0
    %1032 = vmatpush.msra.mxu0 0.0
    %1033 = vmatpush.msra.mxu0 0.0
    %1034 = vmatpush.msra.mxu0 0.0
    %1035 = vmatpush.msra.mxu0 0.0
    %1036 = vmatpush.msra.mxu0 %v1019
    %1037 = vmatpush.msra.mxu0 %v1018
    %1038 = vmatpush.msra.mxu0 %v1017
    %1039 = vmatpush.msra.mxu0 %v1016
    %1040 = vmatmul.f32.gmra.mxu0 %v1022
    %v1041 = vpop.f32.mrf.mxu0
    %v1042 = vadd.f32 %v1020, %v1041
    %1043 = vdwg.mxu0
    %v1044 = vld [vmem:[%s8] sm:$0xff]
    %v1045 = vld [vmem:[%s8 + $0x8] sm:$0xff]
    %v1046 = vld [vmem:[%s8 + $0x10] sm:$0xff]
    %v1047 = vld [vmem:[%s8 + $0x18] sm:$0xff]
    %1049 = vrot.lane.b32.xlu0 %v971, 96
    %v1050 = vpop.permute.xlu0 %1049
    %v1051 = vsel %vm77, %v1050, 0
    %1053 = vmatpush.msra.mxu0 0.0
    %1054 = vmatpush.msra.mxu0 0.0
    %1055 = vmatpush.msra.mxu0 0.0
    %1056 = vmatpush.msra.mxu0 0.0
    %1057 = vmatpush.msra.mxu0 0.0
    %1058 = vmatpush.msra.mxu0 0.0
    %1059 = vmatpush.msra.mxu0 0.0
    %1060 = vmatpush.msra.mxu0 0.0
    %1061 = vmatpush.msra.mxu0 0.0
    %1062 = vmatpush.msra.mxu0 0.0
    %1063 = vmatpush.msra.mxu0 0.0
    %1064 = vmatpush.msra.mxu0 0.0
    %1065 = vmatpush.msra.mxu0 %v1047
    %1066 = vmatpush.msra.mxu0 %v1046
    %1067 = vmatpush.msra.mxu0 %v1045
    %1068 = vmatpush.msra.mxu0 %v1044
    %1069 = vmatmul.f32.gmra.mxu0 %v1051
    %v1070 = vpop.f32.mrf.mxu0
    %v1071 = vadd.f32 0.0, %v1070
    %1072 = vdwg.mxu0
    %v1073 = vadd.f32 %v1042, %v1071
    %v1074 = vxor.u32 %v1073, 2147483648
    %v1075 = vmul.f32 %v1074, 1.442695
    %v1076 = vpow.pop %v1075
    %v1077 = vadd.f32 %v1076, 1.0
    %v1078 = vrcp.pop %v1077
    %v1079 = vmul.f32 %v1077, %v1078
    %v1080 = vsub.f32 1.0, %v1079
    %v1081 = vmul.f32 %v1078, %v1080
    %v1082 = vadd.f32 %v1078, %v1081
    %vm1083 = vweird.f32 %v1077
    %vm1084 = vweird.f32 %v1078
    %vm1085 = vmor %vm1083, %vm1084
    %v1086 = vsel %vm1085, %v1078, %v1082
    %v1087 = vand.u32 2147483647, %v1077
    %vm1088 = vcmp.eq.f32.partialorder %v1087, 8.507059e+37
    %v1089 = vand.u32 %v1077, 2147483648
    %v1090 = vor.u32 1.1754944e-38, %v1089
    %v1091 = vsel %vm1088, %v1090, %v1086
    %v1092 = vmul.f32 1.0, %v1091
    %v1093 = vld [vmem:[%s10] sm:$0x1]
    %v1095 = vperm.slane %v1093, 0
    %1096 = vrot.lane.b32.xlu0 %v1095, 64
    %v1097 = vpop.permute.xlu0 %1096
    %v1099 = vadd.f32 %v1071, %v1097
    %1101 = vrot.lane.b32.xlu0 %v1099, 64
    %v1102 = vpop.permute.xlu0 %1101
    %v1104 = vmul.f32 %v1092, %v1102
    %1106 = vrot.lane.b32.xlu0 %v1104, 64
    %v1107 = vpop.permute.xlu0 %1106
    %v1109 = vadd.f32 %v1042, %v1107
    %v1110 = vtanh.pop %v1109
    %v1111 = vsub.f32 1.0, %v1092
    %1113 = vrot.lane.b32.xlu0 %v1110, 96
    %v1114 = vpop.permute.xlu0 %1113
    %v1116 = vmul.f32 %v1111, %v1114
    %v1117 = vmul.f32 %v1092, %v971
    %v1118 = vadd.f32 %v1116, %v1117
    %1120 = vrot.lane.b32.xlu0 %v1118, 96
    %v1121 = vpop.permute.xlu0 %1120
    %v1122 = vsel %vm77, %v1121, 0
    %v1125 = vsel %vm77, %v978, 0
    %1127 = vmatpush.xpose.msra.mxu0 0.0
    %1128 = vmatpush.xpose.msra.mxu0 0.0
    %1129 = vmatpush.xpose.msra.mxu0 0.0
    %1130 = vmatpush.xpose.msra.mxu0 0.0
    %1131 = vmatpush.xpose.msra.mxu0 0.0
    %1132 = vmatpush.xpose.msra.mxu0 0.0
    %1133 = vmatpush.xpose.msra.mxu0 0.0
    %1134 = vmatpush.xpose.msra.mxu0 0.0
    %1135 = vmatpush.xpose.msra.mxu0 0.0
    %1136 = vmatpush.xpose.msra.mxu0 0.0
    %1137 = vmatpush.xpose.msra.mxu0 0.0
    %1138 = vmatpush.xpose.msra.mxu0 0.0
    %1139 = vmatpush.xpose.msra.mxu0 0.0
    %1140 = vmatpush.xpose.msra.mxu0 0.0
    %1141 = vmatpush.xpose.msra.mxu0 0.0
    %1142 = vmatpush.xpose.msra.mxu0 %v1125
    %1143 = vmatmul.f32.gmra.mxu0 %v1122
    %v1144 = vpop.f32.mrf.mxu0
    %v1145 = vadd.f32 0.0, %v1144
    %1146 = vdwg.mxu0
    %vm1147 = vcmask 57344
    %v1148 = vsel %vm1147, %v1145, -inf
    %1149 = vmax.xlane.f32.xlu0 %v1148
    %v1150 = vpop.xlane.xlu0 %1149
    %v1151 = vsub.f32 %v1145, %v1150
    %v1152 = vmul.f32 %v1151, 1.442695
    %v1153 = vpow.pop %v1152
    %v1154 = vsel %vm1147, %v1153, 0.0
    %1155 = vadd.xlane.f32.xlu0 %v1154
    %v1156 = vpop.xlane.xlu0 %1155
    %v1157 = vrcp.pop %v1156
    %v1158 = vmul.f32 %v1156, %v1157
    %v1159 = vsub.f32 1.0, %v1158
    %v1160 = vmul.f32 %v1157, %v1159
    %v1161 = vadd.f32 %v1157, %v1160
    %vm1162 = vweird.f32 %v1156
    %vm1163 = vweird.f32 %v1157
    %vm1164 = vmor %vm1162, %vm1163
    %v1165 = vsel %vm1164, %v1157, %v1161
    %v1166 = vand.u32 2147483647, %v1156
    %vm1167 = vcmp.eq.f32.partialorder %v1166, 8.507059e+37
    %v1168 = vand.u32 %v1156, 2147483648
    %v1169 = vor.u32 1.1754944e-38, %v1168
    %v1170 = vsel %vm1167, %v1169, %v1165
    %v1171 = vmul.f32 %v1153, %v1170
    %vm1172 = vcmask 64512
    %v1174 = vsel %vm1172, %v1171, 0
    %1176 = vmatpush.msra.mxu0 0.0
    %1177 = vmatpush.msra.mxu0 0.0
    %1178 = vmatpush.msra.mxu0 0.0
    %1179 = vmatpush.msra.mxu0 0.0
    %1180 = vmatpush.msra.mxu0 0.0
    %1181 = vmatpush.msra.mxu0 0.0
    %1182 = vmatpush.msra.mxu0 0.0
    %1183 = vmatpush.msra.mxu0 0.0
    %1184 = vmatpush.msra.mxu0 0.0
    %1185 = vmatpush.msra.mxu0 0.0
    %1186 = vmatpush.msra.mxu0 0.0
    %1187 = vmatpush.msra.mxu0 0.0
    %1188 = vmatpush.msra.mxu0 0.0
    %1189 = vmatpush.msra.mxu0 0.0
    %1190 = vmatpush.msra.mxu0 0.0
    %1191 = vmatpush.msra.mxu0 %v978
    %1192 = vmatmul.f32.gmra.mxu0 %v1174
    %v1193 = vpop.f32.mrf.mxu0
    %v1194 = vadd.f32 0.0, %v1193
    %1195 = vdwg.mxu0
    %1198 = vrot.lane.b32.xlu0 %v1194, 32
    %v1199 = vpop.permute.xlu0 %1198
    %v1201 = vsel %vm77, %v1121, %v1199
    %v1202 = vld [vmem:[%s11] sm:$0xff]
    %v1203 = vld [vmem:[%s11 + $0x8] sm:$0xff]
    %v1204 = vld [vmem:[%s11 + $0x10] sm:$0xff]
    %v1205 = vld [vmem:[%s11 + $0x18] sm:$0xff]
    %v1206 = vld [vmem:[%s11 + $0x20] sm:$0xff]
    %v1207 = vld [vmem:[%s11 + $0x28] sm:$0xff]
    %v1208 = vld [vmem:[%s11 + $0x30] sm:$0xff]
    %v1209 = vld [vmem:[%s11 + $0x38] sm:$0xff]
    %v1210 = vld [vmem:[%s12] sm:$0x1]
    %v1212 = vsel %vm992, %v1201, 0
    %1214 = vmatpush.msra.mxu0 0.0
    %1215 = vmatpush.msra.mxu0 0.0
    %1216 = vmatpush.msra.mxu0 0.0
    %1217 = vmatpush.msra.mxu0 0.0
    %1218 = vmatpush.msra.mxu0 0.0
    %1219 = vmatpush.msra.mxu0 0.0
    %1220 = vmatpush.msra.mxu0 0.0
    %1221 = vmatpush.msra.mxu0 0.0
    %1222 = vmatpush.msra.mxu0 %v1209
    %1223 = vmatpush.msra.mxu0 %v1208
    %1224 = vmatpush.msra.mxu0 %v1207
    %1225 = vmatpush.msra.mxu0 %v1206
    %1226 = vmatpush.msra.mxu0 %v1205
    %1227 = vmatpush.msra.mxu0 %v1204
    %1228 = vmatpush.msra.mxu0 %v1203
    %1229 = vmatpush.msra.mxu0 %v1202
    %1230 = vmatmul.f32.gmra.mxu0 %v1212
    %v1231 = vpop.f32.mrf.mxu0
    %v1232 = vadd.f32 %v1210, %v1231
    %1233 = vdwg.mxu0
    %v1234 = vtanh.pop %v1232
    %v1235 = vld [vmem:[%s13] sm:$0xff]
    %v1236 = vld [vmem:[%s13 + $0x8] sm:$0xff]
    %v1237 = vld [vmem:[%s13 + $0x10] sm:$0xff]
    %v1238 = vld [vmem:[%s13 + $0x18] sm:$0xff]
    %v1239 = vld [vmem:[%s14] sm:$0x1]
    %v1241 = vsel %vm77, %v1234, 0
    %1243 = vmatpush.msra.mxu0 0.0
    %1244 = vmatpush.msra.mxu0 0.0
    %1245 = vmatpush.msra.mxu0 0.0
    %1246 = vmatpush.msra.mxu0 0.0
    %1247 = vmatpush.msra.mxu0 0.0
    %1248 = vmatpush.msra.mxu0 0.0
    %1249 = vmatpush.msra.mxu0 0.0
    %1250 = vmatpush.msra.mxu0 0.0
    %1251 = vmatpush.msra.mxu0 0.0
    %1252 = vmatpush.msra.mxu0 0.0
    %1253 = vmatpush.msra.mxu0 0.0
    %1254 = vmatpush.msra.mxu0 0.0
    %1255 = vmatpush.msra.mxu0 %v1238
    %1256 = vmatpush.msra.mxu0 %v1237
    %1257 = vmatpush.msra.mxu0 %v1236
    %1258 = vmatpush.msra.mxu0 %v1235
    %1259 = vmatmul.f32.gmra.mxu0 %v1241
    %v1260 = vpop.f32.mrf.mxu0
    %v1261 = vadd.f32 %v1239, %v1260
    %1262 = vdwg.mxu0
    %vm1263 = vcmask 1040384
    %v1264 = vsel %vm1263, %v1261, -inf
    %1265 = vmax.xlane.f32.xlu0 %v1264
    %v1266 = vpop.xlane.xlu0 %1265
    %v1267 = vsub.f32 %v1261, %v1266
    %v1268 = vmul.f32 %v1267, 1.442695
    %v1269 = vpow.pop %v1268
    %v1270 = vsel %vm1263, %v1269, 0.0
    %1271 = vadd.xlane.f32.xlu0 %v1270
    %v1272 = vpop.xlane.xlu0 %1271
    %v1273 = vrcp.pop %v1272
    %vm1274 = vcmp.ge.f32.partialorder %v1261, %v1266
    %v1275 = vsel %vm1274, %v980, 128
    %v1276 = vsel %vm1263, %v1275, 2147483647
    %v1277 = vand.u32 %v1276, 65535
    %v1278 = vshra.s32 %v1276, 16
    %v1279 = vcvt.s32.f32 %v1277
    %v1280 = vcvt.s32.f32 %v1278
    %1281 = vmin.xlane.f32.xlu0 %v1280
    %v1282 = vpop.xlane.xlu0 %1281
    %vm1283 = vcmp.eq.f32.partialorder %v1280, %v1282
    %v1284 = vsel %vm1283, %v1279, inf
    %1285 = vmin.xlane.f32.xlu0 %v1284
    %v1286 = vpop.xlane.xlu0 %1285
    %v1287 = vcvt.f32.s32 %v1286
    %v1288 = vcvt.f32.s32 %v1282
    %v1289 = vshll.u32 %v1288, 16
    %v1290 = vadd.s32 %v1289, %v1287
    %vm1291 = vcmp.eq.s32.totalorder %v980, 0
    %v1292 = vsel %vm1291, %v1290, 0
    %v1293 = vsel %vm1291, %v1273, 0.0
    %vm1294 = vcmp.eq.s32.totalorder %v980, %v1290
    %v1295 = vsel %vm1294, 1, 0
    %v1296 = vcvt.s32.f32 %v1295
    %v1298 = vsel %vm992, %v1296, 0
    %1300 = vmatpush.msra.mxu0 0.0
    %1301 = vmatpush.msra.mxu0 0.0
    %1302 = vmatpush.msra.mxu0 0.0
    %1303 = vmatpush.msra.mxu0 0.0
    %1304 = vmatpush.msra.mxu0 0.0
    %1305 = vmatpush.msra.mxu0 0.0
    %1306 = vmatpush.msra.mxu0 0.0
    %1307 = vmatpush.msra.mxu0 0.0
    %1308 = vmatpush.msra.mxu0 %v991
    %1309 = vmatpush.msra.mxu0 %v990
    %1310 = vmatpush.msra.mxu0 %v989
    %1311 = vmatpush.msra.mxu0 %v988
    %1312 = vmatpush.msra.mxu0 %v987
    %1313 = vmatpush.msra.mxu0 %v986
    %1314 = vmatpush.msra.mxu0 %v985
    %1315 = vmatpush.msra.mxu0 %v984
    %1316 = vmatmul.f32.gmra.mxu0 %v1298
    %v1317 = vpop.f32.mrf.mxu0
    %v1318 = vadd.f32 0.0, %v1317
    %1319 = vdwg.mxu0
    %v1321 = vsel %vm77, %v1318, 0
    %1323 = vmatpush.msra.mxu0 0.0
    %1324 = vmatpush.msra.mxu0 0.0
    %1325 = vmatpush.msra.mxu0 0.0
    %1326 = vmatpush.msra.mxu0 0.0
    %1327 = vmatpush.msra.mxu0 0.0
    %1328 = vmatpush.msra.mxu0 0.0
    %1329 = vmatpush.msra.mxu0 0.0
    %1330 = vmatpush.msra.mxu0 0.0
    %1331 = vmatpush.msra.mxu0 0.0
    %1332 = vmatpush.msra.mxu0 0.0
    %1333 = vmatpush.msra.mxu0 0.0
    %1334 = vmatpush.msra.mxu0 0.0
    %1335 = vmatpush.msra.mxu0 %v1019
    %1336 = vmatpush.msra.mxu0 %v1018
    %1337 = vmatpush.msra.mxu0 %v1017
    %1338 = vmatpush.msra.mxu0 %v1016
    %1339 = vmatmul.f32.gmra.mxu0 %v1321
    %v1340 = vpop.f32.mrf.mxu0
    %v1341 = vadd.f32 %v1020, %v1340
    %1342 = vdwg.mxu0
    %1343 = vmatpush.msra.mxu0 0.0
    %1344 = vmatpush.msra.mxu0 0.0
    %1345 = vmatpush.msra.mxu0 0.0
    %1346 = vmatpush.msra.mxu0 0.0
    %1347 = vmatpush.msra.mxu0 0.0
    %1348 = vmatpush.msra.mxu0 0.0
    %1349 = vmatpush.msra.mxu0 0.0
    %1350 = vmatpush.msra.mxu0 0.0
    %1351 = vmatpush.msra.mxu0 0.0
    %1352 = vmatpush.msra.mxu0 0.0
    %1353 = vmatpush.msra.mxu0 0.0
    %1354 = vmatpush.msra.mxu0 0.0
    %1355 = vmatpush.msra.mxu0 %v1047
    %1356 = vmatpush.msra.mxu0 %v1046
    %1357 = vmatpush.msra.mxu0 %v1045
    %1358 = vmatpush.msra.mxu0 %v1044
    %1359 = vmatmul.f32.gmra.mxu0 %v1122
    %v1360 = vpop.f32.mrf.mxu0
    %v1361 = vadd.f32 0.0, %v1360
    %1362 = vdwg.mxu0
    %v1363 = vadd.f32 %v1341, %v1361
    %v1364 = vxor.u32 %v1363, 2147483648
    %v1365 = vmul.f32 %v1364, 1.442695
    %v1366 = vpow.pop %v1365
    %v1367 = vadd.f32 %v1366, 1.0
    %v1368 = vrcp.pop %v1367
    %v1369 = vmul.f32 %v1367, %v1368
    %v1370 = vsub.f32 1.0, %v1369
    %v1371 = vmul.f32 %v1368, %v1370
    %v1372 = vadd.f32 %v1368, %v1371
    %vm1373 = vweird.f32 %v1367
    %vm1374 = vweird.f32 %v1368
    %vm1375 = vmor %vm1373, %vm1374
    %v1376 = vsel %vm1375, %v1368, %v1372
    %v1377 = vand.u32 2147483647, %v1367
    %vm1378 = vcmp.eq.f32.partialorder %v1377, 8.507059e+37
    %v1379 = vand.u32 %v1367, 2147483648
    %v1380 = vor.u32 1.1754944e-38, %v1379
    %v1381 = vsel %vm1378, %v1380, %v1376
    %v1382 = vmul.f32 1.0, %v1381
    %v1383 = vadd.f32 %v1361, %v1097
    %1385 = vrot.lane.b32.xlu0 %v1383, 64
    %v1386 = vpop.permute.xlu0 %1385
    %v1388 = vmul.f32 %v1382, %v1386
    %1390 = vrot.lane.b32.xlu0 %v1388, 64
    %v1391 = vpop.permute.xlu0 %1390
    %v1393 = vadd.f32 %v1341, %v1391
    %v1394 = vtanh.pop %v1393
    %v1395 = vsub.f32 1.0, %v1382
    %1397 = vrot.lane.b32.xlu0 %v1394, 96
    %v1398 = vpop.permute.xlu0 %1397
    %v1400 = vmul.f32 %v1395, %v1398
    %v1401 = vmul.f32 %v1382, %v1118
    %v1402 = vadd.f32 %v1400, %v1401
    %1404 = vrot.lane.b32.xlu0 %v1402, 96
    %v1405 = vpop.permute.xlu0 %1404
    %v1406 = vsel %vm77, %v1405, 0
    %1408 = vmatpush.xpose.msra.mxu0 0.0
    %1409 = vmatpush.xpose.msra.mxu0 0.0
    %1410 = vmatpush.xpose.msra.mxu0 0.0
    %1411 = vmatpush.xpose.msra.mxu0 0.0
    %1412 = vmatpush.xpose.msra.mxu0 0.0
    %1413 = vmatpush.xpose.msra.mxu0 0.0
    %1414 = vmatpush.xpose.msra.mxu0 0.0
    %1415 = vmatpush.xpose.msra.mxu0 0.0
    %1416 = vmatpush.xpose.msra.mxu0 0.0
    %1417 = vmatpush.xpose.msra.mxu0 0.0
    %1418 = vmatpush.xpose.msra.mxu0 0.0
    %1419 = vmatpush.xpose.msra.mxu0 0.0
    %1420 = vmatpush.xpose.msra.mxu0 0.0
    %1421 = vmatpush.xpose.msra.mxu0 0.0
    %1422 = vmatpush.xpose.msra.mxu0 0.0
    %1423 = vmatpush.xpose.msra.mxu0 %v1125
    %1424 = vmatmul.f32.gmra.mxu0 %v1406
    %v1425 = vpop.f32.mrf.mxu0
    %v1426 = vadd.f32 0.0, %v1425
    %1427 = vdwg.mxu0
    %v1428 = vsel %vm1147, %v1426, -inf
    %1429 = vmax.xlane.f32.xlu0 %v1428
    %v1430 = vpop.xlane.xlu0 %1429
    %v1431 = vsub.f32 %v1426, %v1430
    %v1432 = vmul.f32 %v1431, 1.442695
    %v1433 = vpow.pop %v1432
    %v1434 = vsel %vm1147, %v1433, 0.0
    %1435 = vadd.xlane.f32.xlu0 %v1434
    %v1436 = vpop.xlane.xlu0 %1435
    %v1437 = vrcp.pop %v1436
    %v1438 = vmul.f32 %v1436, %v1437
    %v1439 = vsub.f32 1.0, %v1438
    %v1440 = vmul.f32 %v1437, %v1439
    %v1441 = vadd.f32 %v1437, %v1440
    %vm1442 = vweird.f32 %v1436
    %vm1443 = vweird.f32 %v1437
    %vm1444 = vmor %vm1442, %vm1443
    %v1445 = vsel %vm1444, %v1437, %v1441
    %v1446 = vand.u32 2147483647, %v1436
    %vm1447 = vcmp.eq.f32.partialorder %v1446, 8.507059e+37
    %v1448 = vand.u32 %v1436, 2147483648
    %v1449 = vor.u32 1.1754944e-38, %v1448
    %v1450 = vsel %vm1447, %v1449, %v1445
    %v1451 = vmul.f32 %v1433, %v1450
    %v1453 = vsel %vm1172, %v1451, 0
    %1455 = vmatpush.msra.mxu0 0.0
    %1456 = vmatpush.msra.mxu0 0.0
    %1457 = vmatpush.msra.mxu0 0.0
    %1458 = vmatpush.msra.mxu0 0.0
    %1459 = vmatpush.msra.mxu0 0.0
    %1460 = vmatpush.msra.mxu0 0.0
    %1461 = vmatpush.msra.mxu0 0.0
    %1462 = vmatpush.msra.mxu0 0.0
    %1463 = vmatpush.msra.mxu0 0.0
    %1464 = vmatpush.msra.mxu0 0.0
    %1465 = vmatpush.msra.mxu0 0.0
    %1466 = vmatpush.msra.mxu0 0.0
    %1467 = vmatpush.msra.mxu0 0.0
    %1468 = vmatpush.msra.mxu0 0.0
    %1469 = vmatpush.msra.mxu0 0.0
    %1470 = vmatpush.msra.mxu0 %v978
    %1471 = vmatmul.f32.gmra.mxu0 %v1453
    %v1472 = vpop.f32.mrf.mxu0
    %v1473 = vadd.f32 0.0, %v1472
    %1474 = vdwg.mxu0
    %1477 = vrot.lane.b32.xlu0 %v1473, 32
    %v1478 = vpop.permute.xlu0 %1477
    %v1480 = vsel %vm77, %v1405, %v1478
    %v1482 = vsel %vm992, %v1480, 0
    %1484 = vmatpush.msra.mxu0 0.0
    %1485 = vmatpush.msra.mxu0 0.0
    %1486 = vmatpush.msra.mxu0 0.0
    %1487 = vmatpush.msra.mxu0 0.0
    %1488 = vmatpush.msra.mxu0 0.0
    %1489 = vmatpush.msra.mxu0 0.0
    %1490 = vmatpush.msra.mxu0 0.0
    %1491 = vmatpush.msra.mxu0 0.0
    %1492 = vmatpush.msra.mxu0 %v1209
    %1493 = vmatpush.msra.mxu0 %v1208
    %1494 = vmatpush.msra.mxu0 %v1207
    %1495 = vmatpush.msra.mxu0 %v1206
    %1496 = vmatpush.msra.mxu0 %v1205
    %1497 = vmatpush.msra.mxu0 %v1204
    %1498 = vmatpush.msra.mxu0 %v1203
    %1499 = vmatpush.msra.mxu0 %v1202
    %1500 = vmatmul.f32.gmra.mxu0 %v1482
    %v1501 = vpop.f32.mrf.mxu0
    %v1502 = vadd.f32 %v1210, %v1501
    %1503 = vdwg.mxu0
    %v1504 = vtanh.pop %v1502
    %v1506 = vsel %vm77, %v1504, 0
    %1508 = vmatpush.msra.mxu0 0.0
    %1509 = vmatpush.msra.mxu0 0.0
    %1510 = vmatpush.msra.mxu0 0.0
    %1511 = vmatpush.msra.mxu0 0.0
    %1512 = vmatpush.msra.mxu0 0.0
    %1513 = vmatpush.msra.mxu0 0.0
    %1514 = vmatpush.msra.mxu0 0.0
    %1515 = vmatpush.msra.mxu0 0.0
    %1516 = vmatpush.msra.mxu0 0.0
    %1517 = vmatpush.msra.mxu0 0.0
    %1518 = vmatpush.msra.mxu0 0.0
    %1519 = vmatpush.msra.mxu0 0.0
    %1520 = vmatpush.msra.mxu0 %v1238
    %1521 = vmatpush.msra.mxu0 %v1237
    %1522 = vmatpush.msra.mxu0 %v1236
    %1523 = vmatpush.msra.mxu0 %v1235
    %1524 = vmatmul.f32.gmra.mxu0 %v1506
    %v1525 = vpop.f32.mrf.mxu0
    %v1526 = vadd.f32 %v1239, %v1525
    %1527 = vdwg.mxu0
    %v1528 = vsel %vm1263, %v1526, -inf
    %1529 = vmax.xlane.f32.xlu0 %v1528
    %v1530 = vpop.xlane.xlu0 %1529
    %v1531 = vsub.f32 %v1526, %v1530
    %v1532 = vmul.f32 %v1531, 1.442695
    %v1533 = vpow.pop %v1532
    %v1534 = vsel %vm1263, %v1533, 0.0
    %1535 = vadd.xlane.f32.xlu0 %v1534
    %v1536 = vpop.xlane.xlu0 %1535
    %v1537 = vrcp.pop %v1536
    %vm1538 = vcmp.ge.f32.partialorder %v1526, %v1530
    %v1539 = vsel %vm1538, %v980, 128
    %v1540 = vsel %vm1263, %v1539, 2147483647
    %v1541 = vand.u32 %v1540, 65535
    %v1542 = vshra.s32 %v1540, 16
    %v1543 = vcvt.s32.f32 %v1541
    %v1544 = vcvt.s32.f32 %v1542
    %1545 = vmin.xlane.f32.xlu0 %v1544
    %v1546 = vpop.xlane.xlu0 %1545
    %vm1547 = vcmp.eq.f32.partialorder %v1544, %v1546
    %v1548 = vsel %vm1547, %v1543, inf
    %1549 = vmin.xlane.f32.xlu0 %v1548
    %v1550 = vpop.xlane.xlu0 %1549
    %v1551 = vcvt.f32.s32 %v1550
    %v1552 = vcvt.f32.s32 %v1546
    %v1553 = vshll.u32 %v1552, 16
    %v1554 = vadd.s32 %v1553, %v1551
    %v1555 = vsel %vm981, %v1554, %v1292
    %v1556 = vsel %vm981, %v1537, %v1293
    %vm1557 = vcmp.eq.s32.totalorder %v980, %v1554
    %v1558 = vsel %vm1557, 1, 0
    %v1559 = vcvt.s32.f32 %v1558
    %v1561 = vsel %vm992, %v1559, 0
    %1563 = vmatpush.msra.mxu0 0.0
    %1564 = vmatpush.msra.mxu0 0.0
    %1565 = vmatpush.msra.mxu0 0.0
    %1566 = vmatpush.msra.mxu0 0.0
    %1567 = vmatpush.msra.mxu0 0.0
    %1568 = vmatpush.msra.mxu0 0.0
    %1569 = vmatpush.msra.mxu0 0.0
    %1570 = vmatpush.msra.mxu0 0.0
    %1571 = vmatpush.msra.mxu0 %v991
    %1572 = vmatpush.msra.mxu0 %v990
    %1573 = vmatpush.msra.mxu0 %v989
    %1574 = vmatpush.msra.mxu0 %v988
    %1575 = vmatpush.msra.mxu0 %v987
    %1576 = vmatpush.msra.mxu0 %v986
    %1577 = vmatpush.msra.mxu0 %v985
    %1578 = vmatpush.msra.mxu0 %v984
    %1579 = vmatmul.f32.gmra.mxu0 %v1561
    %v1580 = vpop.f32.mrf.mxu0
    %v1581 = vadd.f32 0.0, %v1580
    %1582 = vdwg.mxu0
    %v1584 = vsel %vm77, %v1581, 0
    %1586 = vmatpush.msra.mxu0 0.0
    %1587 = vmatpush.msra.mxu0 0.0
    %1588 = vmatpush.msra.mxu0 0.0
    %1589 = vmatpush.msra.mxu0 0.0
    %1590 = vmatpush.msra.mxu0 0.0
    %1591 = vmatpush.msra.mxu0 0.0
    %1592 = vmatpush.msra.mxu0 0.0
    %1593 = vmatpush.msra.mxu0 0.0
    %1594 = vmatpush.msra.mxu0 0.0
    %1595 = vmatpush.msra.mxu0 0.0
    %1596 = vmatpush.msra.mxu0 0.0
    %1597 = vmatpush.msra.mxu0 0.0
    %1598 = vmatpush.msra.mxu0 %v1019
    %1599 = vmatpush.msra.mxu0 %v1018
    %1600 = vmatpush.msra.mxu0 %v1017
    %1601 = vmatpush.msra.mxu0 %v1016
    %1602 = vmatmul.f32.gmra.mxu0 %v1584
    %v1603 = vpop.f32.mrf.mxu0
    %v1604 = vadd.f32 %v1020, %v1603
    %1605 = vdwg.mxu0
    %1606 = vmatpush.msra.mxu0 0.0
    %1607 = vmatpush.msra.mxu0 0.0
    %1608 = vmatpush.msra.mxu0 0.0
    %1609 = vmatpush.msra.mxu0 0.0
    %1610 = vmatpush.msra.mxu0 0.0
    %1611 = vmatpush.msra.mxu0 0.0
    %1612 = vmatpush.msra.mxu0 0.0
    %1613 = vmatpush.msra.mxu0 0.0
    %1614 = vmatpush.msra.mxu0 0.0
    %1615 = vmatpush.msra.mxu0 0.0
    %1616 = vmatpush.msra.mxu0 0.0
    %1617 = vmatpush.msra.mxu0 0.0
    %1618 = vmatpush.msra.mxu0 %v1047
    %1619 = vmatpush.msra.mxu0 %v1046
    %1620 = vmatpush.msra.mxu0 %v1045
    %1621 = vmatpush.msra.mxu0 %v1044
    %1622 = vmatmul.f32.gmra.mxu0 %v1406
    %v1623 = vpop.f32.mrf.mxu0
    %v1624 = vadd.f32 0.0, %v1623
    %1625 = vdwg.mxu0
    %v1626 = vadd.f32 %v1604, %v1624
    %v1627 = vxor.u32 %v1626, 2147483648
    %v1628 = vmul.f32 %v1627, 1.442695
    %v1629 = vpow.pop %v1628
    %v1630 = vadd.f32 %v1629, 1.0
    %v1631 = vrcp.pop %v1630
    %v1632 = vmul.f32 %v1630, %v1631
    %v1633 = vsub.f32 1.0, %v1632
    %v1634 = vmul.f32 %v1631, %v1633
    %v1635 = vadd.f32 %v1631, %v1634
    %vm1636 = vweird.f32 %v1630
    %vm1637 = vweird.f32 %v1631
    %vm1638 = vmor %vm1636, %vm1637
    %v1639 = vsel %vm1638, %v1631, %v1635
    %v1640 = vand.u32 2147483647, %v1630
    %vm1641 = vcmp.eq.f32.partialorder %v1640, 8.507059e+37
    %v1642 = vand.u32 %v1630, 2147483648
    %v1643 = vor.u32 1.1754944e-38, %v1642
    %v1644 = vsel %vm1641, %v1643, %v1639
    %v1645 = vmul.f32 1.0, %v1644
    %v1646 = vadd.f32 %v1624, %v1097
    %1648 = vrot.lane.b32.xlu0 %v1646, 64
    %v1649 = vpop.permute.xlu0 %1648
    %v1651 = vmul.f32 %v1645, %v1649
    %1653 = vrot.lane.b32.xlu0 %v1651, 64
    %v1654 = vpop.permute.xlu0 %1653
    %v1656 = vadd.f32 %v1604, %v1654
    %v1657 = vtanh.pop %v1656
    %v1658 = vsub.f32 1.0, %v1645
    %1660 = vrot.lane.b32.xlu0 %v1657, 96
    %v1661 = vpop.permute.xlu0 %1660
    %v1663 = vmul.f32 %v1658, %v1661
    %v1664 = vmul.f32 %v1645, %v1402
    %v1665 = vadd.f32 %v1663, %v1664
    %1667 = vrot.lane.b32.xlu0 %v1665, 96
    %v1668 = vpop.permute.xlu0 %1667
    %v1669 = vsel %vm77, %v1668, 0
    %1671 = vmatpush.xpose.msra.mxu0 0.0
    %1672 = vmatpush.xpose.msra.mxu0 0.0
    %1673 = vmatpush.xpose.msra.mxu0 0.0
    %1674 = vmatpush.xpose.msra.mxu0 0.0
    %1675 = vmatpush.xpose.msra.mxu0 0.0
    %1676 = vmatpush.xpose.msra.mxu0 0.0
    %1677 = vmatpush.xpose.msra.mxu0 0.0
    %1678 = vmatpush.xpose.msra.mxu0 0.0
    %1679 = vmatpush.xpose.msra.mxu0 0.0
    %1680 = vmatpush.xpose.msra.mxu0 0.0
    %1681 = vmatpush.xpose.msra.mxu0 0.0
    %1682 = vmatpush.xpose.msra.mxu0 0.0
    %1683 = vmatpush.xpose.msra.mxu0 0.0
    %1684 = vmatpush.xpose.msra.mxu0 0.0
    %1685 = vmatpush.xpose.msra.mxu0 0.0
    %1686 = vmatpush.xpose.msra.mxu0 %v1125
    %1687 = vmatmul.f32.gmra.mxu0 %v1669
    %v1688 = vpop.f32.mrf.mxu0
    %v1689 = vadd.f32 0.0, %v1688
    %1690 = vdwg.mxu0
    %v1691 = vsel %vm1147, %v1689, -inf
    %1692 = vmax.xlane.f32.xlu0 %v1691
    %v1693 = vpop.xlane.xlu0 %1692
    %v1694 = vsub.f32 %v1689, %v1693
    %v1695 = vmul.f32 %v1694, 1.442695
    %v1696 = vpow.pop %v1695
    %v1697 = vsel %vm1147, %v1696, 0.0
    %1698 = vadd.xlane.f32.xlu0 %v1697
    %v1699 = vpop.xlane.xlu0 %1698
    %v1700 = vrcp.pop %v1699
    %v1701 = vmul.f32 %v1699, %v1700
    %v1702 = vsub.f32 1.0, %v1701
    %v1703 = vmul.f32 %v1700, %v1702
    %v1704 = vadd.f32 %v1700, %v1703
    %vm1705 = vweird.f32 %v1699
    %vm1706 = vweird.f32 %v1700
    %vm1707 = vmor %vm1705, %vm1706
    %v1708 = vsel %vm1707, %v1700, %v1704
    %v1709 = vand.u32 2147483647, %v1699
    %vm1710 = vcmp.eq.f32.partialorder %v1709, 8.507059e+37
    %v1711 = vand.u32 %v1699, 2147483648
    %v1712 = vor.u32 1.1754944e-38, %v1711
    %v1713 = vsel %vm1710, %v1712, %v1708
    %v1714 = vmul.f32 %v1696, %v1713
    %v1716 = vsel %vm1172, %v1714, 0
    %1718 = vmatpush.msra.mxu0 0.0
    %1719 = vmatpush.msra.mxu0 0.0
    %1720 = vmatpush.msra.mxu0 0.0
    %1721 = vmatpush.msra.mxu0 0.0
    %1722 = vmatpush.msra.mxu0 0.0
    %1723 = vmatpush.msra.mxu0 0.0
    %1724 = vmatpush.msra.mxu0 0.0
    %1725 = vmatpush.msra.mxu0 0.0
    %1726 = vmatpush.msra.mxu0 0.0
    %1727 = vmatpush.msra.mxu0 0.0
    %1728 = vmatpush.msra.mxu0 0.0
    %1729 = vmatpush.msra.mxu0 0.0
    %1730 = vmatpush.msra.mxu0 0.0
    %1731 = vmatpush.msra.mxu0 0.0
    %1732 = vmatpush.msra.mxu0 0.0
    %1733 = vmatpush.msra.mxu0 %v978
    %1734 = vmatmul.f32.gmra.mxu0 %v1716
    %v1735 = vpop.f32.mrf.mxu0
    %v1736 = vadd.f32 0.0, %v1735
    %1737 = vdwg.mxu0
    %1740 = vrot.lane.b32.xlu0 %v1736, 32
    %v1741 = vpop.permute.xlu0 %1740
    %v1743 = vsel %vm77, %v1668, %v1741
    %v1745 = vsel %vm992, %v1743, 0
    %1747 = vmatpush.msra.mxu0 0.0
    %1748 = vmatpush.msra.mxu0 0.0
    %1749 = vmatpush.msra.mxu0 0.0
    %1750 = vmatpush.msra.mxu0 0.0
    %1751 = vmatpush.msra.mxu0 0.0
    %1752 = vmatpush.msra.mxu0 0.0
    %1753 = vmatpush.msra.mxu0 0.0
    %1754 = vmatpush.msra.mxu0 0.0
    %1755 = vmatpush.msra.mxu0 %v1209
    %1756 = vmatpush.msra.mxu0 %v1208
    %1757 = vmatpush.msra.mxu0 %v1207
    %1758 = vmatpush.msra.mxu0 %v1206
    %1759 = vmatpush.msra.mxu0 %v1205
    %1760 = vmatpush.msra.mxu0 %v1204
    %1761 = vmatpush.msra.mxu0 %v1203
    %1762 = vmatpush.msra.mxu0 %v1202
    %1763 = vmatmul.f32.gmra.mxu0 %v1745
    %v1764 = vpop.f32.mrf.mxu0
    %v1765 = vadd.f32 %v1210, %v1764
    %1766 = vdwg.mxu0
    %v1767 = vtanh.pop %v1765
    %v1769 = vsel %vm77, %v1767, 0
    %1771 = vmatpush.msra.mxu0 0.0
    %1772 = vmatpush.msra.mxu0 0.0
    %1773 = vmatpush.msra.mxu0 0.0
    %1774 = vmatpush.msra.mxu0 0.0
    %1775 = vmatpush.msra.mxu0 0.0
    %1776 = vmatpush.msra.mxu0 0.0
    %1777 = vmatpush.msra.mxu0 0.0
    %1778 = vmatpush.msra.mxu0 0.0
    %1779 = vmatpush.msra.mxu0 0.0
    %1780 = vmatpush.msra.mxu0 0.0
    %1781 = vmatpush.msra.mxu0 0.0
    %1782 = vmatpush.msra.mxu0 0.0
    %1783 = vmatpush.msra.mxu0 %v1238
    %1784 = vmatpush.msra.mxu0 %v1237
    %1785 = vmatpush.msra.mxu0 %v1236
    %1786 = vmatpush.msra.mxu0 %v1235
    %1787 = vmatmul.f32.gmra.mxu0 %v1769
    %v1788 = vpop.f32.mrf.mxu0
    %v1789 = vadd.f32 %v1239, %v1788
    %1790 = vdwg.mxu0
    %v1791 = vsel %vm1263, %v1789, -inf
    %1792 = vmax.xlane.f32.xlu0 %v1791
    %v1793 = vpop.xlane.xlu0 %1792
    %v1794 = vsub.f32 %v1789, %v1793
    %v1795 = vmul.f32 %v1794, 1.442695
    %v1796 = vpow.pop %v1795
    %v1797 = vsel %vm1263, %v1796, 0.0
    %1798 = vadd.xlane.f32.xlu0 %v1797
    %v1799 = vpop.xlane.xlu0 %1798
    %v1800 = vrcp.pop %v1799
    %vm1801 = vcmp.ge.f32.partialorder %v1789, %v1793
    %v1802 = vsel %vm1801, %v980, 128
    %v1803 = vsel %vm1263, %v1802, 2147483647
    %v1804 = vand.u32 %v1803, 65535
    %v1805 = vshra.s32 %v1803, 16
    %v1806 = vcvt.s32.f32 %v1804
    %v1807 = vcvt.s32.f32 %v1805
    %1808 = vmin.xlane.f32.xlu0 %v1807
    %v1809 = vpop.xlane.xlu0 %1808
    %vm1810 = vcmp.eq.f32.partialorder %v1807, %v1809
    %v1811 = vsel %vm1810, %v1806, inf
    %1812 = vmin.xlane.f32.xlu0 %v1811
    %v1813 = vpop.xlane.xlu0 %1812
    %v1814 = vcvt.f32.s32 %v1813
    %v1815 = vcvt.f32.s32 %v1809
    %v1816 = vshll.u32 %v1815, 16
    %v1817 = vadd.s32 %v1816, %v1814
    %vm1818 = vcmp.eq.s32.totalorder %v980, 2
    %v1819 = vsel %vm1818, %v1817, %v1555
    %v1820 = vsel %vm1818, %v1800, %v1556
    %vm1821 = vcmp.eq.s32.totalorder %v980, %v1817
    %v1822 = vsel %vm1821, 1, 0
    %v1823 = vcvt.s32.f32 %v1822
    %v1825 = vsel %vm992, %v1823, 0
    %1827 = vmatpush.msra.mxu0 0.0
    %1828 = vmatpush.msra.mxu0 0.0
    %1829 = vmatpush.msra.mxu0 0.0
    %1830 = vmatpush.msra.mxu0 0.0
    %1831 = vmatpush.msra.mxu0 0.0
    %1832 = vmatpush.msra.mxu0 0.0
    %1833 = vmatpush.msra.mxu0 0.0
    %1834 = vmatpush.msra.mxu0 0.0
    %1835 = vmatpush.msra.mxu0 %v991
    %1836 = vmatpush.msra.mxu0 %v990
    %1837 = vmatpush.msra.mxu0 %v989
    %1838 = vmatpush.msra.mxu0 %v988
    %1839 = vmatpush.msra.mxu0 %v987
    %1840 = vmatpush.msra.mxu0 %v986
    %1841 = vmatpush.msra.mxu0 %v985
    %1842 = vmatpush.msra.mxu0 %v984
    %1843 = vmatmul.f32.gmra.mxu0 %v1825
    %v1844 = vpop.f32.mrf.mxu0
    %v1845 = vadd.f32 0.0, %v1844
    %1846 = vdwg.mxu0
    %v1848 = vsel %vm77, %v1845, 0
    %1850 = vmatpush.msra.mxu0 0.0
    %1851 = vmatpush.msra.mxu0 0.0
    %1852 = vmatpush.msra.mxu0 0.0
    %1853 = vmatpush.msra.mxu0 0.0
    %1854 = vmatpush.msra.mxu0 0.0
    %1855 = vmatpush.msra.mxu0 0.0
    %1856 = vmatpush.msra.mxu0 0.0
    %1857 = vmatpush.msra.mxu0 0.0
    %1858 = vmatpush.msra.mxu0 0.0
    %1859 = vmatpush.msra.mxu0 0.0
    %1860 = vmatpush.msra.mxu0 0.0
    %1861 = vmatpush.msra.mxu0 0.0
    %1862 = vmatpush.msra.mxu0 %v1019
    %1863 = vmatpush.msra.mxu0 %v1018
    %1864 = vmatpush.msra.mxu0 %v1017
    %1865 = vmatpush.msra.mxu0 %v1016
    %1866 = vmatmul.f32.gmra.mxu0 %v1848
    %v1867 = vpop.f32.mrf.mxu0
    %v1868 = vadd.f32 %v1020, %v1867
    %1869 = vdwg.mxu0
    %1870 = vmatpush.msra.mxu0 0.0
    %1871 = vmatpush.msra.mxu0 0.0
    %1872 = vmatpush.msra.mxu0 0.0
    %1873 = vmatpush.msra.mxu0 0.0
    %1874 = vmatpush.msra.mxu0 0.0
    %1875 = vmatpush.msra.mxu0 0.0
    %1876 = vmatpush.msra.mxu0 0.0
    %1877 = vmatpush.msra.mxu0 0.0
    %1878 = vmatpush.msra.mxu0 0.0
    %1879 = vmatpush.msra.mxu0 0.0
    %1880 = vmatpush.msra.mxu0 0.0
    %1881 = vmatpush.msra.mxu0 0.0
    %1882 = vmatpush.msra.mxu0 %v1047
    %1883 = vmatpush.msra.mxu0 %v1046
    %1884 = vmatpush.msra.mxu0 %v1045
    %1885 = vmatpush.msra.mxu0 %v1044
    %1886 = vmatmul.f32.gmra.mxu0 %v1669
    %v1887 = vpop.f32.mrf.mxu0
    %v1888 = vadd.f32 0.0, %v1887
    %1889 = vdwg.mxu0
    %v1890 = vadd.f32 %v1868, %v1888
    %v1891 = vxor.u32 %v1890, 2147483648
    %v1892 = vmul.f32 %v1891, 1.442695
    %v1893 = vpow.pop %v1892
    %v1894 = vadd.f32 %v1893, 1.0
    %v1895 = vrcp.pop %v1894
    %v1896 = vmul.f32 %v1894, %v1895
    %v1897 = vsub.f32 1.0, %v1896
    %v1898 = vmul.f32 %v1895, %v1897
    %v1899 = vadd.f32 %v1895, %v1898
    %vm1900 = vweird.f32 %v1894
    %vm1901 = vweird.f32 %v1895
    %vm1902 = vmor %vm1900, %vm1901
    %v1903 = vsel %vm1902, %v1895, %v1899
    %v1904 = vand.u32 2147483647, %v1894
    %vm1905 = vcmp.eq.f32.partialorder %v1904, 8.507059e+37
    %v1906 = vand.u32 %v1894, 2147483648
    %v1907 = vor.u32 1.1754944e-38, %v1906
    %v1908 = vsel %vm1905, %v1907, %v1903
    %v1909 = vmul.f32 1.0, %v1908
    %v1910 = vadd.f32 %v1888, %v1097
    %1912 = vrot.lane.b32.xlu0 %v1910, 64
    %v1913 = vpop.permute.xlu0 %1912
    %v1915 = vmul.f32 %v1909, %v1913
    %1917 = vrot.lane.b32.xlu0 %v1915, 64
    %v1918 = vpop.permute.xlu0 %1917
    %v1920 = vadd.f32 %v1868, %v1918
    %v1921 = vtanh.pop %v1920
    %v1922 = vsub.f32 1.0, %v1909
    %1924 = vrot.lane.b32.xlu0 %v1921, 96
    %v1925 = vpop.permute.xlu0 %1924
    %v1927 = vmul.f32 %v1922, %v1925
    %v1928 = vmul.f32 %v1909, %v1665
    %v1929 = vadd.f32 %v1927, %v1928
    %1931 = vrot.lane.b32.xlu0 %v1929, 96
    %v1932 = vpop.permute.xlu0 %1931
    %v1933 = vsel %vm77, %v1932, 0
    %1935 = vmatpush.xpose.msra.mxu0 0.0
    %1936 = vmatpush.xpose.msra.mxu0 0.0
    %1937 = vmatpush.xpose.msra.mxu0 0.0
    %1938 = vmatpush.xpose.msra.mxu0 0.0
    %1939 = vmatpush.xpose.msra.mxu0 0.0
    %1940 = vmatpush.xpose.msra.mxu0 0.0
    %1941 = vmatpush.xpose.msra.mxu0 0.0
    %1942 = vmatpush.xpose.msra.mxu0 0.0
    %1943 = vmatpush.xpose.msra.mxu0 0.0
    %1944 = vmatpush.xpose.msra.mxu0 0.0
    %1945 = vmatpush.xpose.msra.mxu0 0.0
    %1946 = vmatpush.xpose.msra.mxu0 0.0
    %1947 = vmatpush.xpose.msra.mxu0 0.0
    %1948 = vmatpush.xpose.msra.mxu0 0.0
    %1949 = vmatpush.xpose.msra.mxu0 0.0
    %1950 = vmatpush.xpose.msra.mxu0 %v1125
    %1951 = vmatmul.f32.gmra.mxu0 %v1933
    %v1952 = vpop.f32.mrf.mxu0
    %v1953 = vadd.f32 0.0, %v1952
    %1954 = vdwg.mxu0
    %v1955 = vsel %vm1147, %v1953, -inf
    %1956 = vmax.xlane.f32.xlu0 %v1955
    %v1957 = vpop.xlane.xlu0 %1956
    %v1958 = vsub.f32 %v1953, %v1957
    %v1959 = vmul.f32 %v1958, 1.442695
    %v1960 = vpow.pop %v1959
    %v1961 = vsel %vm1147, %v1960, 0.0
    %1962 = vadd.xlane.f32.xlu0 %v1961
    %v1963 = vpop.xlane.xlu0 %1962
    %v1964 = vrcp.pop %v1963
    %v1965 = vmul.f32 %v1963, %v1964
    %v1966 = vsub.f32 1.0, %v1965
    %v1967 = vmul.f32 %v1964, %v1966
    %v1968 = vadd.f32 %v1964, %v1967
    %vm1969 = vweird.f32 %v1963
    %vm1970 = vweird.f32 %v1964
    %vm1971 = vmor %vm1969, %vm1970
    %v1972 = vsel %vm1971, %v1964, %v1968
    %v1973 = vand.u32 2147483647, %v1963
    %vm1974 = vcmp.eq.f32.partialorder %v1973, 8.507059e+37
    %v1975 = vand.u32 %v1963, 2147483648
    %v1976 = vor.u32 1.1754944e-38, %v1975
    %v1977 = vsel %vm1974, %v1976, %v1972
    %v1978 = vmul.f32 %v1960, %v1977
    %v1980 = vsel %vm1172, %v1978, 0
    %1982 = vmatpush.msra.mxu0 0.0
    %1983 = vmatpush.msra.mxu0 0.0
    %1984 = vmatpush.msra.mxu0 0.0
    %1985 = vmatpush.msra.mxu0 0.0
    %1986 = vmatpush.msra.mxu0 0.0
    %1987 = vmatpush.msra.mxu0 0.0
    %1988 = vmatpush.msra.mxu0 0.0
    %1989 = vmatpush.msra.mxu0 0.0
    %1990 = vmatpush.msra.mxu0 0.0
    %1991 = vmatpush.msra.mxu0 0.0
    %1992 = vmatpush.msra.mxu0 0.0
    %1993 = vmatpush.msra.mxu0 0.0
    %1994 = vmatpush.msra.mxu0 0.0
    %1995 = vmatpush.msra.mxu0 0.0
    %1996 = vmatpush.msra.mxu0 0.0
    %1997 = vmatpush.msra.mxu0 %v978
    %1998 = vmatmul.f32.gmra.mxu0 %v1980
    %v1999 = vpop.f32.mrf.mxu0
    %v2000 = vadd.f32 0.0, %v1999
    %2001 = vdwg.mxu0
    %2004 = vrot.lane.b32.xlu0 %v2000, 32
    %v2005 = vpop.permute.xlu0 %2004
    %v2007 = vsel %vm77, %v1932, %v2005
    %v2009 = vsel %vm992, %v2007, 0
    %2011 = vmatpush.msra.mxu0 0.0
    %2012 = vmatpush.msra.mxu0 0.0
    %2013 = vmatpush.msra.mxu0 0.0
    %2014 = vmatpush.msra.mxu0 0.0
    %2015 = vmatpush.msra.mxu0 0.0
    %2016 = vmatpush.msra.mxu0 0.0
    %2017 = vmatpush.msra.mxu0 0.0
    %2018 = vmatpush.msra.mxu0 0.0
    %2019 = vmatpush.msra.mxu0 %v1209
    %2020 = vmatpush.msra.mxu0 %v1208
    %2021 = vmatpush.msra.mxu0 %v1207
    %2022 = vmatpush.msra.mxu0 %v1206
    %2023 = vmatpush.msra.mxu0 %v1205
    %2024 = vmatpush.msra.mxu0 %v1204
    %2025 = vmatpush.msra.mxu0 %v1203
    %2026 = vmatpush.msra.mxu0 %v1202
    %2027 = vmatmul.f32.gmra.mxu0 %v2009
    %v2028 = vpop.f32.mrf.mxu0
    %v2029 = vadd.f32 %v1210, %v2028
    %2030 = vdwg.mxu0
    %v2031 = vtanh.pop %v2029
    %v2033 = vsel %vm77, %v2031, 0
    %2035 = vmatpush.msra.mxu0 0.0
    %2036 = vmatpush.msra.mxu0 0.0
    %2037 = vmatpush.msra.mxu0 0.0
    %2038 = vmatpush.msra.mxu0 0.0
    %2039 = vmatpush.msra.mxu0 0.0
    %2040 = vmatpush.msra.mxu0 0.0
    %2041 = vmatpush.msra.mxu0 0.0
    %2042 = vmatpush.msra.mxu0 0.0
    %2043 = vmatpush.msra.mxu0 0.0
    %2044 = vmatpush.msra.mxu0 0.0
    %2045 = vmatpush.msra.mxu0 0.0
    %2046 = vmatpush.msra.mxu0 0.0
    %2047 = vmatpush.msra.mxu0 %v1238
    %2048 = vmatpush.msra.mxu0 %v1237
    %2049 = vmatpush.msra.mxu0 %v1236
    %2050 = vmatpush.msra.mxu0 %v1235
    %2051 = vmatmul.f32.gmra.mxu0 %v2033
    %v2052 = vpop.f32.mrf.mxu0
    %v2053 = vadd.f32 %v1239, %v2052
    %2054 = vdwg.mxu0
    %v2055 = vsel %vm1263, %v2053, -inf
    %2056 = vmax.xlane.f32.xlu0 %v2055
    %v2057 = vpop.xlane.xlu0 %2056
    %v2058 = vsub.f32 %v2053, %v2057
    %v2059 = vmul.f32 %v2058, 1.442695
    %v2060 = vpow.pop %v2059
    %v2061 = vsel %vm1263, %v2060, 0.0
    %2062 = vadd.xlane.f32.xlu0 %v2061
    %v2063 = vpop.xlane.xlu0 %2062
    %v2064 = vrcp.pop %v2063
    %vm2065 = vcmp.ge.f32.partialorder %v2053, %v2057
    %v2066 = vsel %vm2065, %v980, 128
    %v2067 = vsel %vm1263, %v2066, 2147483647
    %v2068 = vand.u32 %v2067, 65535
    %v2069 = vshra.s32 %v2067, 16
    %v2070 = vcvt.s32.f32 %v2068
    %v2071 = vcvt.s32.f32 %v2069
    %2072 = vmin.xlane.f32.xlu0 %v2071
    %v2073 = vpop.xlane.xlu0 %2072
    %vm2074 = vcmp.eq.f32.partialorder %v2071, %v2073
    %v2075 = vsel %vm2074, %v2070, inf
    %2076 = vmin.xlane.f32.xlu0 %v2075
    %v2077 = vpop.xlane.xlu0 %2076
    %v2078 = vcvt.f32.s32 %v2077
    %v2079 = vcvt.f32.s32 %v2073
    %v2080 = vshll.u32 %v2079, 16
    %v2081 = vadd.s32 %v2080, %v2078
    %vm2082 = vcmp.eq.s32.totalorder %v980, 3
    %v2083 = vsel %vm2082, %v2081, %v1819
    %v2084 = vsel %vm2082, %v2064, %v1820
    %vm2085 = vcmp.eq.s32.totalorder %v980, %v2081
    %v2086 = vsel %vm2085, 1, 0
    %v2087 = vcvt.s32.f32 %v2086
    %v2089 = vsel %vm992, %v2087, 0
    %2091 = vmatpush.msra.mxu0 0.0
    %2092 = vmatpush.msra.mxu0 0.0
    %2093 = vmatpush.msra.mxu0 0.0
    %2094 = vmatpush.msra.mxu0 0.0
    %2095 = vmatpush.msra.mxu0 0.0
    %2096 = vmatpush.msra.mxu0 0.0
    %2097 = vmatpush.msra.mxu0 0.0
    %2098 = vmatpush.msra.mxu0 0.0
    %2099 = vmatpush.msra.mxu0 %v991
    %2100 = vmatpush.msra.mxu0 %v990
    %2101 = vmatpush.msra.mxu0 %v989
    %2102 = vmatpush.msra.mxu0 %v988
    %2103 = vmatpush.msra.mxu0 %v987
    %2104 = vmatpush.msra.mxu0 %v986
    %2105 = vmatpush.msra.mxu0 %v985
    %2106 = vmatpush.msra.mxu0 %v984
    %2107 = vmatmul.f32.gmra.mxu0 %v2089
    %v2108 = vpop.f32.mrf.mxu0
    %v2109 = vadd.f32 0.0, %v2108
    %2110 = vdwg.mxu0
    %v2112 = vsel %vm77, %v2109, 0
    %2114 = vmatpush.msra.mxu0 0.0
    %2115 = vmatpush.msra.mxu0 0.0
    %2116 = vmatpush.msra.mxu0 0.0
    %2117 = vmatpush.msra.mxu0 0.0
    %2118 = vmatpush.msra.mxu0 0.0
    %2119 = vmatpush.msra.mxu0 0.0
    %2120 = vmatpush.msra.mxu0 0.0
    %2121 = vmatpush.msra.mxu0 0.0
    %2122 = vmatpush.msra.mxu0 0.0
    %2123 = vmatpush.msra.mxu0 0.0
    %2124 = vmatpush.msra.mxu0 0.0
    %2125 = vmatpush.msra.mxu0 0.0
    %2126 = vmatpush.msra.mxu0 %v1019
    %2127 = vmatpush.msra.mxu0 %v1018
    %2128 = vmatpush.msra.mxu0 %v1017
    %2129 = vmatpush.msra.mxu0 %v1016
    %2130 = vmatmul.f32.gmra.mxu0 %v2112
    %v2131 = vpop.f32.mrf.mxu0
    %v2132 = vadd.f32 %v1020, %v2131
    %2133 = vdwg.mxu0
    %2134 = vmatpush.msra.mxu0 0.0
    %2135 = vmatpush.msra.mxu0 0.0
    %2136 = vmatpush.msra.mxu0 0.0
    %2137 = vmatpush.msra.mxu0 0.0
    %2138 = vmatpush.msra.mxu0 0.0
    %2139 = vmatpush.msra.mxu0 0.0
    %2140 = vmatpush.msra.mxu0 0.0
    %2141 = vmatpush.msra.mxu0 0.0
    %2142 = vmatpush.msra.mxu0 0.0
    %2143 = vmatpush.msra.mxu0 0.0
    %2144 = vmatpush.msra.mxu0 0.0
    %2145 = vmatpush.msra.mxu0 0.0
    %2146 = vmatpush.msra.mxu0 %v1047
    %2147 = vmatpush.msra.mxu0 %v1046
    %2148 = vmatpush.msra.mxu0 %v1045
    %2149 = vmatpush.msra.mxu0 %v1044
    %2150 = vmatmul.f32.gmra.mxu0 %v1933
    %v2151 = vpop.f32.mrf.mxu0
    %v2152 = vadd.f32 0.0, %v2151
    %2153 = vdwg.mxu0
    %v2154 = vadd.f32 %v2132, %v2152
    %v2155 = vxor.u32 %v2154, 2147483648
    %v2156 = vmul.f32 %v2155, 1.442695
    %v2157 = vpow.pop %v2156
    %v2158 = vadd.f32 %v2157, 1.0
    %v2159 = vrcp.pop %v2158
    %v2160 = vmul.f32 %v2158, %v2159
    %v2161 = vsub.f32 1.0, %v2160
    %v2162 = vmul.f32 %v2159, %v2161
    %v2163 = vadd.f32 %v2159, %v2162
    %vm2164 = vweird.f32 %v2158
    %vm2165 = vweird.f32 %v2159
    %vm2166 = vmor %vm2164, %vm2165
    %v2167 = vsel %vm2166, %v2159, %v2163
    %v2168 = vand.u32 2147483647, %v2158
    %vm2169 = vcmp.eq.f32.partialorder %v2168, 8.507059e+37
    %v2170 = vand.u32 %v2158, 2147483648
    %v2171 = vor.u32 1.1754944e-38, %v2170
    %v2172 = vsel %vm2169, %v2171, %v2167
    %v2173 = vmul.f32 1.0, %v2172
    %v2174 = vadd.f32 %v2152, %v1097
    %2176 = vrot.lane.b32.xlu0 %v2174, 64
    %v2177 = vpop.permute.xlu0 %2176
    %v2179 = vmul.f32 %v2173, %v2177
    %2181 = vrot.lane.b32.xlu0 %v2179, 64
    %v2182 = vpop.permute.xlu0 %2181
    %v2184 = vadd.f32 %v2132, %v2182
    %v2185 = vtanh.pop %v2184
    %v2186 = vsub.f32 1.0, %v2173
    %2188 = vrot.lane.b32.xlu0 %v2185, 96
    %v2189 = vpop.permute.xlu0 %2188
    %v2191 = vmul.f32 %v2186, %v2189
    %v2192 = vmul.f32 %v2173, %v1929
    %v2193 = vadd.f32 %v2191, %v2192
    %2195 = vrot.lane.b32.xlu0 %v2193, 96
    %v2196 = vpop.permute.xlu0 %2195
    %v2197 = vsel %vm77, %v2196, 0
    %2199 = vmatpush.xpose.msra.mxu0 0.0
    %2200 = vmatpush.xpose.msra.mxu0 0.0
    %2201 = vmatpush.xpose.msra.mxu0 0.0
    %2202 = vmatpush.xpose.msra.mxu0 0.0
    %2203 = vmatpush.xpose.msra.mxu0 0.0
    %2204 = vmatpush.xpose.msra.mxu0 0.0
    %2205 = vmatpush.xpose.msra.mxu0 0.0
    %2206 = vmatpush.xpose.msra.mxu0 0.0
    %2207 = vmatpush.xpose.msra.mxu0 0.0
    %2208 = vmatpush.xpose.msra.mxu0 0.0
    %2209 = vmatpush.xpose.msra.mxu0 0.0
    %2210 = vmatpush.xpose.msra.mxu0 0.0
    %2211 = vmatpush.xpose.msra.mxu0 0.0
    %2212 = vmatpush.xpose.msra.mxu0 0.0
    %2213 = vmatpush.xpose.msra.mxu0 0.0
    %2214 = vmatpush.xpose.msra.mxu0 %v1125
    %2215 = vmatmul.f32.gmra.mxu0 %v2197
    %v2216 = vpop.f32.mrf.mxu0
    %v2217 = vadd.f32 0.0, %v2216
    %2218 = vdwg.mxu0
    %v2219 = vsel %vm1147, %v2217, -inf
    %2220 = vmax.xlane.f32.xlu0 %v2219
    %v2221 = vpop.xlane.xlu0 %2220
    %v2222 = vsub.f32 %v2217, %v2221
    %v2223 = vmul.f32 %v2222, 1.442695
    %v2224 = vpow.pop %v2223
    %v2225 = vsel %vm1147, %v2224, 0.0
    %2226 = vadd.xlane.f32.xlu0 %v2225
    %v2227 = vpop.xlane.xlu0 %2226
    %v2228 = vrcp.pop %v2227
    %v2229 = vmul.f32 %v2227, %v2228
    %v2230 = vsub.f32 1.0, %v2229
    %v2231 = vmul.f32 %v2228, %v2230
    %v2232 = vadd.f32 %v2228, %v2231
    %vm2233 = vweird.f32 %v2227
    %vm2234 = vweird.f32 %v2228
    %vm2235 = vmor %vm2233, %vm2234
    %v2236 = vsel %vm2235, %v2228, %v2232
    %v2237 = vand.u32 2147483647, %v2227
    %vm2238 = vcmp.eq.f32.partialorder %v2237, 8.507059e+37
    %v2239 = vand.u32 %v2227, 2147483648
    %v2240 = vor.u32 1.1754944e-38, %v2239
    %v2241 = vsel %vm2238, %v2240, %v2236
    %v2242 = vmul.f32 %v2224, %v2241
    %v2244 = vsel %vm1172, %v2242, 0
    %2246 = vmatpush.msra.mxu0 0.0
    %2247 = vmatpush.msra.mxu0 0.0
    %2248 = vmatpush.msra.mxu0 0.0
    %2249 = vmatpush.msra.mxu0 0.0
    %2250 = vmatpush.msra.mxu0 0.0
    %2251 = vmatpush.msra.mxu0 0.0
    %2252 = vmatpush.msra.mxu0 0.0
    %2253 = vmatpush.msra.mxu0 0.0
    %2254 = vmatpush.msra.mxu0 0.0
    %2255 = vmatpush.msra.mxu0 0.0
    %2256 = vmatpush.msra.mxu0 0.0
    %2257 = vmatpush.msra.mxu0 0.0
    %2258 = vmatpush.msra.mxu0 0.0
    %2259 = vmatpush.msra.mxu0 0.0
    %2260 = vmatpush.msra.mxu0 0.0
    %2261 = vmatpush.msra.mxu0 %v978
    %2262 = vmatmul.f32.gmra.mxu0 %v2244
    %v2263 = vpop.f32.mrf.mxu0
    %v2264 = vadd.f32 0.0, %v2263
    %2265 = vdwg.mxu0
    %2268 = vrot.lane.b32.xlu0 %v2264, 32
    %v2269 = vpop.permute.xlu0 %2268
    %v2271 = vsel %vm77, %v2196, %v2269
    %v2273 = vsel %vm992, %v2271, 0
    %2275 = vmatpush.msra.mxu0 0.0
    %2276 = vmatpush.msra.mxu0 0.0
    %2277 = vmatpush.msra.mxu0 0.0
    %2278 = vmatpush.msra.mxu0 0.0
    %2279 = vmatpush.msra.mxu0 0.0
    %2280 = vmatpush.msra.mxu0 0.0
    %2281 = vmatpush.msra.mxu0 0.0
    %2282 = vmatpush.msra.mxu0 0.0
    %2283 = vmatpush.msra.mxu0 %v1209
    %2284 = vmatpush.msra.mxu0 %v1208
    %2285 = vmatpush.msra.mxu0 %v1207
    %2286 = vmatpush.msra.mxu0 %v1206
    %2287 = vmatpush.msra.mxu0 %v1205
    %2288 = vmatpush.msra.mxu0 %v1204
    %2289 = vmatpush.msra.mxu0 %v1203
    %2290 = vmatpush.msra.mxu0 %v1202
    %2291 = vmatmul.f32.gmra.mxu0 %v2273
    %v2292 = vpop.f32.mrf.mxu0
    %v2293 = vadd.f32 %v1210, %v2292
    %2294 = vdwg.mxu0
    %v2295 = vtanh.pop %v2293
    %v2297 = vsel %vm77, %v2295, 0
    %2299 = vmatpush.msra.mxu0 0.0
    %2300 = vmatpush.msra.mxu0 0.0
    %2301 = vmatpush.msra.mxu0 0.0
    %2302 = vmatpush.msra.mxu0 0.0
    %2303 = vmatpush.msra.mxu0 0.0
    %2304 = vmatpush.msra.mxu0 0.0
    %2305 = vmatpush.msra.mxu0 0.0
    %2306 = vmatpush.msra.mxu0 0.0
    %2307 = vmatpush.msra.mxu0 0.0
    %2308 = vmatpush.msra.mxu0 0.0
    %2309 = vmatpush.msra.mxu0 0.0
    %2310 = vmatpush.msra.mxu0 0.0
    %2311 = vmatpush.msra.mxu0 %v1238
    %2312 = vmatpush.msra.mxu0 %v1237
    %2313 = vmatpush.msra.mxu0 %v1236
    %2314 = vmatpush.msra.mxu0 %v1235
    %2315 = vmatmul.f32.gmra.mxu0 %v2297
    %v2316 = vpop.f32.mrf.mxu0
    %v2317 = vadd.f32 %v1239, %v2316
    %2318 = vdwg.mxu0
    %v2319 = vsel %vm1263, %v2317, -inf
    %2320 = vmax.xlane.f32.xlu0 %v2319
    %v2321 = vpop.xlane.xlu0 %2320
    %v2322 = vsub.f32 %v2317, %v2321
    %v2323 = vmul.f32 %v2322, 1.442695
    %v2324 = vpow.pop %v2323
    %v2325 = vsel %vm1263, %v2324, 0.0
    %2326 = vadd.xlane.f32.xlu0 %v2325
    %v2327 = vpop.xlane.xlu0 %2326
    %v2328 = vrcp.pop %v2327
    %vm2329 = vcmp.ge.f32.partialorder %v2317, %v2321
    %v2330 = vsel %vm2329, %v980, 128
    %v2331 = vsel %vm1263, %v2330, 2147483647
    %v2332 = vand.u32 %v2331, 65535
    %v2333 = vshra.s32 %v2331, 16
    %v2334 = vcvt.s32.f32 %v2332
    %v2335 = vcvt.s32.f32 %v2333
    %2336 = vmin.xlane.f32.xlu0 %v2335
    %v2337 = vpop.xlane.xlu0 %2336
    %vm2338 = vcmp.eq.f32.partialorder %v2335, %v2337
    %v2339 = vsel %vm2338, %v2334, inf
    %2340 = vmin.xlane.f32.xlu0 %v2339
    %v2341 = vpop.xlane.xlu0 %2340
    %v2342 = vcvt.f32.s32 %v2341
    %v2343 = vcvt.f32.s32 %v2337
    %v2344 = vshll.u32 %v2343, 16
    %v2345 = vadd.s32 %v2344, %v2342
    %vm2346 = vcmp.eq.s32.totalorder %v980, 4
    %v2347 = vsel %vm2346, %v2345, %v2083
    %v2348 = vsel %vm2346, %v2328, %v2084
    %vm2349 = vcmp.eq.s32.totalorder %v980, %v2345
    %v2350 = vsel %vm2349, 1, 0
    %v2351 = vcvt.s32.f32 %v2350
    %v2353 = vsel %vm992, %v2351, 0
    %2355 = vmatpush.msra.mxu0 0.0
    %2356 = vmatpush.msra.mxu0 0.0
    %2357 = vmatpush.msra.mxu0 0.0
    %2358 = vmatpush.msra.mxu0 0.0
    %2359 = vmatpush.msra.mxu0 0.0
    %2360 = vmatpush.msra.mxu0 0.0
    %2361 = vmatpush.msra.mxu0 0.0
    %2362 = vmatpush.msra.mxu0 0.0
    %2363 = vmatpush.msra.mxu0 %v991
    %2364 = vmatpush.msra.mxu0 %v990
    %2365 = vmatpush.msra.mxu0 %v989
    %2366 = vmatpush.msra.mxu0 %v988
    %2367 = vmatpush.msra.mxu0 %v987
    %2368 = vmatpush.msra.mxu0 %v986
    %2369 = vmatpush.msra.mxu0 %v985
    %2370 = vmatpush.msra.mxu0 %v984
    %2371 = vmatmul.f32.gmra.mxu0 %v2353
    %v2372 = vpop.f32.mrf.mxu0
    %v2373 = vadd.f32 0.0, %v2372
    %2374 = vdwg.mxu0
    %v2376 = vsel %vm77, %v2373, 0
    %2378 = vmatpush.msra.mxu0 0.0
    %2379 = vmatpush.msra.mxu0 0.0
    %2380 = vmatpush.msra.mxu0 0.0
    %2381 = vmatpush.msra.mxu0 0.0
    %2382 = vmatpush.msra.mxu0 0.0
    %2383 = vmatpush.msra.mxu0 0.0
    %2384 = vmatpush.msra.mxu0 0.0
    %2385 = vmatpush.msra.mxu0 0.0
    %2386 = vmatpush.msra.mxu0 0.0
    %2387 = vmatpush.msra.mxu0 0.0
    %2388 = vmatpush.msra.mxu0 0.0
    %2389 = vmatpush.msra.mxu0 0.0
    %2390 = vmatpush.msra.mxu0 %v1019
    %2391 = vmatpush.msra.mxu0 %v1018
    %2392 = vmatpush.msra.mxu0 %v1017
    %2393 = vmatpush.msra.mxu0 %v1016
    %2394 = vmatmul.f32.gmra.mxu0 %v2376
    %v2395 = vpop.f32.mrf.mxu0
    %v2396 = vadd.f32 %v1020, %v2395
    %2397 = vdwg.mxu0
    %2398 = vmatpush.msra.mxu0 0.0
    %2399 = vmatpush.msra.mxu0 0.0
    %2400 = vmatpush.msra.mxu0 0.0
    %2401 = vmatpush.msra.mxu0 0.0
    %2402 = vmatpush.msra.mxu0 0.0
    %2403 = vmatpush.msra.mxu0 0.0
    %2404 = vmatpush.msra.mxu0 0.0
    %2405 = vmatpush.msra.mxu0 0.0
    %2406 = vmatpush.msra.mxu0 0.0
    %2407 = vmatpush.msra.mxu0 0.0
    %2408 = vmatpush.msra.mxu0 0.0
    %2409 = vmatpush.msra.mxu0 0.0
    %2410 = vmatpush.msra.mxu0 %v1047
    %2411 = vmatpush.msra.mxu0 %v1046
    %2412 = vmatpush.msra.mxu0 %v1045
    %2413 = vmatpush.msra.mxu0 %v1044
    %2414 = vmatmul.f32.gmra.mxu0 %v2197
    %v2415 = vpop.f32.mrf.mxu0
    %v2416 = vadd.f32 0.0, %v2415
    %2417 = vdwg.mxu0
    %v2418 = vadd.f32 %v2396, %v2416
    %v2419 = vxor.u32 %v2418, 2147483648
    %v2420 = vmul.f32 %v2419, 1.442695
    %v2421 = vpow.pop %v2420
    %v2422 = vadd.f32 %v2421, 1.0
    %v2423 = vrcp.pop %v2422
    %v2424 = vmul.f32 %v2422, %v2423
    %v2425 = vsub.f32 1.0, %v2424
    %v2426 = vmul.f32 %v2423, %v2425
    %v2427 = vadd.f32 %v2423, %v2426
    %vm2428 = vweird.f32 %v2422
    %vm2429 = vweird.f32 %v2423
    %vm2430 = vmor %vm2428, %vm2429
    %v2431 = vsel %vm2430, %v2423, %v2427
    %v2432 = vand.u32 2147483647, %v2422
    %vm2433 = vcmp.eq.f32.partialorder %v2432, 8.507059e+37
    %v2434 = vand.u32 %v2422, 2147483648
    %v2435 = vor.u32 1.1754944e-38, %v2434
    %v2436 = vsel %vm2433, %v2435, %v2431
    %v2437 = vmul.f32 1.0, %v2436
    %v2438 = vadd.f32 %v2416, %v1097
    %2440 = vrot.lane.b32.xlu0 %v2438, 64
    %v2441 = vpop.permute.xlu0 %2440
    %v2443 = vmul.f32 %v2437, %v2441
    %2445 = vrot.lane.b32.xlu0 %v2443, 64
    %v2446 = vpop.permute.xlu0 %2445
    %v2448 = vadd.f32 %v2396, %v2446
    %v2449 = vtanh.pop %v2448
    %v2450 = vsub.f32 1.0, %v2437
    %2452 = vrot.lane.b32.xlu0 %v2449, 96
    %v2453 = vpop.permute.xlu0 %2452
    %v2455 = vmul.f32 %v2450, %v2453
    %v2456 = vmul.f32 %v2437, %v2193
    %v2457 = vadd.f32 %v2455, %v2456
    %2459 = vrot.lane.b32.xlu0 %v2457, 96
    %v2460 = vpop.permute.xlu0 %2459
    %v2461 = vsel %vm77, %v2460, 0
    %2463 = vmatpush.xpose.msra.mxu0 0.0
    %2464 = vmatpush.xpose.msra.mxu0 0.0
    %2465 = vmatpush.xpose.msra.mxu0 0.0
    %2466 = vmatpush.xpose.msra.mxu0 0.0
    %2467 = vmatpush.xpose.msra.mxu0 0.0
    %2468 = vmatpush.xpose.msra.mxu0 0.0
    %2469 = vmatpush.xpose.msra.mxu0 0.0
    %2470 = vmatpush.xpose.msra.mxu0 0.0
    %2471 = vmatpush.xpose.msra.mxu0 0.0
    %2472 = vmatpush.xpose.msra.mxu0 0.0
    %2473 = vmatpush.xpose.msra.mxu0 0.0
    %2474 = vmatpush.xpose.msra.mxu0 0.0
    %2475 = vmatpush.xpose.msra.mxu0 0.0
    %2476 = vmatpush.xpose.msra.mxu0 0.0
    %2477 = vmatpush.xpose.msra.mxu0 0.0
    %2478 = vmatpush.xpose.msra.mxu0 %v1125
    %2479 = vmatmul.f32.gmra.mxu0 %v2461
    %v2480 = vpop.f32.mrf.mxu0
    %v2481 = vadd.f32 0.0, %v2480
    %2482 = vdwg.mxu0
    %v2483 = vsel %vm1147, %v2481, -inf
    %2484 = vmax.xlane.f32.xlu0 %v2483
    %v2485 = vpop.xlane.xlu0 %2484
    %v2486 = vsub.f32 %v2481, %v2485
    %v2487 = vmul.f32 %v2486, 1.442695
    %v2488 = vpow.pop %v2487
    %v2489 = vsel %vm1147, %v2488, 0.0
    %2490 = vadd.xlane.f32.xlu0 %v2489
    %v2491 = vpop.xlane.xlu0 %2490
    %v2492 = vrcp.pop %v2491
    %v2493 = vmul.f32 %v2491, %v2492
    %v2494 = vsub.f32 1.0, %v2493
    %v2495 = vmul.f32 %v2492, %v2494
    %v2496 = vadd.f32 %v2492, %v2495
    %vm2497 = vweird.f32 %v2491
    %vm2498 = vweird.f32 %v2492
    %vm2499 = vmor %vm2497, %vm2498
    %v2500 = vsel %vm2499, %v2492, %v2496
    %v2501 = vand.u32 2147483647, %v2491
    %vm2502 = vcmp.eq.f32.partialorder %v2501, 8.507059e+37
    %v2503 = vand.u32 %v2491, 2147483648
    %v2504 = vor.u32 1.1754944e-38, %v2503
    %v2505 = vsel %vm2502, %v2504, %v2500
    %v2506 = vmul.f32 %v2488, %v2505
    %v2508 = vsel %vm1172, %v2506, 0
    %2510 = vmatpush.msra.mxu0 0.0
    %2511 = vmatpush.msra.mxu0 0.0
    %2512 = vmatpush.msra.mxu0 0.0
    %2513 = vmatpush.msra.mxu0 0.0
    %2514 = vmatpush.msra.mxu0 0.0
    %2515 = vmatpush.msra.mxu0 0.0
    %2516 = vmatpush.msra.mxu0 0.0
    %2517 = vmatpush.msra.mxu0 0.0
    %2518 = vmatpush.msra.mxu0 0.0
    %2519 = vmatpush.msra.mxu0 0.0
    %2520 = vmatpush.msra.mxu0 0.0
    %2521 = vmatpush.msra.mxu0 0.0
    %2522 = vmatpush.msra.mxu0 0.0
    %2523 = vmatpush.msra.mxu0 0.0
    %2524 = vmatpush.msra.mxu0 0.0
    %2525 = vmatpush.msra.mxu0 %v978
    %2526 = vmatmul.f32.gmra.mxu0 %v2508
    %v2527 = vpop.f32.mrf.mxu0
    %v2528 = vadd.f32 0.0, %v2527
    %2529 = vdwg.mxu0
    %2532 = vrot.lane.b32.xlu0 %v2528, 32
    %v2533 = vpop.permute.xlu0 %2532
    %v2535 = vsel %vm77, %v2460, %v2533
    %v2537 = vsel %vm992, %v2535, 0
    %2539 = vmatpush.msra.mxu0 0.0
    %2540 = vmatpush.msra.mxu0 0.0
    %2541 = vmatpush.msra.mxu0 0.0
    %2542 = vmatpush.msra.mxu0 0.0
    %2543 = vmatpush.msra.mxu0 0.0
    %2544 = vmatpush.msra.mxu0 0.0
    %2545 = vmatpush.msra.mxu0 0.0
    %2546 = vmatpush.msra.mxu0 0.0
    %2547 = vmatpush.msra.mxu0 %v1209
    %2548 = vmatpush.msra.mxu0 %v1208
    %2549 = vmatpush.msra.mxu0 %v1207
    %2550 = vmatpush.msra.mxu0 %v1206
    %2551 = vmatpush.msra.mxu0 %v1205
    %2552 = vmatpush.msra.mxu0 %v1204
    %2553 = vmatpush.msra.mxu0 %v1203
    %2554 = vmatpush.msra.mxu0 %v1202
    %2555 = vmatmul.f32.gmra.mxu0 %v2537
    %v2556 = vpop.f32.mrf.mxu0
    %v2557 = vadd.f32 %v1210, %v2556
    %2558 = vdwg.mxu0
    %v2559 = vtanh.pop %v2557
    %v2561 = vsel %vm77, %v2559, 0
    %2563 = vmatpush.msra.mxu0 0.0
    %2564 = vmatpush.msra.mxu0 0.0
    %2565 = vmatpush.msra.mxu0 0.0
    %2566 = vmatpush.msra.mxu0 0.0
    %2567 = vmatpush.msra.mxu0 0.0
    %2568 = vmatpush.msra.mxu0 0.0
    %2569 = vmatpush.msra.mxu0 0.0
    %2570 = vmatpush.msra.mxu0 0.0
    %2571 = vmatpush.msra.mxu0 0.0
    %2572 = vmatpush.msra.mxu0 0.0
    %2573 = vmatpush.msra.mxu0 0.0
    %2574 = vmatpush.msra.mxu0 0.0
    %2575 = vmatpush.msra.mxu0 %v1238
    %2576 = vmatpush.msra.mxu0 %v1237
    %2577 = vmatpush.msra.mxu0 %v1236
    %2578 = vmatpush.msra.mxu0 %v1235
    %2579 = vmatmul.f32.gmra.mxu0 %v2561
    %v2580 = vpop.f32.mrf.mxu0
    %v2581 = vadd.f32 %v1239, %v2580
    %2582 = vdwg.mxu0
    %v2583 = vsel %vm1263, %v2581, -inf
    %2584 = vmax.xlane.f32.xlu0 %v2583
    %v2585 = vpop.xlane.xlu0 %2584
    %v2586 = vsub.f32 %v2581, %v2585
    %v2587 = vmul.f32 %v2586, 1.442695
    %v2588 = vpow.pop %v2587
    %v2589 = vsel %vm1263, %v2588, 0.0
    %2590 = vadd.xlane.f32.xlu0 %v2589
    %v2591 = vpop.xlane.xlu0 %2590
    %v2592 = vrcp.pop %v2591
    %vm2593 = vcmp.ge.f32.partialorder %v2581, %v2585
    %v2594 = vsel %vm2593, %v980, 128
    %v2595 = vsel %vm1263, %v2594, 2147483647
    %v2596 = vand.u32 %v2595, 65535
    %v2597 = vshra.s32 %v2595, 16
    %v2598 = vcvt.s32.f32 %v2596
    %v2599 = vcvt.s32.f32 %v2597
    %2600 = vmin.xlane.f32.xlu0 %v2599
    %v2601 = vpop.xlane.xlu0 %2600
    %vm2602 = vcmp.eq.f32.partialorder %v2599, %v2601
    %v2603 = vsel %vm2602, %v2598, inf
    %2604 = vmin.xlane.f32.xlu0 %v2603
    %v2605 = vpop.xlane.xlu0 %2604
    %v2606 = vcvt.f32.s32 %v2605
    %v2607 = vcvt.f32.s32 %v2601
    %v2608 = vshll.u32 %v2607, 16
    %v2609 = vadd.s32 %v2608, %v2606
    %vm2610 = vcmp.eq.s32.totalorder %v980, 5
    %v2611 = vsel %vm2610, %v2609, %v2347
    %v2612 = vsel %vm2610, %v2592, %v2348
    %vm2613 = vcmp.eq.s32.totalorder %v980, %v2609
    %v2614 = vsel %vm2613, 1, 0
    %v2615 = vcvt.s32.f32 %v2614
    %v2617 = vsel %vm992, %v2615, 0
    %2619 = vmatpush.msra.mxu0 0.0
    %2620 = vmatpush.msra.mxu0 0.0
    %2621 = vmatpush.msra.mxu0 0.0
    %2622 = vmatpush.msra.mxu0 0.0
    %2623 = vmatpush.msra.mxu0 0.0
    %2624 = vmatpush.msra.mxu0 0.0
    %2625 = vmatpush.msra.mxu0 0.0
    %2626 = vmatpush.msra.mxu0 0.0
    %2627 = vmatpush.msra.mxu0 %v991
    %2628 = vmatpush.msra.mxu0 %v990
    %2629 = vmatpush.msra.mxu0 %v989
    %2630 = vmatpush.msra.mxu0 %v988
    %2631 = vmatpush.msra.mxu0 %v987
    %2632 = vmatpush.msra.mxu0 %v986
    %2633 = vmatpush.msra.mxu0 %v985
    %2634 = vmatpush.msra.mxu0 %v984
    %2635 = vmatmul.f32.gmra.mxu0 %v2617
    %v2636 = vpop.f32.mrf.mxu0
    %v2637 = vadd.f32 0.0, %v2636
    %2638 = vdwg.mxu0
    %v2640 = vsel %vm77, %v2637, 0
    %2642 = vmatpush.msra.mxu0 0.0
    %2643 = vmatpush.msra.mxu0 0.0
    %2644 = vmatpush.msra.mxu0 0.0
    %2645 = vmatpush.msra.mxu0 0.0
    %2646 = vmatpush.msra.mxu0 0.0
    %2647 = vmatpush.msra.mxu0 0.0
    %2648 = vmatpush.msra.mxu0 0.0
    %2649 = vmatpush.msra.mxu0 0.0
    %2650 = vmatpush.msra.mxu0 0.0
    %2651 = vmatpush.msra.mxu0 0.0
    %2652 = vmatpush.msra.mxu0 0.0
    %2653 = vmatpush.msra.mxu0 0.0
    %2654 = vmatpush.msra.mxu0 %v1019
    %2655 = vmatpush.msra.mxu0 %v1018
    %2656 = vmatpush.msra.mxu0 %v1017
    %2657 = vmatpush.msra.mxu0 %v1016
    %2658 = vmatmul.f32.gmra.mxu0 %v2640
    %v2659 = vpop.f32.mrf.mxu0
    %v2660 = vadd.f32 %v1020, %v2659
    %2661 = vdwg.mxu0
    %2662 = vmatpush.msra.mxu0 0.0
    %2663 = vmatpush.msra.mxu0 0.0
    %2664 = vmatpush.msra.mxu0 0.0
    %2665 = vmatpush.msra.mxu0 0.0
    %2666 = vmatpush.msra.mxu0 0.0
    %2667 = vmatpush.msra.mxu0 0.0
    %2668 = vmatpush.msra.mxu0 0.0
    %2669 = vmatpush.msra.mxu0 0.0
    %2670 = vmatpush.msra.mxu0 0.0
    %2671 = vmatpush.msra.mxu0 0.0
    %2672 = vmatpush.msra.mxu0 0.0
    %2673 = vmatpush.msra.mxu0 0.0
    %2674 = vmatpush.msra.mxu0 %v1047
    %2675 = vmatpush.msra.mxu0 %v1046
    %2676 = vmatpush.msra.mxu0 %v1045
    %2677 = vmatpush.msra.mxu0 %v1044
    %2678 = vmatmul.f32.gmra.mxu0 %v2461
    %v2679 = vpop.f32.mrf.mxu0
    %v2680 = vadd.f32 0.0, %v2679
    %2681 = vdwg.mxu0
    %v2682 = vadd.f32 %v2660, %v2680
    %v2683 = vxor.u32 %v2682, 2147483648
    %v2684 = vmul.f32 %v2683, 1.442695
    %v2685 = vpow.pop %v2684
    %v2686 = vadd.f32 %v2685, 1.0
    %v2687 = vrcp.pop %v2686
    %v2688 = vmul.f32 %v2686, %v2687
    %v2689 = vsub.f32 1.0, %v2688
    %v2690 = vmul.f32 %v2687, %v2689
    %v2691 = vadd.f32 %v2687, %v2690
    %vm2692 = vweird.f32 %v2686
    %vm2693 = vweird.f32 %v2687
    %vm2694 = vmor %vm2692, %vm2693
    %v2695 = vsel %vm2694, %v2687, %v2691
    %v2696 = vand.u32 2147483647, %v2686
    %vm2697 = vcmp.eq.f32.partialorder %v2696, 8.507059e+37
    %v2698 = vand.u32 %v2686, 2147483648
    %v2699 = vor.u32 1.1754944e-38, %v2698
    %v2700 = vsel %vm2697, %v2699, %v2695
    %v2701 = vmul.f32 1.0, %v2700
    %v2702 = vadd.f32 %v2680, %v1097
    %2704 = vrot.lane.b32.xlu0 %v2702, 64
    %v2705 = vpop.permute.xlu0 %2704
    %v2707 = vmul.f32 %v2701, %v2705
    %2709 = vrot.lane.b32.xlu0 %v2707, 64
    %v2710 = vpop.permute.xlu0 %2709
    %v2712 = vadd.f32 %v2660, %v2710
    %v2713 = vtanh.pop %v2712
    %v2714 = vsub.f32 1.0, %v2701
    %2716 = vrot.lane.b32.xlu0 %v2713, 96
    %v2717 = vpop.permute.xlu0 %2716
    %v2719 = vmul.f32 %v2714, %v2717
    %v2720 = vmul.f32 %v2701, %v2457
    %v2721 = vadd.f32 %v2719, %v2720
    %2723 = vrot.lane.b32.xlu0 %v2721, 96
    %v2724 = vpop.permute.xlu0 %2723
    %v2725 = vsel %vm77, %v2724, 0
    %2727 = vmatpush.xpose.msra.mxu0 0.0
    %2728 = vmatpush.xpose.msra.mxu0 0.0
    %2729 = vmatpush.xpose.msra.mxu0 0.0
    %2730 = vmatpush.xpose.msra.mxu0 0.0
    %2731 = vmatpush.xpose.msra.mxu0 0.0
    %2732 = vmatpush.xpose.msra.mxu0 0.0
    %2733 = vmatpush.xpose.msra.mxu0 0.0
    %2734 = vmatpush.xpose.msra.mxu0 0.0
    %2735 = vmatpush.xpose.msra.mxu0 0.0
    %2736 = vmatpush.xpose.msra.mxu0 0.0
    %2737 = vmatpush.xpose.msra.mxu0 0.0
    %2738 = vmatpush.xpose.msra.mxu0 0.0
    %2739 = vmatpush.xpose.msra.mxu0 0.0
    %2740 = vmatpush.xpose.msra.mxu0 0.0
    %2741 = vmatpush.xpose.msra.mxu0 0.0
    %2742 = vmatpush.xpose.msra.mxu0 %v1125
    %2743 = vmatmul.f32.gmra.mxu0 %v2725
    %v2744 = vpop.f32.mrf.mxu0
    %v2745 = vadd.f32 0.0, %v2744
    %2746 = vdwg.mxu0
    %v2747 = vsel %vm1147, %v2745, -inf
    %2748 = vmax.xlane.f32.xlu0 %v2747
    %v2749 = vpop.xlane.xlu0 %2748
    %v2750 = vsub.f32 %v2745, %v2749
    %v2751 = vmul.f32 %v2750, 1.442695
    %v2752 = vpow.pop %v2751
    %v2753 = vsel %vm1147, %v2752, 0.0
    %2754 = vadd.xlane.f32.xlu0 %v2753
    %v2755 = vpop.xlane.xlu0 %2754
    %v2756 = vrcp.pop %v2755
    %v2757 = vmul.f32 %v2755, %v2756
    %v2758 = vsub.f32 1.0, %v2757
    %v2759 = vmul.f32 %v2756, %v2758
    %v2760 = vadd.f32 %v2756, %v2759
    %vm2761 = vweird.f32 %v2755
    %vm2762 = vweird.f32 %v2756
    %vm2763 = vmor %vm2761, %vm2762
    %v2764 = vsel %vm2763, %v2756, %v2760
    %v2765 = vand.u32 2147483647, %v2755
    %vm2766 = vcmp.eq.f32.partialorder %v2765, 8.507059e+37
    %v2767 = vand.u32 %v2755, 2147483648
    %v2768 = vor.u32 1.1754944e-38, %v2767
    %v2769 = vsel %vm2766, %v2768, %v2764
    %v2770 = vmul.f32 %v2752, %v2769
    %v2772 = vsel %vm1172, %v2770, 0
    %2774 = vmatpush.msra.mxu0 0.0
    %2775 = vmatpush.msra.mxu0 0.0
    %2776 = vmatpush.msra.mxu0 0.0
    %2777 = vmatpush.msra.mxu0 0.0
    %2778 = vmatpush.msra.mxu0 0.0
    %2779 = vmatpush.msra.mxu0 0.0
    %2780 = vmatpush.msra.mxu0 0.0
    %2781 = vmatpush.msra.mxu0 0.0
    %2782 = vmatpush.msra.mxu0 0.0
    %2783 = vmatpush.msra.mxu0 0.0
    %2784 = vmatpush.msra.mxu0 0.0
    %2785 = vmatpush.msra.mxu0 0.0
    %2786 = vmatpush.msra.mxu0 0.0
    %2787 = vmatpush.msra.mxu0 0.0
    %2788 = vmatpush.msra.mxu0 0.0
    %2789 = vmatpush.msra.mxu0 %v978
    %2790 = vmatmul.f32.gmra.mxu0 %v2772
    %v2791 = vpop.f32.mrf.mxu0
    %v2792 = vadd.f32 0.0, %v2791
    %2793 = vdwg.mxu0
    %2796 = vrot.lane.b32.xlu0 %v2792, 32
    %v2797 = vpop.permute.xlu0 %2796
    %v2799 = vsel %vm77, %v2724, %v2797
    %v2801 = vsel %vm992, %v2799, 0
    %2803 = vmatpush.msra.mxu0 0.0
    %2804 = vmatpush.msra.mxu0 0.0
    %2805 = vmatpush.msra.mxu0 0.0
    %2806 = vmatpush.msra.mxu0 0.0
    %2807 = vmatpush.msra.mxu0 0.0
    %2808 = vmatpush.msra.mxu0 0.0
    %2809 = vmatpush.msra.mxu0 0.0
    %2810 = vmatpush.msra.mxu0 0.0
    %2811 = vmatpush.msra.mxu0 %v1209
    %2812 = vmatpush.msra.mxu0 %v1208
    %2813 = vmatpush.msra.mxu0 %v1207
    %2814 = vmatpush.msra.mxu0 %v1206
    %2815 = vmatpush.msra.mxu0 %v1205
    %2816 = vmatpush.msra.mxu0 %v1204
    %2817 = vmatpush.msra.mxu0 %v1203
    %2818 = vmatpush.msra.mxu0 %v1202
    %2819 = vmatmul.f32.gmra.mxu0 %v2801
    %v2820 = vpop.f32.mrf.mxu0
    %v2821 = vadd.f32 %v1210, %v2820
    %2822 = vdwg.mxu0
    %v2823 = vtanh.pop %v2821
    %v2825 = vsel %vm77, %v2823, 0
    %2827 = vmatpush.msra.mxu0 0.0
    %2828 = vmatpush.msra.mxu0 0.0
    %2829 = vmatpush.msra.mxu0 0.0
    %2830 = vmatpush.msra.mxu0 0.0
    %2831 = vmatpush.msra.mxu0 0.0
    %2832 = vmatpush.msra.mxu0 0.0
    %2833 = vmatpush.msra.mxu0 0.0
    %2834 = vmatpush.msra.mxu0 0.0
    %2835 = vmatpush.msra.mxu0 0.0
    %2836 = vmatpush.msra.mxu0 0.0
    %2837 = vmatpush.msra.mxu0 0.0
    %2838 = vmatpush.msra.mxu0 0.0
    %2839 = vmatpush.msra.mxu0 %v1238
    %2840 = vmatpush.msra.mxu0 %v1237
    %2841 = vmatpush.msra.mxu0 %v1236
    %2842 = vmatpush.msra.mxu0 %v1235
    %2843 = vmatmul.f32.gmra.mxu0 %v2825
    %v2844 = vpop.f32.mrf.mxu0
    %v2845 = vadd.f32 %v1239, %v2844
    %2846 = vdwg.mxu0
    %v2847 = vsel %vm1263, %v2845, -inf
    %2848 = vmax.xlane.f32.xlu0 %v2847
    %v2849 = vpop.xlane.xlu0 %2848
    %v2850 = vsub.f32 %v2845, %v2849
    %v2851 = vmul.f32 %v2850, 1.442695
    %v2852 = vpow.pop %v2851
    %v2853 = vsel %vm1263, %v2852, 0.0
    %2854 = vadd.xlane.f32.xlu0 %v2853
    %v2855 = vpop.xlane.xlu0 %2854
    %v2856 = vrcp.pop %v2855
    %vm2857 = vcmp.ge.f32.partialorder %v2845, %v2849
    %v2858 = vsel %vm2857, %v980, 128
    %v2859 = vsel %vm1263, %v2858, 2147483647
    %v2860 = vand.u32 %v2859, 65535
    %v2861 = vshra.s32 %v2859, 16
    %v2862 = vcvt.s32.f32 %v2860
    %v2863 = vcvt.s32.f32 %v2861
    %2864 = vmin.xlane.f32.xlu0 %v2863
    %v2865 = vpop.xlane.xlu0 %2864
    %vm2866 = vcmp.eq.f32.partialorder %v2863, %v2865
    %v2867 = vsel %vm2866, %v2862, inf
    %2868 = vmin.xlane.f32.xlu0 %v2867
    %v2869 = vpop.xlane.xlu0 %2868
    %v2870 = vcvt.f32.s32 %v2869
    %v2871 = vcvt.f32.s32 %v2865
    %v2872 = vshll.u32 %v2871, 16
    %v2873 = vadd.s32 %v2872, %v2870
    %vm2874 = vcmp.eq.s32.totalorder %v980, 6
    %v2875 = vsel %vm2874, %v2873, %v2611
    %v2876 = vsel %vm2874, %v2856, %v2612
    %vm2877 = vcmp.eq.s32.totalorder %v980, %v2873
    %v2878 = vsel %vm2877, 1, 0
    %v2879 = vcvt.s32.f32 %v2878
    %v2881 = vsel %vm992, %v2879, 0
    %2883 = vmatpush.msra.mxu0 0.0
    %2884 = vmatpush.msra.mxu0 0.0
    %2885 = vmatpush.msra.mxu0 0.0
    %2886 = vmatpush.msra.mxu0 0.0
    %2887 = vmatpush.msra.mxu0 0.0
    %2888 = vmatpush.msra.mxu0 0.0
    %2889 = vmatpush.msra.mxu0 0.0
    %2890 = vmatpush.msra.mxu0 0.0
    %2891 = vmatpush.msra.mxu0 %v991
    %2892 = vmatpush.msra.mxu0 %v990
    %2893 = vmatpush.msra.mxu0 %v989
    %2894 = vmatpush.msra.mxu0 %v988
    %2895 = vmatpush.msra.mxu0 %v987
    %2896 = vmatpush.msra.mxu0 %v986
    %2897 = vmatpush.msra.mxu0 %v985
    %2898 = vmatpush.msra.mxu0 %v984
    %2899 = vmatmul.f32.gmra.mxu0 %v2881
    %v2900 = vpop.f32.mrf.mxu0
    %v2901 = vadd.f32 0.0, %v2900
    %2902 = vdwg.mxu0
    %v2904 = vsel %vm77, %v2901, 0
    %2906 = vmatpush.msra.mxu0 0.0
    %2907 = vmatpush.msra.mxu0 0.0
    %2908 = vmatpush.msra.mxu0 0.0
    %2909 = vmatpush.msra.mxu0 0.0
    %2910 = vmatpush.msra.mxu0 0.0
    %2911 = vmatpush.msra.mxu0 0.0
    %2912 = vmatpush.msra.mxu0 0.0
    %2913 = vmatpush.msra.mxu0 0.0
    %2914 = vmatpush.msra.mxu0 0.0
    %2915 = vmatpush.msra.mxu0 0.0
    %2916 = vmatpush.msra.mxu0 0.0
    %2917 = vmatpush.msra.mxu0 0.0
    %2918 = vmatpush.msra.mxu0 %v1019
    %2919 = vmatpush.msra.mxu0 %v1018
    %2920 = vmatpush.msra.mxu0 %v1017
    %2921 = vmatpush.msra.mxu0 %v1016
    %2922 = vmatmul.f32.gmra.mxu0 %v2904
    %v2923 = vpop.f32.mrf.mxu0
    %v2924 = vadd.f32 %v1020, %v2923
    %2925 = vdwg.mxu0
    %2926 = vmatpush.msra.mxu0 0.0
    %2927 = vmatpush.msra.mxu0 0.0
    %2928 = vmatpush.msra.mxu0 0.0
    %2929 = vmatpush.msra.mxu0 0.0
    %2930 = vmatpush.msra.mxu0 0.0
    %2931 = vmatpush.msra.mxu0 0.0
    %2932 = vmatpush.msra.mxu0 0.0
    %2933 = vmatpush.msra.mxu0 0.0
    %2934 = vmatpush.msra.mxu0 0.0
    %2935 = vmatpush.msra.mxu0 0.0
    %2936 = vmatpush.msra.mxu0 0.0
    %2937 = vmatpush.msra.mxu0 0.0
    %2938 = vmatpush.msra.mxu0 %v1047
    %2939 = vmatpush.msra.mxu0 %v1046
    %2940 = vmatpush.msra.mxu0 %v1045
    %2941 = vmatpush.msra.mxu0 %v1044
    %2942 = vmatmul.f32.gmra.mxu0 %v2725
    %v2943 = vpop.f32.mrf.mxu0
    %v2944 = vadd.f32 0.0, %v2943
    %2945 = vdwg.mxu0
    %v2946 = vadd.f32 %v2924, %v2944
    %v2947 = vxor.u32 %v2946, 2147483648
    %v2948 = vmul.f32 %v2947, 1.442695
    %v2949 = vpow.pop %v2948
    %v2950 = vadd.f32 %v2949, 1.0
    %v2951 = vrcp.pop %v2950
    %v2952 = vmul.f32 %v2950, %v2951
    %v2953 = vsub.f32 1.0, %v2952
    %v2954 = vmul.f32 %v2951, %v2953
    %v2955 = vadd.f32 %v2951, %v2954
    %vm2956 = vweird.f32 %v2950
    %vm2957 = vweird.f32 %v2951
    %vm2958 = vmor %vm2956, %vm2957
    %v2959 = vsel %vm2958, %v2951, %v2955
    %v2960 = vand.u32 2147483647, %v2950
    %vm2961 = vcmp.eq.f32.partialorder %v2960, 8.507059e+37
    %v2962 = vand.u32 %v2950, 2147483648
    %v2963 = vor.u32 1.1754944e-38, %v2962
    %v2964 = vsel %vm2961, %v2963, %v2959
    %v2965 = vmul.f32 1.0, %v2964
    %v2966 = vadd.f32 %v2944, %v1097
    %2968 = vrot.lane.b32.xlu0 %v2966, 64
    %v2969 = vpop.permute.xlu0 %2968
    %v2971 = vmul.f32 %v2965, %v2969
    %2973 = vrot.lane.b32.xlu0 %v2971, 64
    %v2974 = vpop.permute.xlu0 %2973
    %v2976 = vadd.f32 %v2924, %v2974
    %v2977 = vtanh.pop %v2976
    %v2978 = vsub.f32 1.0, %v2965
    %2980 = vrot.lane.b32.xlu0 %v2977, 96
    %v2981 = vpop.permute.xlu0 %2980
    %v2983 = vmul.f32 %v2978, %v2981
    %v2984 = vmul.f32 %v2965, %v2721
    %v2985 = vadd.f32 %v2983, %v2984
    %2987 = vrot.lane.b32.xlu0 %v2985, 96
    %v2988 = vpop.permute.xlu0 %2987
    %v2989 = vsel %vm77, %v2988, 0
    %2991 = vmatpush.xpose.msra.mxu0 0.0
    %2992 = vmatpush.xpose.msra.mxu0 0.0
    %2993 = vmatpush.xpose.msra.mxu0 0.0
    %2994 = vmatpush.xpose.msra.mxu0 0.0
    %2995 = vmatpush.xpose.msra.mxu0 0.0
    %2996 = vmatpush.xpose.msra.mxu0 0.0
    %2997 = vmatpush.xpose.msra.mxu0 0.0
    %2998 = vmatpush.xpose.msra.mxu0 0.0
    %2999 = vmatpush.xpose.msra.mxu0 0.0
    %3000 = vmatpush.xpose.msra.mxu0 0.0
    %3001 = vmatpush.xpose.msra.mxu0 0.0
    %3002 = vmatpush.xpose.msra.mxu0 0.0
    %3003 = vmatpush.xpose.msra.mxu0 0.0
    %3004 = vmatpush.xpose.msra.mxu0 0.0
    %3005 = vmatpush.xpose.msra.mxu0 0.0
    %3006 = vmatpush.xpose.msra.mxu0 %v1125
    %3007 = vmatmul.f32.gmra.mxu0 %v2989
    %v3008 = vpop.f32.mrf.mxu0
    %v3009 = vadd.f32 0.0, %v3008
    %3010 = vdwg.mxu0
    %v3011 = vsel %vm1147, %v3009, -inf
    %3012 = vmax.xlane.f32.xlu0 %v3011
    %v3013 = vpop.xlane.xlu0 %3012
    %v3014 = vsub.f32 %v3009, %v3013
    %v3015 = vmul.f32 %v3014, 1.442695
    %v3016 = vpow.pop %v3015
    %v3017 = vsel %vm1147, %v3016, 0.0
    %3018 = vadd.xlane.f32.xlu0 %v3017
    %v3019 = vpop.xlane.xlu0 %3018
    %v3020 = vrcp.pop %v3019
    %v3021 = vmul.f32 %v3019, %v3020
    %v3022 = vsub.f32 1.0, %v3021
    %v3023 = vmul.f32 %v3020, %v3022
    %v3024 = vadd.f32 %v3020, %v3023
    %vm3025 = vweird.f32 %v3019
    %vm3026 = vweird.f32 %v3020
    %vm3027 = vmor %vm3025, %vm3026
    %v3028 = vsel %vm3027, %v3020, %v3024
    %v3029 = vand.u32 2147483647, %v3019
    %vm3030 = vcmp.eq.f32.partialorder %v3029, 8.507059e+37
    %v3031 = vand.u32 %v3019, 2147483648
    %v3032 = vor.u32 1.1754944e-38, %v3031
    %v3033 = vsel %vm3030, %v3032, %v3028
    %v3034 = vmul.f32 %v3016, %v3033
    %v3036 = vsel %vm1172, %v3034, 0
    %3038 = vmatpush.msra.mxu0 0.0
    %3039 = vmatpush.msra.mxu0 0.0
    %3040 = vmatpush.msra.mxu0 0.0
    %3041 = vmatpush.msra.mxu0 0.0
    %3042 = vmatpush.msra.mxu0 0.0
    %3043 = vmatpush.msra.mxu0 0.0
    %3044 = vmatpush.msra.mxu0 0.0
    %3045 = vmatpush.msra.mxu0 0.0
    %3046 = vmatpush.msra.mxu0 0.0
    %3047 = vmatpush.msra.mxu0 0.0
    %3048 = vmatpush.msra.mxu0 0.0
    %3049 = vmatpush.msra.mxu0 0.0
    %3050 = vmatpush.msra.mxu0 0.0
    %3051 = vmatpush.msra.mxu0 0.0
    %3052 = vmatpush.msra.mxu0 0.0
    %3053 = vmatpush.msra.mxu0 %v978
    %3054 = vmatmul.f32.gmra.mxu0 %v3036
    %v3055 = vpop.f32.mrf.mxu0
    %v3056 = vadd.f32 0.0, %v3055
    %3057 = vdwg.mxu0
    %3060 = vrot.lane.b32.xlu0 %v3056, 32
    %v3061 = vpop.permute.xlu0 %3060
    %v3063 = vsel %vm77, %v2988, %v3061
    %v3065 = vsel %vm992, %v3063, 0
    %3067 = vmatpush.msra.mxu0 0.0
    %3068 = vmatpush.msra.mxu0 0.0
    %3069 = vmatpush.msra.mxu0 0.0
    %3070 = vmatpush.msra.mxu0 0.0
    %3071 = vmatpush.msra.mxu0 0.0
    %3072 = vmatpush.msra.mxu0 0.0
    %3073 = vmatpush.msra.mxu0 0.0
    %3074 = vmatpush.msra.mxu0 0.0
    %3075 = vmatpush.msra.mxu0 %v1209
    %3076 = vmatpush.msra.mxu0 %v1208
    %3077 = vmatpush.msra.mxu0 %v1207
    %3078 = vmatpush.msra.mxu0 %v1206
    %3079 = vmatpush.msra.mxu0 %v1205
    %3080 = vmatpush.msra.mxu0 %v1204
    %3081 = vmatpush.msra.mxu0 %v1203
    %3082 = vmatpush.msra.mxu0 %v1202
    %3083 = vmatmul.f32.gmra.mxu0 %v3065
    %v3084 = vpop.f32.mrf.mxu0
    %v3085 = vadd.f32 %v1210, %v3084
    %3086 = vdwg.mxu0
    %v3087 = vtanh.pop %v3085
    %v3089 = vsel %vm77, %v3087, 0
    %3091 = vmatpush.msra.mxu0 0.0
    %3092 = vmatpush.msra.mxu0 0.0
    %3093 = vmatpush.msra.mxu0 0.0
    %3094 = vmatpush.msra.mxu0 0.0
    %3095 = vmatpush.msra.mxu0 0.0
    %3096 = vmatpush.msra.mxu0 0.0
    %3097 = vmatpush.msra.mxu0 0.0
    %3098 = vmatpush.msra.mxu0 0.0
    %3099 = vmatpush.msra.mxu0 0.0
    %3100 = vmatpush.msra.mxu0 0.0
    %3101 = vmatpush.msra.mxu0 0.0
    %3102 = vmatpush.msra.mxu0 0.0
    %3103 = vmatpush.msra.mxu0 %v1238
    %3104 = vmatpush.msra.mxu0 %v1237
    %3105 = vmatpush.msra.mxu0 %v1236
    %3106 = vmatpush.msra.mxu0 %v1235
    %3107 = vmatmul.f32.gmra.mxu0 %v3089
    %v3108 = vpop.f32.mrf.mxu0
    %v3109 = vadd.f32 %v1239, %v3108
    %3110 = vdwg.mxu0
    %v3111 = vsel %vm1263, %v3109, -inf
    %3112 = vmax.xlane.f32.xlu0 %v3111
    %v3113 = vpop.xlane.xlu0 %3112
    %v3114 = vsub.f32 %v3109, %v3113
    %v3115 = vmul.f32 %v3114, 1.442695
    %v3116 = vpow.pop %v3115
    %v3117 = vsel %vm1263, %v3116, 0.0
    %3118 = vadd.xlane.f32.xlu0 %v3117
    %v3119 = vpop.xlane.xlu0 %3118
    %v3120 = vrcp.pop %v3119
    %vm3121 = vcmp.ge.f32.partialorder %v3109, %v3113
    %v3122 = vsel %vm3121, %v980, 128
    %v3123 = vsel %vm1263, %v3122, 2147483647
    %v3124 = vand.u32 %v3123, 65535
    %v3125 = vshra.s32 %v3123, 16
    %v3126 = vcvt.s32.f32 %v3124
    %v3127 = vcvt.s32.f32 %v3125
    %3128 = vmin.xlane.f32.xlu0 %v3127
    %v3129 = vpop.xlane.xlu0 %3128
    %vm3130 = vcmp.eq.f32.partialorder %v3127, %v3129
    %v3131 = vsel %vm3130, %v3126, inf
    %3132 = vmin.xlane.f32.xlu0 %v3131
    %v3133 = vpop.xlane.xlu0 %3132
    %v3134 = vcvt.f32.s32 %v3133
    %v3135 = vcvt.f32.s32 %v3129
    %v3136 = vshll.u32 %v3135, 16
    %v3137 = vadd.s32 %v3136, %v3134
    %vm3138 = vcmp.eq.s32.totalorder %v980, 7
    %v3139 = vsel %vm3138, %v3137, %v2875
    %v3140 = vsel %vm3138, %v3120, %v2876
    %vm3141 = vcmp.eq.s32.totalorder %v980, %v3137
    %v3142 = vsel %vm3141, 1, 0
    %v3143 = vcvt.s32.f32 %v3142
    %v3145 = vsel %vm992, %v3143, 0
    %3147 = vmatpush.msra.mxu0 0.0
    %3148 = vmatpush.msra.mxu0 0.0
    %3149 = vmatpush.msra.mxu0 0.0
    %3150 = vmatpush.msra.mxu0 0.0
    %3151 = vmatpush.msra.mxu0 0.0
    %3152 = vmatpush.msra.mxu0 0.0
    %3153 = vmatpush.msra.mxu0 0.0
    %3154 = vmatpush.msra.mxu0 0.0
    %3155 = vmatpush.msra.mxu0 %v991
    %3156 = vmatpush.msra.mxu0 %v990
    %3157 = vmatpush.msra.mxu0 %v989
    %3158 = vmatpush.msra.mxu0 %v988
    %3159 = vmatpush.msra.mxu0 %v987
    %3160 = vmatpush.msra.mxu0 %v986
    %3161 = vmatpush.msra.mxu0 %v985
    %3162 = vmatpush.msra.mxu0 %v984
    %3163 = vmatmul.f32.gmra.mxu0 %v3145
    %v3164 = vpop.f32.mrf.mxu0
    %v3165 = vadd.f32 0.0, %v3164
    %3166 = vdwg.mxu0
    %v3168 = vsel %vm77, %v3165, 0
    %3170 = vmatpush.msra.mxu0 0.0
    %3171 = vmatpush.msra.mxu0 0.0
    %3172 = vmatpush.msra.mxu0 0.0
    %3173 = vmatpush.msra.mxu0 0.0
    %3174 = vmatpush.msra.mxu0 0.0
    %3175 = vmatpush.msra.mxu0 0.0
    %3176 = vmatpush.msra.mxu0 0.0
    %3177 = vmatpush.msra.mxu0 0.0
    %3178 = vmatpush.msra.mxu0 0.0
    %3179 = vmatpush.msra.mxu0 0.0
    %3180 = vmatpush.msra.mxu0 0.0
    %3181 = vmatpush.msra.mxu0 0.0
    %3182 = vmatpush.msra.mxu0 %v1019
    %3183 = vmatpush.msra.mxu0 %v1018
    %3184 = vmatpush.msra.mxu0 %v1017
    %3185 = vmatpush.msra.mxu0 %v1016
    %3186 = vmatmul.f32.gmra.mxu0 %v3168
    %v3187 = vpop.f32.mrf.mxu0
    %v3188 = vadd.f32 %v1020, %v3187
    %3189 = vdwg.mxu0
    %3190 = vmatpush.msra.mxu0 0.0
    %3191 = vmatpush.msra.mxu0 0.0
    %3192 = vmatpush.msra.mxu0 0.0
    %3193 = vmatpush.msra.mxu0 0.0
    %3194 = vmatpush.msra.mxu0 0.0
    %3195 = vmatpush.msra.mxu0 0.0
    %3196 = vmatpush.msra.mxu0 0.0
    %3197 = vmatpush.msra.mxu0 0.0
    %3198 = vmatpush.msra.mxu0 0.0
    %3199 = vmatpush.msra.mxu0 0.0
    %3200 = vmatpush.msra.mxu0 0.0
    %3201 = vmatpush.msra.mxu0 0.0
    %3202 = vmatpush.msra.mxu0 %v1047
    %3203 = vmatpush.msra.mxu0 %v1046
    %3204 = vmatpush.msra.mxu0 %v1045
    %3205 = vmatpush.msra.mxu0 %v1044
    %3206 = vmatmul.f32.gmra.mxu0 %v2989
    %v3207 = vpop.f32.mrf.mxu0
    %v3208 = vadd.f32 0.0, %v3207
    %3209 = vdwg.mxu0
    %v3210 = vadd.f32 %v3188, %v3208
    %v3211 = vxor.u32 %v3210, 2147483648
    %v3212 = vmul.f32 %v3211, 1.442695
    %v3213 = vpow.pop %v3212
    %v3214 = vadd.f32 %v3213, 1.0
    %v3215 = vrcp.pop %v3214
    %v3216 = vmul.f32 %v3214, %v3215
    %v3217 = vsub.f32 1.0, %v3216
    %v3218 = vmul.f32 %v3215, %v3217
    %v3219 = vadd.f32 %v3215, %v3218
    %vm3220 = vweird.f32 %v3214
    %vm3221 = vweird.f32 %v3215
    %vm3222 = vmor %vm3220, %vm3221
    %v3223 = vsel %vm3222, %v3215, %v3219
    %v3224 = vand.u32 2147483647, %v3214
    %vm3225 = vcmp.eq.f32.partialorder %v3224, 8.507059e+37
    %v3226 = vand.u32 %v3214, 2147483648
    %v3227 = vor.u32 1.1754944e-38, %v3226
    %v3228 = vsel %vm3225, %v3227, %v3223
    %v3229 = vmul.f32 1.0, %v3228
    %v3230 = vadd.f32 %v3208, %v1097
    %3232 = vrot.lane.b32.xlu0 %v3230, 64
    %v3233 = vpop.permute.xlu0 %3232
    %v3235 = vmul.f32 %v3229, %v3233
    %3237 = vrot.lane.b32.xlu0 %v3235, 64
    %v3238 = vpop.permute.xlu0 %3237
    %v3240 = vadd.f32 %v3188, %v3238
    %v3241 = vtanh.pop %v3240
    %v3242 = vsub.f32 1.0, %v3229
    %3244 = vrot.lane.b32.xlu0 %v3241, 96
    %v3245 = vpop.permute.xlu0 %3244
    %v3247 = vmul.f32 %v3242, %v3245
    %v3248 = vmul.f32 %v3229, %v2985
    %v3249 = vadd.f32 %v3247, %v3248
    %3251 = vrot.lane.b32.xlu0 %v3249, 96
    %v3252 = vpop.permute.xlu0 %3251
    %v3253 = vsel %vm77, %v3252, 0
    %3255 = vmatpush.xpose.msra.mxu0 0.0
    %3256 = vmatpush.xpose.msra.mxu0 0.0
    %3257 = vmatpush.xpose.msra.mxu0 0.0
    %3258 = vmatpush.xpose.msra.mxu0 0.0
    %3259 = vmatpush.xpose.msra.mxu0 0.0
    %3260 = vmatpush.xpose.msra.mxu0 0.0
    %3261 = vmatpush.xpose.msra.mxu0 0.0
    %3262 = vmatpush.xpose.msra.mxu0 0.0
    %3263 = vmatpush.xpose.msra.mxu0 0.0
    %3264 = vmatpush.xpose.msra.mxu0 0.0
    %3265 = vmatpush.xpose.msra.mxu0 0.0
    %3266 = vmatpush.xpose.msra.mxu0 0.0
    %3267 = vmatpush.xpose.msra.mxu0 0.0
    %3268 = vmatpush.xpose.msra.mxu0 0.0
    %3269 = vmatpush.xpose.msra.mxu0 0.0
    %3270 = vmatpush.xpose.msra.mxu0 %v1125
    %3271 = vmatmul.f32.gmra.mxu0 %v3253
    %v3272 = vpop.f32.mrf.mxu0
    %v3273 = vadd.f32 0.0, %v3272
    %3274 = vdwg.mxu0
    %v3275 = vsel %vm1147, %v3273, -inf
    %3276 = vmax.xlane.f32.xlu0 %v3275
    %v3277 = vpop.xlane.xlu0 %3276
    %v3278 = vsub.f32 %v3273, %v3277
    %v3279 = vmul.f32 %v3278, 1.442695
    %v3280 = vpow.pop %v3279
    %v3281 = vsel %vm1147, %v3280, 0.0
    %3282 = vadd.xlane.f32.xlu0 %v3281
    %v3283 = vpop.xlane.xlu0 %3282
    %v3284 = vrcp.pop %v3283
    %v3285 = vmul.f32 %v3283, %v3284
    %v3286 = vsub.f32 1.0, %v3285
    %v3287 = vmul.f32 %v3284, %v3286
    %v3288 = vadd.f32 %v3284, %v3287
    %vm3289 = vweird.f32 %v3283
    %vm3290 = vweird.f32 %v3284
    %vm3291 = vmor %vm3289, %vm3290
    %v3292 = vsel %vm3291, %v3284, %v3288
    %v3293 = vand.u32 2147483647, %v3283
    %vm3294 = vcmp.eq.f32.partialorder %v3293, 8.507059e+37
    %v3295 = vand.u32 %v3283, 2147483648
    %v3296 = vor.u32 1.1754944e-38, %v3295
    %v3297 = vsel %vm3294, %v3296, %v3292
    %v3298 = vmul.f32 %v3280, %v3297
    %v3300 = vsel %vm1172, %v3298, 0
    %3302 = vmatpush.msra.mxu0 0.0
    %3303 = vmatpush.msra.mxu0 0.0
    %3304 = vmatpush.msra.mxu0 0.0
    %3305 = vmatpush.msra.mxu0 0.0
    %3306 = vmatpush.msra.mxu0 0.0
    %3307 = vmatpush.msra.mxu0 0.0
    %3308 = vmatpush.msra.mxu0 0.0
    %3309 = vmatpush.msra.mxu0 0.0
    %3310 = vmatpush.msra.mxu0 0.0
    %3311 = vmatpush.msra.mxu0 0.0
    %3312 = vmatpush.msra.mxu0 0.0
    %3313 = vmatpush.msra.mxu0 0.0
    %3314 = vmatpush.msra.mxu0 0.0
    %3315 = vmatpush.msra.mxu0 0.0
    %3316 = vmatpush.msra.mxu0 0.0
    %3317 = vmatpush.msra.mxu0 %v978
    %3318 = vmatmul.f32.gmra.mxu0 %v3300
    %v3319 = vpop.f32.mrf.mxu0
    %v3320 = vadd.f32 0.0, %v3319
    %3321 = vdwg.mxu0
    %3324 = vrot.lane.b32.xlu0 %v3320, 32
    %v3325 = vpop.permute.xlu0 %3324
    %v3327 = vsel %vm77, %v3252, %v3325
    %v3329 = vsel %vm992, %v3327, 0
    %3331 = vmatpush.msra.mxu0 0.0
    %3332 = vmatpush.msra.mxu0 0.0
    %3333 = vmatpush.msra.mxu0 0.0
    %3334 = vmatpush.msra.mxu0 0.0
    %3335 = vmatpush.msra.mxu0 0.0
    %3336 = vmatpush.msra.mxu0 0.0
    %3337 = vmatpush.msra.mxu0 0.0
    %3338 = vmatpush.msra.mxu0 0.0
    %3339 = vmatpush.msra.mxu0 %v1209
    %3340 = vmatpush.msra.mxu0 %v1208
    %3341 = vmatpush.msra.mxu0 %v1207
    %3342 = vmatpush.msra.mxu0 %v1206
    %3343 = vmatpush.msra.mxu0 %v1205
    %3344 = vmatpush.msra.mxu0 %v1204
    %3345 = vmatpush.msra.mxu0 %v1203
    %3346 = vmatpush.msra.mxu0 %v1202
    %3347 = vmatmul.f32.gmra.mxu0 %v3329
    %v3348 = vpop.f32.mrf.mxu0
    %v3349 = vadd.f32 %v1210, %v3348
    %3350 = vdwg.mxu0
    %v3351 = vtanh.pop %v3349
    %v3353 = vsel %vm77, %v3351, 0
    %3355 = vmatpush.msra.mxu0 0.0
    %3356 = vmatpush.msra.mxu0 0.0
    %3357 = vmatpush.msra.mxu0 0.0
    %3358 = vmatpush.msra.mxu0 0.0
    %3359 = vmatpush.msra.mxu0 0.0
    %3360 = vmatpush.msra.mxu0 0.0
    %3361 = vmatpush.msra.mxu0 0.0
    %3362 = vmatpush.msra.mxu0 0.0
    %3363 = vmatpush.msra.mxu0 0.0
    %3364 = vmatpush.msra.mxu0 0.0
    %3365 = vmatpush.msra.mxu0 0.0
    %3366 = vmatpush.msra.mxu0 0.0
    %3367 = vmatpush.msra.mxu0 %v1238
    %3368 = vmatpush.msra.mxu0 %v1237
    %3369 = vmatpush.msra.mxu0 %v1236
    %3370 = vmatpush.msra.mxu0 %v1235
    %3371 = vmatmul.f32.gmra.mxu0 %v3353
    %v3372 = vpop.f32.mrf.mxu0
    %v3373 = vadd.f32 %v1239, %v3372
    %3374 = vdwg.mxu0
    %v3375 = vsel %vm1263, %v3373, -inf
    %3376 = vmax.xlane.f32.xlu0 %v3375
    %v3377 = vpop.xlane.xlu0 %3376
    %v3378 = vsub.f32 %v3373, %v3377
    %v3379 = vmul.f32 %v3378, 1.442695
    %v3380 = vpow.pop %v3379
    %v3381 = vsel %vm1263, %v3380, 0.0
    %3382 = vadd.xlane.f32.xlu0 %v3381
    %v3383 = vpop.xlane.xlu0 %3382
    %v3384 = vrcp.pop %v3383
    %vm3385 = vcmp.ge.f32.partialorder %v3373, %v3377
    %v3386 = vsel %vm3385, %v980, 128
    %v3387 = vsel %vm1263, %v3386, 2147483647
    %v3388 = vand.u32 %v3387, 65535
    %v3389 = vshra.s32 %v3387, 16
    %v3390 = vcvt.s32.f32 %v3388
    %v3391 = vcvt.s32.f32 %v3389
    %3392 = vmin.xlane.f32.xlu0 %v3391
    %v3393 = vpop.xlane.xlu0 %3392
    %vm3394 = vcmp.eq.f32.partialorder %v3391, %v3393
    %v3395 = vsel %vm3394, %v3390, inf
    %3396 = vmin.xlane.f32.xlu0 %v3395
    %v3397 = vpop.xlane.xlu0 %3396
    %v3398 = vcvt.f32.s32 %v3397
    %v3399 = vcvt.f32.s32 %v3393
    %v3400 = vshll.u32 %v3399, 16
    %v3401 = vadd.s32 %v3400, %v3398
    %vm3402 = vcmp.eq.s32.totalorder %v980, 8
    %v3403 = vsel %vm3402, %v3401, %v3139
    %v3404 = vsel %vm3402, %v3384, %v3140
    %vm3405 = vcmp.eq.s32.totalorder %v980, %v3401
    %v3406 = vsel %vm3405, 1, 0
    %v3407 = vcvt.s32.f32 %v3406
    %v3409 = vsel %vm992, %v3407, 0
    %3411 = vmatpush.msra.mxu0 0.0
    %3412 = vmatpush.msra.mxu0 0.0
    %3413 = vmatpush.msra.mxu0 0.0
    %3414 = vmatpush.msra.mxu0 0.0
    %3415 = vmatpush.msra.mxu0 0.0
    %3416 = vmatpush.msra.mxu0 0.0
    %3417 = vmatpush.msra.mxu0 0.0
    %3418 = vmatpush.msra.mxu0 0.0
    %3419 = vmatpush.msra.mxu0 %v991
    %3420 = vmatpush.msra.mxu0 %v990
    %3421 = vmatpush.msra.mxu0 %v989
    %3422 = vmatpush.msra.mxu0 %v988
    %3423 = vmatpush.msra.mxu0 %v987
    %3424 = vmatpush.msra.mxu0 %v986
    %3425 = vmatpush.msra.mxu0 %v985
    %3426 = vmatpush.msra.mxu0 %v984
    %3427 = vmatmul.f32.gmra.mxu0 %v3409
    %v3428 = vpop.f32.mrf.mxu0
    %v3429 = vadd.f32 0.0, %v3428
    %3430 = vdwg.mxu0
    %v3432 = vsel %vm77, %v3429, 0
    %3434 = vmatpush.msra.mxu0 0.0
    %3435 = vmatpush.msra.mxu0 0.0
    %3436 = vmatpush.msra.mxu0 0.0
    %3437 = vmatpush.msra.mxu0 0.0
    %3438 = vmatpush.msra.mxu0 0.0
    %3439 = vmatpush.msra.mxu0 0.0
    %3440 = vmatpush.msra.mxu0 0.0
    %3441 = vmatpush.msra.mxu0 0.0
    %3442 = vmatpush.msra.mxu0 0.0
    %3443 = vmatpush.msra.mxu0 0.0
    %3444 = vmatpush.msra.mxu0 0.0
    %3445 = vmatpush.msra.mxu0 0.0
    %3446 = vmatpush.msra.mxu0 %v1019
    %3447 = vmatpush.msra.mxu0 %v1018
    %3448 = vmatpush.msra.mxu0 %v1017
    %3449 = vmatpush.msra.mxu0 %v1016
    %3450 = vmatmul.f32.gmra.mxu0 %v3432
    %v3451 = vpop.f32.mrf.mxu0
    %v3452 = vadd.f32 %v1020, %v3451
    %3453 = vdwg.mxu0
    %3454 = vmatpush.msra.mxu0 0.0
    %3455 = vmatpush.msra.mxu0 0.0
    %3456 = vmatpush.msra.mxu0 0.0
    %3457 = vmatpush.msra.mxu0 0.0
    %3458 = vmatpush.msra.mxu0 0.0
    %3459 = vmatpush.msra.mxu0 0.0
    %3460 = vmatpush.msra.mxu0 0.0
    %3461 = vmatpush.msra.mxu0 0.0
    %3462 = vmatpush.msra.mxu0 0.0
    %3463 = vmatpush.msra.mxu0 0.0
    %3464 = vmatpush.msra.mxu0 0.0
    %3465 = vmatpush.msra.mxu0 0.0
    %3466 = vmatpush.msra.mxu0 %v1047
    %3467 = vmatpush.msra.mxu0 %v1046
    %3468 = vmatpush.msra.mxu0 %v1045
    %3469 = vmatpush.msra.mxu0 %v1044
    %3470 = vmatmul.f32.gmra.mxu0 %v3253
    %v3471 = vpop.f32.mrf.mxu0
    %v3472 = vadd.f32 0.0, %v3471
    %3473 = vdwg.mxu0
    %v3474 = vadd.f32 %v3452, %v3472
    %v3475 = vxor.u32 %v3474, 2147483648
    %v3476 = vmul.f32 %v3475, 1.442695
    %v3477 = vpow.pop %v3476
    %v3478 = vadd.f32 %v3477, 1.0
    %v3479 = vrcp.pop %v3478
    %v3480 = vmul.f32 %v3478, %v3479
    %v3481 = vsub.f32 1.0, %v3480
    %v3482 = vmul.f32 %v3479, %v3481
    %v3483 = vadd.f32 %v3479, %v3482
    %vm3484 = vweird.f32 %v3478
    %vm3485 = vweird.f32 %v3479
    %vm3486 = vmor %vm3484, %vm3485
    %v3487 = vsel %vm3486, %v3479, %v3483
    %v3488 = vand.u32 2147483647, %v3478
    %vm3489 = vcmp.eq.f32.partialorder %v3488, 8.507059e+37
    %v3490 = vand.u32 %v3478, 2147483648
    %v3491 = vor.u32 1.1754944e-38, %v3490
    %v3492 = vsel %vm3489, %v3491, %v3487
    %v3493 = vmul.f32 1.0, %v3492
    %v3494 = vadd.f32 %v3472, %v1097
    %3496 = vrot.lane.b32.xlu0 %v3494, 64
    %v3497 = vpop.permute.xlu0 %3496
    %v3499 = vmul.f32 %v3493, %v3497
    %3501 = vrot.lane.b32.xlu0 %v3499, 64
    %v3502 = vpop.permute.xlu0 %3501
    %v3504 = vadd.f32 %v3452, %v3502
    %v3505 = vtanh.pop %v3504
    %v3506 = vsub.f32 1.0, %v3493
    %3508 = vrot.lane.b32.xlu0 %v3505, 96
    %v3509 = vpop.permute.xlu0 %3508
    %v3511 = vmul.f32 %v3506, %v3509
    %v3512 = vmul.f32 %v3493, %v3249
    %v3513 = vadd.f32 %v3511, %v3512
    %3515 = vrot.lane.b32.xlu0 %v3513, 96
    %v3516 = vpop.permute.xlu0 %3515
    %v3517 = vsel %vm77, %v3516, 0
    %3519 = vmatpush.xpose.msra.mxu0 0.0
    %3520 = vmatpush.xpose.msra.mxu0 0.0
    %3521 = vmatpush.xpose.msra.mxu0 0.0
    %3522 = vmatpush.xpose.msra.mxu0 0.0
    %3523 = vmatpush.xpose.msra.mxu0 0.0
    %3524 = vmatpush.xpose.msra.mxu0 0.0
    %3525 = vmatpush.xpose.msra.mxu0 0.0
    %3526 = vmatpush.xpose.msra.mxu0 0.0
    %3527 = vmatpush.xpose.msra.mxu0 0.0
    %3528 = vmatpush.xpose.msra.mxu0 0.0
    %3529 = vmatpush.xpose.msra.mxu0 0.0
    %3530 = vmatpush.xpose.msra.mxu0 0.0
    %3531 = vmatpush.xpose.msra.mxu0 0.0
    %3532 = vmatpush.xpose.msra.mxu0 0.0
    %3533 = vmatpush.xpose.msra.mxu0 0.0
    %3534 = vmatpush.xpose.msra.mxu0 %v1125
    %3535 = vmatmul.f32.gmra.mxu0 %v3517
    %v3536 = vpop.f32.mrf.mxu0
    %v3537 = vadd.f32 0.0, %v3536
    %3538 = vdwg.mxu0
    %v3539 = vsel %vm1147, %v3537, -inf
    %3540 = vmax.xlane.f32.xlu0 %v3539
    %v3541 = vpop.xlane.xlu0 %3540
    %v3542 = vsub.f32 %v3537, %v3541
    %v3543 = vmul.f32 %v3542, 1.442695
    %v3544 = vpow.pop %v3543
    %v3545 = vsel %vm1147, %v3544, 0.0
    %3546 = vadd.xlane.f32.xlu0 %v3545
    %v3547 = vpop.xlane.xlu0 %3546
    %v3548 = vrcp.pop %v3547
    %v3549 = vmul.f32 %v3547, %v3548
    %v3550 = vsub.f32 1.0, %v3549
    %v3551 = vmul.f32 %v3548, %v3550
    %v3552 = vadd.f32 %v3548, %v3551
    %vm3553 = vweird.f32 %v3547
    %vm3554 = vweird.f32 %v3548
    %vm3555 = vmor %vm3553, %vm3554
    %v3556 = vsel %vm3555, %v3548, %v3552
    %v3557 = vand.u32 2147483647, %v3547
    %vm3558 = vcmp.eq.f32.partialorder %v3557, 8.507059e+37
    %v3559 = vand.u32 %v3547, 2147483648
    %v3560 = vor.u32 1.1754944e-38, %v3559
    %v3561 = vsel %vm3558, %v3560, %v3556
    %v3562 = vmul.f32 %v3544, %v3561
    %v3564 = vsel %vm1172, %v3562, 0
    %3566 = vmatpush.msra.mxu0 0.0
    %3567 = vmatpush.msra.mxu0 0.0
    %3568 = vmatpush.msra.mxu0 0.0
    %3569 = vmatpush.msra.mxu0 0.0
    %3570 = vmatpush.msra.mxu0 0.0
    %3571 = vmatpush.msra.mxu0 0.0
    %3572 = vmatpush.msra.mxu0 0.0
    %3573 = vmatpush.msra.mxu0 0.0
    %3574 = vmatpush.msra.mxu0 0.0
    %3575 = vmatpush.msra.mxu0 0.0
    %3576 = vmatpush.msra.mxu0 0.0
    %3577 = vmatpush.msra.mxu0 0.0
    %3578 = vmatpush.msra.mxu0 0.0
    %3579 = vmatpush.msra.mxu0 0.0
    %3580 = vmatpush.msra.mxu0 0.0
    %3581 = vmatpush.msra.mxu0 %v978
    %3582 = vmatmul.f32.gmra.mxu0 %v3564
    %v3583 = vpop.f32.mrf.mxu0
    %v3584 = vadd.f32 0.0, %v3583
    %3585 = vdwg.mxu0
    %3588 = vrot.lane.b32.xlu0 %v3584, 32
    %v3589 = vpop.permute.xlu0 %3588
    %v3591 = vsel %vm77, %v3516, %v3589
    %v3593 = vsel %vm992, %v3591, 0
    %3595 = vmatpush.msra.mxu0 0.0
    %3596 = vmatpush.msra.mxu0 0.0
    %3597 = vmatpush.msra.mxu0 0.0
    %3598 = vmatpush.msra.mxu0 0.0
    %3599 = vmatpush.msra.mxu0 0.0
    %3600 = vmatpush.msra.mxu0 0.0
    %3601 = vmatpush.msra.mxu0 0.0
    %3602 = vmatpush.msra.mxu0 0.0
    %3603 = vmatpush.msra.mxu0 %v1209
    %3604 = vmatpush.msra.mxu0 %v1208
    %3605 = vmatpush.msra.mxu0 %v1207
    %3606 = vmatpush.msra.mxu0 %v1206
    %3607 = vmatpush.msra.mxu0 %v1205
    %3608 = vmatpush.msra.mxu0 %v1204
    %3609 = vmatpush.msra.mxu0 %v1203
    %3610 = vmatpush.msra.mxu0 %v1202
    %3611 = vmatmul.f32.gmra.mxu0 %v3593
    %v3612 = vpop.f32.mrf.mxu0
    %v3613 = vadd.f32 %v1210, %v3612
    %3614 = vdwg.mxu0
    %v3615 = vtanh.pop %v3613
    %v3617 = vsel %vm77, %v3615, 0
    %3619 = vmatpush.msra.mxu0 0.0
    %3620 = vmatpush.msra.mxu0 0.0
    %3621 = vmatpush.msra.mxu0 0.0
    %3622 = vmatpush.msra.mxu0 0.0
    %3623 = vmatpush.msra.mxu0 0.0
    %3624 = vmatpush.msra.mxu0 0.0
    %3625 = vmatpush.msra.mxu0 0.0
    %3626 = vmatpush.msra.mxu0 0.0
    %3627 = vmatpush.msra.mxu0 0.0
    %3628 = vmatpush.msra.mxu0 0.0
    %3629 = vmatpush.msra.mxu0 0.0
    %3630 = vmatpush.msra.mxu0 0.0
    %3631 = vmatpush.msra.mxu0 %v1238
    %3632 = vmatpush.msra.mxu0 %v1237
    %3633 = vmatpush.msra.mxu0 %v1236
    %3634 = vmatpush.msra.mxu0 %v1235
    %3635 = vmatmul.f32.gmra.mxu0 %v3617
    %v3636 = vpop.f32.mrf.mxu0
    %v3637 = vadd.f32 %v1239, %v3636
    %3638 = vdwg.mxu0
    %v3639 = vsel %vm1263, %v3637, -inf
    %3640 = vmax.xlane.f32.xlu0 %v3639
    %v3641 = vpop.xlane.xlu0 %3640
    %v3642 = vsub.f32 %v3637, %v3641
    %v3643 = vmul.f32 %v3642, 1.442695
    %v3644 = vpow.pop %v3643
    %v3645 = vsel %vm1263, %v3644, 0.0
    %3646 = vadd.xlane.f32.xlu0 %v3645
    %v3647 = vpop.xlane.xlu0 %3646
    %v3648 = vrcp.pop %v3647
    %vm3649 = vcmp.ge.f32.partialorder %v3637, %v3641
    %v3650 = vsel %vm3649, %v980, 128
    %v3651 = vsel %vm1263, %v3650, 2147483647
    %v3652 = vand.u32 %v3651, 65535
    %v3653 = vshra.s32 %v3651, 16
    %v3654 = vcvt.s32.f32 %v3652
    %v3655 = vcvt.s32.f32 %v3653
    %3656 = vmin.xlane.f32.xlu0 %v3655
    %v3657 = vpop.xlane.xlu0 %3656
    %vm3658 = vcmp.eq.f32.partialorder %v3655, %v3657
    %v3659 = vsel %vm3658, %v3654, inf
    %3660 = vmin.xlane.f32.xlu0 %v3659
    %v3661 = vpop.xlane.xlu0 %3660
    %v3662 = vcvt.f32.s32 %v3661
    %v3663 = vcvt.f32.s32 %v3657
    %v3664 = vshll.u32 %v3663, 16
    %v3665 = vadd.s32 %v3664, %v3662
    %vm3666 = vcmp.eq.s32.totalorder %v980, 9
    %v3667 = vsel %vm3666, %v3665, %v3403
    %v3668 = vsel %vm3666, %v3648, %v3404
    %vm3669 = vcmask 73728
    %3670 = vst.msk [vmem:[#allocation7] sm:$0x1] %vm3669, %v3667
    %3671 = vst.msk [vmem:[#allocation8] sm:$0x1] %vm3669, %v3668
    // Predicated region
    $region66: #{greedy_search_decode.1} parent=1 // pred_check
      _
    $region67: #{greedy_search_decode.1} parent=1 // pred_check_branch
      %3673 = sbr.rel (0) target = $region69
    $region68: #{greedy_search_decode.1} parent=1 // pred_region
      %3675 = vsyncadd [#allocation5], 0
      %s3677 = sshll.u32 [#allocation7], 4
      %s3678 = int_to_ptr.vmem [resolvable:$true] %s3677
      %s3679 = sshll.u32 %s15, 4
      %s3680 = int_to_ptr.hbm [resolvable:$true] %s3679
      %3682 = dma.vmem_to_hbm [thread:$0]  %s3678, 16, %s3680, [#allocation5]
    $region69: #{greedy_search_decode.1} parent=1 // pred_fallthru
      _
    // Predicated region
    $region70: #{greedy_search_decode.1} parent=1 // pred_check
      _
    $region71: #{greedy_search_decode.1} parent=1 // pred_check_branch
      %3684 = sbr.rel (0) target = $region73
    $region72: #{greedy_search_decode.1} parent=1 // pred_region
      %3686 = vsyncadd [#allocation9], 0
      %s3688 = sshll.u32 [#allocation8], 4
      %s3689 = int_to_ptr.vmem [resolvable:$true] %s3688
      %s3690 = sshll.u32 %s16, 4
      %s3691 = int_to_ptr.hbm [resolvable:$true] %s3690
      %3693 = dma.vmem_to_hbm [thread:$0]  %s3689, 16, %s3691, [#allocation9]
    $region73: #{greedy_search_decode.1} parent=1 // pred_fallthru
      _
    // Predicated region
    $region74: #{greedy_search_decode.1} parent=1 // pred_check
      _
    $region75: #{greedy_search_decode.1} parent=1 // pred_check_branch
      %3695 = sbr.rel (0) target = $region77
    $region76: #{greedy_search_decode.1} parent=1 // pred_region
      %3697 = dma.done [#allocation5], 16
    $region77: #{greedy_search_decode.1} parent=1 // pred_fallthru
      _
    // Predicated region
    $region78: #{greedy_search_decode.1} parent=1 // pred_check
      _
    $region79: #{greedy_search_decode.1} parent=1 // pred_check_branch
      %3699 = sbr.rel (0) target = $region81
    $region80: #{greedy_search_decode.1} parent=1 // pred_region
      %3701 = dma.done [#allocation9], 16
    $region81: #{greedy_search_decode.1} parent=1 // pred_fallthru
      _
    %3702 = vsyncpa [#allocation5], 1
    %3703 = vsyncpa [#allocation9], 1
    %3704 = vsyncpa [#allocation6], 1

</llo_original>
